<compile_context>
chip_gen: v7x
topology: tpu7x:2x2x1
jax: 0.10.0
libtpu: 0.0.40
codegen_flags: <defaults>
</compile_context>

<pallas_src>
import math

import jax
import jax.numpy as jnp
from jax.experimental import pallas as pl
from jax.experimental.pallas import tpu as pltpu

# ---------------- configuration (small, deterministic) ----------------
DS = 2                  # number of dialogues
TS = 3                  # turns per dialogue
MAX_SEQ_LEN = 8         # max_seq_length
D = 128                 # bert_output_dim
H = 128                 # args.hidden_dim (GRU hidden size)
ATTN_HEAD = 4           # args.attn_head
D_K = D // ATTN_HEAD
NUM_LABELS = [5, 7, 4]  # len(slot_values_ids[s]) per slot
NUM_SLOTS = len(NUM_LABELS)
VOCAB = 30
LN_EPS = 1e-5           # torch.nn.LayerNorm default
PD_EPS = 1e-6           # PairwiseDistance eps

BS_UTT = DS * TS                       # utterances per forward              (6)
NTOK = BS_UTT * MAX_SEQ_LEN            # total tokens                        (48)
NSH = NUM_SLOTS * ATTN_HEAD            # (slot, head) score columns          (12)
NSEQ = NUM_SLOTS * DS                  # GRU sequences = (slot, dialogue)    (6)
NROWS = TS * NSEQ                      # real (turn, slot, dialogue) rows    (18)
ROWS_PER_TURN = 8                      # padded rows per GRU time block
NROWS_PAD = TS * ROWS_PER_TURN         # padded row count                    (24)
LPAD = 128                             # value rows padded -> lane-dense output
LAB_OFFSETS = [sum(NUM_LABELS[:s]) for s in range(NUM_SLOTS)]

# aux slab (f32, 128 lanes wide) row offsets
AUX_QEXP = 0
AUX_HM = AUX_QEXP + NSH                # 12
AUX_PERM = AUX_HM + NSH                # 24
AUX_VALT = AUX_PERM + NROWS_PAD        # 48
AUX_ROWS = AUX_VALT + D                # 176

# bf16 weight slab lane offsets (all multiples of 128)
W_ENC = 0
W_KV = 128
W_WO = 384
W_INIT_IH = 512
W_WHH = 1024
W_LIN = 1408
W_END = 1536


# ---------------- the fused Pallas kernel ----------------
def _sumbt_kernel(emb_ref, mask_ref, w_ref, b_ref, aux_ref, o_ref):
    f32 = jnp.float32
    bf16 = jnp.bfloat16

    def dot_w(x, lo, hi):
        # bf16 x bf16 MXU matmul against a lane-slice of the weight slab, f32 acc
        return jnp.dot(x.astype(bf16), w_ref[:, lo:hi], preferred_element_type=f32)

    def layernorm(y, g, b):
        mu = jnp.mean(y, axis=-1, keepdims=True)
        var = jnp.mean((y - mu) * (y - mu), axis=-1, keepdims=True)
        return (y - mu) * jax.lax.rsqrt(var + LN_EPS) * g + b

    # ---- utterance-encoder stand-in: Linear + LayerNorm over all tokens (48, 128)
    h_tok = layernorm(dot_w(emb_ref[...], W_ENC, W_ENC + D) + b_ref[0:1, 0:128],
                      b_ref[0:1, 128:256], b_ref[0:1, 256:384])
    mask = mask_ref[...]                                    # (NTOK, 1)
    kv = h_tok * mask                                       # torch: hidden * attention_mask

    # ---- slot-query multi-head attention
    # K/V computed once per token in a single fused 256-wide matmul
    kvp = dot_w(kv, W_KV, W_WO) + b_ref[1:2, 0:256]         # (NTOK, 2D)
    k = kvp[:, :D]
    v = kvp[:, D:]

    # all (slot, head) scores in one matmul against the precomputed q_exp constant
    q_exp = aux_ref[AUX_QEXP:AUX_QEXP + NSH, :]             # (12, D), scale folded in
    scores = jax.lax.dot_general(k, q_exp, (((1,), (1,)), ((), ())),
                                 preferred_element_type=f32)        # (NTOK, 12)
    scores = jnp.where(mask == 0.0, -1e9, scores)

    sc3 = scores.reshape(BS_UTT, MAX_SEQ_LEN, NSH)
    mmax = jnp.max(sc3, axis=1, keepdims=True)              # softmax over tokens
    e = jnp.exp(sc3 - mmax)
    prob = e * pl.reciprocal(jnp.sum(e, axis=1, keepdims=True), approx=True)

    # batched P^T V on the MXU: (6,8,12) x (6,8,128) -> (6,12,128)
    ctx_full = jnp.einsum("btn,btd->bnd", prob,
                          v.reshape(BS_UTT, MAX_SEQ_LEN, D),
                          preferred_element_type=f32)
    # collapse heads onto their d_k lanes -> (18, 128), row = utt*NUM_SLOTS + slot
    hm_rep = aux_ref[AUX_HM:AUX_HM + NSH, :]                # (12, D) head mask, tiled
    ctx = (ctx_full * hm_rep[None]).reshape(NROWS, ATTN_HEAD, D).sum(axis=1)

    # one constant permutation matmul: reorder rows to (turn, slot, dialogue) and
    # pad each turn block to 8 rows (24 total); then the attention output projection
    perm = aux_ref[AUX_PERM:AUX_PERM + NROWS_PAD, 0:NROWS]  # (24, 18)
    att = jnp.dot(perm, ctx, preferred_element_type=f32)    # (24, D)
    att = dot_w(att, W_WO, W_INIT_IH) + b_ref[0:1, 384:512]

    # ---- fused rnn_init_linear + GRU input projection: one (24,128)@(128,512) matmul
    big = dot_w(att, W_INIT_IH, W_WHH) + b_ref[2:3, :]      # (24, 512) = [init | gx]
    h = jnp.maximum(big[0:ROWS_PER_TURN, 0:H], 0.0)         # rnn_init_linear on turn 0
    gx_all = big[:, H:]                                     # (24, 3H)

    # ---- GRU belief tracker (only h @ Whh on the recurrence)
    whh = w_ref[:, W_WHH:W_LIN]                             # (128, 384) bf16
    bhh = b_ref[3:4, 0:384]
    hs = []
    for t in range(TS):
        gx = gx_all[t * ROWS_PER_TURN:(t + 1) * ROWS_PER_TURN, :]
        gh = jnp.dot(h.astype(bf16), whh, preferred_element_type=f32) + bhh
        r = jax.nn.sigmoid(gx[:, :H] + gh[:, :H])
        z = jax.nn.sigmoid(gx[:, H:2 * H] + gh[:, H:2 * H])
        n = jnp.tanh(gx[:, 2 * H:] + r * gh[:, 2 * H:])
        h = (1.0 - z) * n + z * h
        hs.append(h)
    rnn_out = jnp.concatenate(hs, axis=0)                   # (24, H)

    # ---- Linear + LayerNorm (f32 elementwise)
    proj = layernorm(dot_w(rnn_out, W_LIN, W_END) + b_ref[1:2, 256:384],
                     b_ref[1:2, 384:512], b_ref[3:4, 384:512])

    # ---- pairwise L2 distance vs ALL slots' value embeddings (Gram form, exact eps)
    #   ||v - h + eps||^2 = ||v||^2 + 2*eps*sum(v) + D*eps^2   (precomputed per label)
    #                     + ||h||^2 - 2*eps*sum(h) - 2*h.v
    valt = aux_ref[AUX_VALT:AUX_VALT + D, :]                # (D, LPAD) kept f32
    hv = jnp.dot(proj, valt, preferred_element_type=f32)    # (24, LPAD)
    hh = jnp.sum(proj * proj, axis=-1, keepdims=True)
    sh = jnp.sum(proj, axis=-1, keepdims=True)
    dist_sq = hh - 2.0 * PD_EPS * sh + b_ref[4:5, 0:128] - 2.0 * hv
    o_ref[...] = -jnp.sqrt(jnp.maximum(dist_sq, 0.0))


def sumbt_pallas(emb_tok, mask_tok, consts):
    vmem = pl.BlockSpec(memory_space=pltpu.MemorySpace.VMEM)
    return pl.pallas_call(
        _sumbt_kernel,
        out_shape=jax.ShapeDtypeStruct((NROWS_PAD, LPAD), jnp.float32),
        in_specs=[vmem] * 5,
        out_specs=vmem,
    )(emb_tok, mask_tok, consts["w"], consts["bias"], consts["aux"])


# ---------------- deterministic parameter construction ----------------
def make_params(key):
    ks = iter(jax.random.split(key, 64))
    nrm = lambda shape, s=0.02: (jax.random.normal(next(ks), shape, jnp.float32) * s)
    p = {}
    # stand-in utterance encoder
    p["word_emb"] = nrm((VOCAB, D))
    p["type_emb"] = nrm((2, D))
    p["pos_emb"] = nrm((MAX_SEQ_LEN, D))
    p["enc_w"] = nrm((D, D), 0.05)
    p["enc_b"] = jnp.zeros((1, D), jnp.float32)
    p["enc_g"] = jnp.ones((1, D), jnp.float32)
    p["enc_beta"] = jnp.zeros((1, D), jnp.float32)
    # slot / value lookups
    p["slot_emb"] = nrm((NUM_SLOTS, D), 0.1)
    p["value_emb"] = [nrm((L, D), 0.1) for L in NUM_LABELS]
    # multi-head attention (weights stored transposed: (in, out))
    for name in ("q", "k", "v", "o"):
        p[f"attn_w{name}"] = nrm((D, D), 0.05)
        p[f"attn_b{name}"] = jnp.zeros((1, D), jnp.float32)
    # rnn init linear
    p["init_w"] = nrm((D, H), 0.05)
    p["init_b"] = jnp.zeros((1, H), jnp.float32)
    # GRU (zero biases as in init_parameter), single layer
    p["gru_wih"] = nrm((D, 3 * H), 0.05)
    p["gru_whh"] = nrm((H, 3 * H), 0.05)
    p["gru_bih"] = jnp.zeros((1, 3 * H), jnp.float32)
    p["gru_bhh"] = jnp.zeros((1, 3 * H), jnp.float32)
    # output projection + layer norm
    p["lin_w"] = nrm((H, D), 0.05)
    p["lin_b"] = jnp.zeros((1, D), jnp.float32)
    p["ln_g"] = jnp.ones((1, D), jnp.float32)
    p["ln_b"] = jnp.zeros((1, D), jnp.float32)
    return p


def make_kernel_consts(p):
    f32 = jnp.float32
    scale = 1.0 / math.sqrt(D_K)
    hm = (jnp.arange(D)[None, :] // D_K == jnp.arange(ATTN_HEAD)[:, None]).astype(f32)  # (4, D)

    # slot-query path hoisted out of the kernel (pure function of constants):
    # q_exp[s*HEADS+h, d] = (slot_emb@Wq+bq)[s, d] * 1[d in head h] / sqrt(d_k)
    q = p["slot_emb"] @ p["attn_wq"] + p["attn_bq"]                      # (NUM_SLOTS, D)
    q_exp = (q[:, None, :] * hm[None, :, :] * scale).reshape(NSH, D)
    hm_rep = jnp.tile(hm, (NUM_SLOTS, 1))                                # (12, D)

    # (turn, slot, dialogue) row reorder + pad-to-24 as one constant permutation
    t_idx = jnp.arange(TS)[:, None, None]
    s_idx = jnp.arange(NUM_SLOTS)[None, :, None]
    d_idx = jnp.arange(DS)[None, None, :]
    dest = (t_idx * ROWS_PER_TURN + s_idx * DS + d_idx).reshape(-1)      # (18,)
    src = ((t_idx * DS + d_idx) * NUM_SLOTS + s_idx).reshape(-1)         # (18,)
    perm = jnp.zeros((NROWS_PAD, NROWS), f32).at[dest, src].set(1.0)
    perm_pad = jnp.zeros((NROWS_PAD, D), f32).at[:, :NROWS].set(perm)

    # value table (Gram-form distance terms), kept f32 for numerical safety
    val = jnp.concatenate(p["value_emb"], axis=0)                        # (sum L, D)
    val_pad = jnp.zeros((LPAD, D), f32).at[:val.shape[0]].set(val)
    valt = val_pad.T                                                     # (D, LPAD)
    val_term = (jnp.sum(val_pad * val_pad, axis=1)
                + 2.0 * PD_EPS * jnp.sum(val_pad, axis=1)
                + D * PD_EPS * PD_EPS)[None, :]                          # (1, LPAD)

    # ---- packed slabs ----
    # bf16 weight slab (D, 1536); every lane offset is a multiple of 128
    w_slab = jnp.concatenate(
        [p["enc_w"],                                  # 0    : 128
         p["attn_wk"], p["attn_wv"],                  # 128  : 384  (fused K|V)
         p["attn_wo"],                                # 384  : 512
         p["init_w"], p["gru_wih"],                   # 512  : 1024 (fused init|ih)
         p["gru_whh"],                                # 1024 : 1408
         p["lin_w"]], axis=1).astype(jnp.bfloat16)    # 1408 : 1536

    # f32 bias / LayerNorm / distance-term slab (8, 512)
    z384 = jnp.zeros((1, 384), f32)
    bias_slab = jnp.concatenate([
        jnp.concatenate([p["enc_b"], p["enc_g"], p["enc_beta"], p["attn_bo"]], axis=1),
        jnp.concatenate([p["attn_bk"], p["attn_bv"], p["lin_b"], p["ln_g"]], axis=1),
        jnp.concatenate([p["init_b"], p["gru_bih"]], axis=1),
        jnp.concatenate([p["gru_bhh"], p["ln_b"]], axis=1),
        jnp.concatenate([val_term, z384], axis=1),
        jnp.zeros((3, 512), f32),
    ], axis=0)                                                           # (8, 512)

    # f32 aux slab (176, 128): q_exp | head mask (tiled) | permutation | value table
    aux_slab = jnp.concatenate([q_exp, hm_rep, perm_pad, valt], axis=0)
    assert aux_slab.shape == (AUX_ROWS, D)

    return {"w": w_slab, "bias": bias_slab, "aux": aux_slab}


# ---------------- SUMBT forward (labels=None path) ----------------
def sumbt_forward(params, consts, input_ids, token_type_ids, attention_mask):
    ds, ts, S = input_ids.shape
    # turn-major utterance ordering (row = turn*DS + dialogue); the in-kernel
    # permutation maps to (turn, slot, dialogue) GRU blocks of 8 rows each.
    ids = jnp.transpose(input_ids, (1, 0, 2)).reshape(ts * ds, S)
    tids = jnp.transpose(token_type_ids, (1, 0, 2)).reshape(ts * ds, S)
    mask = jnp.transpose(attention_mask, (1, 0, 2)).reshape(ts * ds, S).astype(jnp.float32)

    # TODO(synk): pretrained BertModel utterance encoder has no clean Pallas
    # equivalent; stand-in = embedding lookup (XLA gather) + in-kernel Linear+LayerNorm.
    emb = params["word_emb"][ids] + params["type_emb"][tids] + params["pos_emb"][None, :S, :]
    emb_tok = emb.reshape(ts * ds * S, D)
    mask_tok = mask.reshape(ts * ds * S, 1)

    dist = sumbt_pallas(emb_tok, mask_tok, consts)           # (24, LPAD)
    d3 = dist.reshape(TS, ROWS_PER_TURN, LPAD)               # (turn, slot*DS+dlg(+pad), labels)

    outputs, preds = [], []
    for s, L in enumerate(NUM_LABELS):
        o = jnp.transpose(
            d3[:, s * DS:(s + 1) * DS, LAB_OFFSETS[s]:LAB_OFFSETS[s] + L], (1, 0, 2))
        outputs.append(o)                                    # (DS, TS, L)
        preds.append(jnp.argmax(o, axis=-1)[..., None])
    pred_slot = jnp.concatenate(preds, axis=2)               # (DS, TS, NUM_SLOTS)
    return outputs, pred_slot


# ---------------- main ----------------
if __name__ == "__main__":
    key = jax.random.PRNGKey(0)
    kp, ki, kl = jax.random.split(key, 3)

    params = make_params(kp)
    consts = make_kernel_consts(params)

    input_ids = jax.random.randint(ki, (DS, TS, MAX_SEQ_LEN), 1, VOCAB, dtype=jnp.int32)
    token_type_ids = jnp.zeros((DS, TS, MAX_SEQ_LEN), jnp.int32)
    lengths = jax.random.randint(kl, (DS, TS), 3, MAX_SEQ_LEN + 1)
    attention_mask = (jnp.arange(MAX_SEQ_LEN)[None, None, :] < lengths[:, :, None]).astype(jnp.int32)
    input_ids = input_ids * attention_mask  # pad positions -> 0

    outputs, pred_slot = sumbt_forward(params, consts, input_ids, token_type_ids, attention_mask)
    jax.block_until_ready(pred_slot)
    for o in outputs:
        jax.block_until_ready(o)

    assert pred_slot.shape == (DS, TS, NUM_SLOTS)
    assert [o.shape for o in outputs] == [(DS, TS, L) for L in NUM_LABELS]
    assert all(bool(jnp.all(jnp.isfinite(o))) for o in outputs)
    print("KERNEL_OK")
</pallas_src>

<mosaic_0001>
module attributes {stable_mosaic.version = 11 : i64} {
  func.func @_sumbt_kernel(%arg0: memref<48x128xf32, #tpu.memory_space<vmem>>, %arg1: memref<48x1xf32, #tpu.memory_space<vmem>>, %arg2: memref<128x1536xbf16, #tpu.memory_space<vmem>>, %arg3: memref<8x512xf32, #tpu.memory_space<vmem>>, %arg4: memref<176x128xf32, #tpu.memory_space<vmem>>, %arg5: memref<24x128xf32, #tpu.memory_space<vmem>>) attributes {dimension_semantics = [], scalar_prefetch = 0 : i64, scratch_operands = 0 : i64, tpu.core_type = #tpu.core_type<tc>} {
    %c0 = arith.constant 0 : index
    %c0_0 = arith.constant 0 : index
    %0 = vector.load %arg0[%c0, %c0_0] : memref<48x128xf32, #tpu.memory_space<vmem>>, vector<48x128xf32>
    %1 = arith.truncf %0 : vector<48x128xf32> to vector<48x128xbf16>
    %c0_1 = arith.constant 0 : index
    %c0_2 = arith.constant 0 : index
    %2 = vector.load %arg2[%c0_1, %c0_2] : memref<128x1536xbf16, #tpu.memory_space<vmem>>, vector<128x128xbf16>
    %cst = arith.constant dense<0.000000e+00> : vector<48x128xf32>
    %3 = tpu.matmul %1, %2, %cst {dimension_numbers = #tpu.dot_dimension_numbers<[1], [0], [0], [1], [0, 0, 1, 1], [], []>} : vector<48x128xbf16>, vector<128x128xbf16>, vector<48x128xf32> -> vector<48x128xf32>
    %c0_3 = arith.constant 0 : index
    %c0_4 = arith.constant 0 : index
    %4 = vector.load %arg3[%c0_3, %c0_4] : memref<8x512xf32, #tpu.memory_space<vmem>>, vector<1x128xf32>
    %5 = vector.broadcast %4 : vector<1x128xf32> to vector<48x128xf32>
    %6 = arith.addf %3, %5 : vector<48x128xf32>
    %c0_5 = arith.constant 0 : index
    %c128 = arith.constant 128 : index
    %7 = vector.load %arg3[%c0_5, %c128] : memref<8x512xf32, #tpu.memory_space<vmem>>, vector<1x128xf32>
    %c0_6 = arith.constant 0 : index
    %c256 = arith.constant 256 : index
    %8 = vector.load %arg3[%c0_6, %c256] : memref<8x512xf32, #tpu.memory_space<vmem>>, vector<1x128xf32>
    %cst_7 = arith.constant dense<0.000000e+00> : vector<48xf32>
    %9 = vector.multi_reduction <add>, %6, %cst_7 [1] : vector<48x128xf32> to vector<48xf32>
    %10 = vector.shape_cast %9 : vector<48xf32> to vector<48x1xf32>
    %cst_8 = arith.constant 1.280000e+02 : f32
    %11 = vector.broadcast %cst_8 : f32 to vector<48x1xf32>
    %12 = arith.divf %10, %11 : vector<48x1xf32>
    %13 = vector.broadcast %12 : vector<48x1xf32> to vector<48x128xf32>
    %14 = arith.subf %6, %13 : vector<48x128xf32>
    %15 = vector.broadcast %12 : vector<48x1xf32> to vector<48x128xf32>
    %16 = arith.subf %6, %15 : vector<48x128xf32>
    %17 = arith.mulf %14, %16 : vector<48x128xf32>
    %cst_9 = arith.constant dense<0.000000e+00> : vector<48xf32>
    %18 = vector.multi_reduction <add>, %17, %cst_9 [1] : vector<48x128xf32> to vector<48xf32>
    %19 = vector.shape_cast %18 : vector<48xf32> to vector<48x1xf32>
    %cst_10 = arith.constant 1.280000e+02 : f32
    %20 = vector.broadcast %cst_10 : f32 to vector<48x1xf32>
    %21 = arith.divf %19, %20 : vector<48x1xf32>
    %22 = vector.broadcast %12 : vector<48x1xf32> to vector<48x128xf32>
    %23 = arith.subf %6, %22 : vector<48x128xf32>
    %cst_11 = arith.constant 9.99999974E-6 : f32
    %24 = vector.broadcast %cst_11 : f32 to vector<48x1xf32>
    %25 = arith.addf %21, %24 : vector<48x1xf32>
    %26 = math.rsqrt %25 : vector<48x1xf32>
    %27 = vector.broadcast %26 : vector<48x1xf32> to vector<48x128xf32>
    %28 = arith.mulf %23, %27 : vector<48x128xf32>
    %29 = vector.broadcast %7 : vector<1x128xf32> to vector<48x128xf32>
    %30 = arith.mulf %28, %29 : vector<48x128xf32>
    %31 = vector.broadcast %8 : vector<1x128xf32> to vector<48x128xf32>
    %32 = arith.addf %30, %31 : vector<48x128xf32>
    %c0_12 = arith.constant 0 : index
    %c0_13 = arith.constant 0 : index
    %33 = vector.load %arg1[%c0_12, %c0_13] : memref<48x1xf32, #tpu.memory_space<vmem>>, vector<48x1xf32>
    %34 = vector.broadcast %33 : vector<48x1xf32> to vector<48x128xf32>
    %35 = arith.mulf %32, %34 : vector<48x128xf32>
    %36 = arith.truncf %35 : vector<48x128xf32> to vector<48x128xbf16>
    %c0_14 = arith.constant 0 : index
    %c128_15 = arith.constant 128 : index
    %37 = vector.load %arg2[%c0_14, %c128_15] : memref<128x1536xbf16, #tpu.memory_space<vmem>>, vector<128x256xbf16>
    %cst_16 = arith.constant dense<0.000000e+00> : vector<48x256xf32>
    %38 = tpu.matmul %36, %37, %cst_16 {dimension_numbers = #tpu.dot_dimension_numbers<[1], [0], [0], [1], [0, 0, 1, 1], [], []>} : vector<48x128xbf16>, vector<128x256xbf16>, vector<48x256xf32> -> vector<48x256xf32>
    %c1 = arith.constant 1 : index
    %c0_17 = arith.constant 0 : index
    %39 = vector.load %arg3[%c1, %c0_17] : memref<8x512xf32, #tpu.memory_space<vmem>>, vector<1x256xf32>
    %40 = vector.broadcast %39 : vector<1x256xf32> to vector<48x256xf32>
    %41 = arith.addf %38, %40 : vector<48x256xf32>
    %42 = vector.extract_strided_slice %41 {offsets = [0, 0], sizes = [48, 128], strides = [1, 1]} : vector<48x256xf32> to vector<48x128xf32>
    %43 = vector.extract_strided_slice %41 {offsets = [0, 128], sizes = [48, 128], strides = [1, 1]} : vector<48x256xf32> to vector<48x128xf32>
    %c0_18 = arith.constant 0 : index
    %c0_19 = arith.constant 0 : index
    %44 = vector.load %arg4[%c0_18, %c0_19] : memref<176x128xf32, #tpu.memory_space<vmem>>, vector<12x128xf32>
    %cst_20 = arith.constant dense<0.000000e+00> : vector<48x12xf32>
    %45 = tpu.matmul %42, %44, %cst_20 {dimension_numbers = #tpu.dot_dimension_numbers<[1], [1], [0], [0], [0, 0, 1, 0], [], []>} : vector<48x128xf32>, vector<12x128xf32>, vector<48x12xf32> -> vector<48x12xf32>
    %cst_21 = arith.constant 0.000000e+00 : f32
    %46 = vector.broadcast %cst_21 : f32 to vector<48x1xf32>
    %47 = arith.cmpf oeq, %33, %46 : vector<48x1xf32>
    %cst_22 = arith.constant -1.000000e+09 : f32
    %48 = vector.shape_cast %47 : vector<48x1xi1> to vector<48x1xi1>
    %49 = vector.broadcast %48 : vector<48x1xi1> to vector<48x12xi1>
    %50 = vector.broadcast %cst_22 : f32 to vector<48x12xf32>
    %51 = arith.select %49, %50, %45 : vector<48x12xi1>, vector<48x12xf32>
    %52 = vector.shape_cast %51 : vector<48x12xf32> to vector<6x8x12xf32>
    %cst_23 = arith.constant dense<0xFF800000> : vector<6x12xf32>
    %53 = vector.multi_reduction <maximumf>, %52, %cst_23 [1] : vector<6x8x12xf32> to vector<6x12xf32>
    %54 = vector.shape_cast %53 : vector<6x12xf32> to vector<6x1x12xf32>
    %55 = vector.broadcast %54 : vector<6x1x12xf32> to vector<6x8x12xf32>
    %56 = arith.subf %52, %55 : vector<6x8x12xf32>
    %57 = math.exp %56 : vector<6x8x12xf32>
    %cst_24 = arith.constant dense<0.000000e+00> : vector<6x12xf32>
    %58 = vector.multi_reduction <add>, %57, %cst_24 [1] : vector<6x8x12xf32> to vector<6x12xf32>
    %59 = vector.shape_cast %58 : vector<6x12xf32> to vector<6x1x12xf32>
    %60 = tpu.reciprocal %59 {approx = true} : vector<6x1x12xf32> -> vector<6x1x12xf32>
    %61 = vector.broadcast %60 : vector<6x1x12xf32> to vector<6x8x12xf32>
    %62 = arith.mulf %57, %61 : vector<6x8x12xf32>
    %63 = vector.shape_cast %43 : vector<48x128xf32> to vector<6x8x128xf32>
    "tpu.trace_start"() <{level = 10 : i32, message = "btn,btd->bnd"}> : () -> ()
    %cst_25 = arith.constant dense<0.000000e+00> : vector<6x12x128xf32>
    %64 = tpu.matmul %62, %63, %cst_25 {dimension_numbers = #tpu.dot_dimension_numbers<[1], [1], [2], [2], [0, 0, 0, 2, 1, 2], [0], [0]>} : vector<6x8x12xf32>, vector<6x8x128xf32>, vector<6x12x128xf32> -> vector<6x12x128xf32>
    "tpu.trace_stop"() : () -> ()
    %c12 = arith.constant 12 : index
    %c0_26 = arith.constant 0 : index
    %65 = vector.load %arg4[%c12, %c0_26] : memref<176x128xf32, #tpu.memory_space<vmem>>, vector<12x128xf32>
    %66 = vector.shape_cast %65 : vector<12x128xf32> to vector<1x12x128xf32>
    %67 = vector.broadcast %66 : vector<1x12x128xf32> to vector<6x12x128xf32>
    %68 = arith.mulf %64, %67 : vector<6x12x128xf32>
    %69 = vector.shape_cast %68 : vector<6x12x128xf32> to vector<18x4x128xf32>
    %cst_27 = arith.constant dense<0.000000e+00> : vector<18x128xf32>
    %70 = vector.multi_reduction <add>, %69, %cst_27 [1] : vector<18x4x128xf32> to vector<18x128xf32>
    %c24 = arith.constant 24 : index
    %c0_28 = arith.constant 0 : index
    %71 = vector.load %arg4[%c24, %c0_28] : memref<176x128xf32, #tpu.memory_space<vmem>>, vector<24x18xf32>
    %cst_29 = arith.constant dense<0.000000e+00> : vector<24x128xf32>
    %72 = tpu.matmul %71, %70, %cst_29 {dimension_numbers = #tpu.dot_dimension_numbers<[1], [0], [0], [1], [0, 0, 1, 1], [], []>} : vector<24x18xf32>, vector<18x128xf32>, vector<24x128xf32> -> vector<24x128xf32>
    %73 = arith.truncf %72 : vector<24x128xf32> to vector<24x128xbf16>
    %c0_30 = arith.constant 0 : index
    %c384 = arith.constant 384 : index
    %74 = vector.load %arg2[%c0_30, %c384] : memref<128x1536xbf16, #tpu.memory_space<vmem>>, vector<128x128xbf16>
    %cst_31 = arith.constant dense<0.000000e+00> : vector<24x128xf32>
    %75 = tpu.matmul %73, %74, %cst_31 {dimension_numbers = #tpu.dot_dimension_numbers<[1], [0], [0], [1], [0, 0, 1, 1], [], []>} : vector<24x128xbf16>, vector<128x128xbf16>, vector<24x128xf32> -> vector<24x128xf32>
    %c0_32 = arith.constant 0 : index
    %c384_33 = arith.constant 384 : index
    %76 = vector.load %arg3[%c0_32, %c384_33] : memref<8x512xf32, #tpu.memory_space<vmem>>, vector<1x128xf32>
    %77 = vector.broadcast %76 : vector<1x128xf32> to vector<24x128xf32>
    %78 = arith.addf %75, %77 : vector<24x128xf32>
    %79 = arith.truncf %78 : vector<24x128xf32> to vector<24x128xbf16>
    %c0_34 = arith.constant 0 : index
    %c512 = arith.constant 512 : index
    %80 = vector.load %arg2[%c0_34, %c512] : memref<128x1536xbf16, #tpu.memory_space<vmem>>, vector<128x512xbf16>
    %cst_35 = arith.constant dense<0.000000e+00> : vector<24x512xf32>
    %81 = tpu.matmul %79, %80, %cst_35 {dimension_numbers = #tpu.dot_dimension_numbers<[1], [0], [0], [1], [0, 0, 1, 1], [], []>} : vector<24x128xbf16>, vector<128x512xbf16>, vector<24x512xf32> -> vector<24x512xf32>
    %c2 = arith.constant 2 : index
    %c0_36 = arith.constant 0 : index
    %82 = vector.load %arg3[%c2, %c0_36] : memref<8x512xf32, #tpu.memory_space<vmem>>, vector<1x512xf32>
    %83 = vector.broadcast %82 : vector<1x512xf32> to vector<24x512xf32>
    %84 = arith.addf %81, %83 : vector<24x512xf32>
    %85 = vector.extract_strided_slice %84 {offsets = [0, 0], sizes = [8, 128], strides = [1, 1]} : vector<24x512xf32> to vector<8x128xf32>
    %cst_37 = arith.constant 0.000000e+00 : f32
    %86 = vector.broadcast %cst_37 : f32 to vector<8x128xf32>
    %87 = arith.maximumf %85, %86 : vector<8x128xf32>
    %88 = vector.extract_strided_slice %84 {offsets = [0, 128], sizes = [24, 384], strides = [1, 1]} : vector<24x512xf32> to vector<24x384xf32>
    %c0_38 = arith.constant 0 : index
    %c1024 = arith.constant 1024 : index
    %89 = vector.load %arg2[%c0_38, %c1024] : memref<128x1536xbf16, #tpu.memory_space<vmem>>, vector<128x384xbf16>
    %c3 = arith.constant 3 : index
    %c0_39 = arith.constant 0 : index
    %90 = vector.load %arg3[%c3, %c0_39] : memref<8x512xf32, #tpu.memory_space<vmem>>, vector<1x384xf32>
    %91 = vector.extract_strided_slice %88 {offsets = [0, 0], sizes = [8, 384], strides = [1, 1]} : vector<24x384xf32> to vector<8x384xf32>
    %92 = arith.truncf %87 : vector<8x128xf32> to vector<8x128xbf16>
    %cst_40 = arith.constant dense<0.000000e+00> : vector<8x384xf32>
    %93 = tpu.matmul %92, %89, %cst_40 {dimension_numbers = #tpu.dot_dimension_numbers<[1], [0], [0], [1], [0, 0, 1, 1], [], []>} : vector<8x128xbf16>, vector<128x384xbf16>, vector<8x384xf32> -> vector<8x384xf32>
    %94 = vector.broadcast %90 : vector<1x384xf32> to vector<8x384xf32>
    %95 = arith.addf %93, %94 : vector<8x384xf32>
    %96 = vector.extract_strided_slice %91 {offsets = [0, 0], sizes = [8, 128], strides = [1, 1]} : vector<8x384xf32> to vector<8x128xf32>
    %97 = vector.extract_strided_slice %95 {offsets = [0, 0], sizes = [8, 128], strides = [1, 1]} : vector<8x384xf32> to vector<8x128xf32>
    %98 = arith.addf %96, %97 : vector<8x128xf32>
    %99 = arith.negf %98 : vector<8x128xf32>
    %100 = math.exp %99 : vector<8x128xf32>
    %cst_41 = arith.constant 1.000000e+00 : f32
    %101 = vector.broadcast %cst_41 : f32 to vector<8x128xf32>
    %102 = arith.addf %101, %100 : vector<8x128xf32>
    %103 = arith.divf %101, %102 : vector<8x128xf32>
    %104 = vector.extract_strided_slice %91 {offsets = [0, 128], sizes = [8, 128], strides = [1, 1]} : vector<8x384xf32> to vector<8x128xf32>
    %105 = vector.extract_strided_slice %95 {offsets = [0, 128], sizes = [8, 128], strides = [1, 1]} : vector<8x384xf32> to vector<8x128xf32>
    %106 = arith.addf %104, %105 : vector<8x128xf32>
    %107 = arith.negf %106 : vector<8x128xf32>
    %108 = math.exp %107 : vector<8x128xf32>
    %cst_42 = arith.constant 1.000000e+00 : f32
    %109 = vector.broadcast %cst_42 : f32 to vector<8x128xf32>
    %110 = arith.addf %109, %108 : vector<8x128xf32>
    %111 = arith.divf %109, %110 : vector<8x128xf32>
    %112 = vector.extract_strided_slice %91 {offsets = [0, 256], sizes = [8, 128], strides = [1, 1]} : vector<8x384xf32> to vector<8x128xf32>
    %113 = vector.extract_strided_slice %95 {offsets = [0, 256], sizes = [8, 128], strides = [1, 1]} : vector<8x384xf32> to vector<8x128xf32>
    %114 = arith.mulf %103, %113 : vector<8x128xf32>
    %115 = arith.addf %112, %114 : vector<8x128xf32>
    %116 = math.tanh %115 : vector<8x128xf32>
    %cst_43 = arith.constant 1.000000e+00 : f32
    %117 = vector.broadcast %cst_43 : f32 to vector<8x128xf32>
    %118 = arith.subf %117, %111 : vector<8x128xf32>
    %119 = arith.mulf %118, %116 : vector<8x128xf32>
    %120 = arith.mulf %111, %87 : vector<8x128xf32>
    %121 = arith.addf %119, %120 : vector<8x128xf32>
    %122 = vector.extract_strided_slice %88 {offsets = [8, 0], sizes = [8, 384], strides = [1, 1]} : vector<24x384xf32> to vector<8x384xf32>
    %123 = arith.truncf %121 : vector<8x128xf32> to vector<8x128xbf16>
    %cst_44 = arith.constant dense<0.000000e+00> : vector<8x384xf32>
    %124 = tpu.matmul %123, %89, %cst_44 {dimension_numbers = #tpu.dot_dimension_numbers<[1], [0], [0], [1], [0, 0, 1, 1], [], []>} : vector<8x128xbf16>, vector<128x384xbf16>, vector<8x384xf32> -> vector<8x384xf32>
    %125 = vector.broadcast %90 : vector<1x384xf32> to vector<8x384xf32>
    %126 = arith.addf %124, %125 : vector<8x384xf32>
    %127 = vector.extract_strided_slice %122 {offsets = [0, 0], sizes = [8, 128], strides = [1, 1]} : vector<8x384xf32> to vector<8x128xf32>
    %128 = vector.extract_strided_slice %126 {offsets = [0, 0], sizes = [8, 128], strides = [1, 1]} : vector<8x384xf32> to vector<8x128xf32>
    %129 = arith.addf %127, %128 : vector<8x128xf32>
    %130 = arith.negf %129 : vector<8x128xf32>
    %131 = math.exp %130 : vector<8x128xf32>
    %cst_45 = arith.constant 1.000000e+00 : f32
    %132 = vector.broadcast %cst_45 : f32 to vector<8x128xf32>
    %133 = arith.addf %132, %131 : vector<8x128xf32>
    %134 = arith.divf %132, %133 : vector<8x128xf32>
    %135 = vector.extract_strided_slice %122 {offsets = [0, 128], sizes = [8, 128], strides = [1, 1]} : vector<8x384xf32> to vector<8x128xf32>
    %136 = vector.extract_strided_slice %126 {offsets = [0, 128], sizes = [8, 128], strides = [1, 1]} : vector<8x384xf32> to vector<8x128xf32>
    %137 = arith.addf %135, %136 : vector<8x128xf32>
    %138 = arith.negf %137 : vector<8x128xf32>
    %139 = math.exp %138 : vector<8x128xf32>
    %cst_46 = arith.constant 1.000000e+00 : f32
    %140 = vector.broadcast %cst_46 : f32 to vector<8x128xf32>
    %141 = arith.addf %140, %139 : vector<8x128xf32>
    %142 = arith.divf %140, %141 : vector<8x128xf32>
    %143 = vector.extract_strided_slice %122 {offsets = [0, 256], sizes = [8, 128], strides = [1, 1]} : vector<8x384xf32> to vector<8x128xf32>
    %144 = vector.extract_strided_slice %126 {offsets = [0, 256], sizes = [8, 128], strides = [1, 1]} : vector<8x384xf32> to vector<8x128xf32>
    %145 = arith.mulf %134, %144 : vector<8x128xf32>
    %146 = arith.addf %143, %145 : vector<8x128xf32>
    %147 = math.tanh %146 : vector<8x128xf32>
    %cst_47 = arith.constant 1.000000e+00 : f32
    %148 = vector.broadcast %cst_47 : f32 to vector<8x128xf32>
    %149 = arith.subf %148, %142 : vector<8x128xf32>
    %150 = arith.mulf %149, %147 : vector<8x128xf32>
    %151 = arith.mulf %142, %121 : vector<8x128xf32>
    %152 = arith.addf %150, %151 : vector<8x128xf32>
    %153 = vector.extract_strided_slice %88 {offsets = [16, 0], sizes = [8, 384], strides = [1, 1]} : vector<24x384xf32> to vector<8x384xf32>
    %154 = arith.truncf %152 : vector<8x128xf32> to vector<8x128xbf16>
    %cst_48 = arith.constant dense<0.000000e+00> : vector<8x384xf32>
    %155 = tpu.matmul %154, %89, %cst_48 {dimension_numbers = #tpu.dot_dimension_numbers<[1], [0], [0], [1], [0, 0, 1, 1], [], []>} : vector<8x128xbf16>, vector<128x384xbf16>, vector<8x384xf32> -> vector<8x384xf32>
    %156 = vector.broadcast %90 : vector<1x384xf32> to vector<8x384xf32>
    %157 = arith.addf %155, %156 : vector<8x384xf32>
    %158 = vector.extract_strided_slice %153 {offsets = [0, 0], sizes = [8, 128], strides = [1, 1]} : vector<8x384xf32> to vector<8x128xf32>
    %159 = vector.extract_strided_slice %157 {offsets = [0, 0], sizes = [8, 128], strides = [1, 1]} : vector<8x384xf32> to vector<8x128xf32>
    %160 = arith.addf %158, %159 : vector<8x128xf32>
    %161 = arith.negf %160 : vector<8x128xf32>
    %162 = math.exp %161 : vector<8x128xf32>
    %cst_49 = arith.constant 1.000000e+00 : f32
    %163 = vector.broadcast %cst_49 : f32 to vector<8x128xf32>
    %164 = arith.addf %163, %162 : vector<8x128xf32>
    %165 = arith.divf %163, %164 : vector<8x128xf32>
    %166 = vector.extract_strided_slice %153 {offsets = [0, 128], sizes = [8, 128], strides = [1, 1]} : vector<8x384xf32> to vector<8x128xf32>
    %167 = vector.extract_strided_slice %157 {offsets = [0, 128], sizes = [8, 128], strides = [1, 1]} : vector<8x384xf32> to vector<8x128xf32>
    %168 = arith.addf %166, %167 : vector<8x128xf32>
    %169 = arith.negf %168 : vector<8x128xf32>
    %170 = math.exp %169 : vector<8x128xf32>
    %cst_50 = arith.constant 1.000000e+00 : f32
    %171 = vector.broadcast %cst_50 : f32 to vector<8x128xf32>
    %172 = arith.addf %171, %170 : vector<8x128xf32>
    %173 = arith.divf %171, %172 : vector<8x128xf32>
    %174 = vector.extract_strided_slice %153 {offsets = [0, 256], sizes = [8, 128], strides = [1, 1]} : vector<8x384xf32> to vector<8x128xf32>
    %175 = vector.extract_strided_slice %157 {offsets = [0, 256], sizes = [8, 128], strides = [1, 1]} : vector<8x384xf32> to vector<8x128xf32>
    %176 = arith.mulf %165, %175 : vector<8x128xf32>
    %177 = arith.addf %174, %176 : vector<8x128xf32>
    %178 = math.tanh %177 : vector<8x128xf32>
    %cst_51 = arith.constant 1.000000e+00 : f32
    %179 = vector.broadcast %cst_51 : f32 to vector<8x128xf32>
    %180 = arith.subf %179, %173 : vector<8x128xf32>
    %181 = arith.mulf %180, %178 : vector<8x128xf32>
    %182 = arith.mulf %173, %152 : vector<8x128xf32>
    %183 = arith.addf %181, %182 : vector<8x128xf32>
    %184 = tpu.concatenate %121, %152, %183 in 0 : vector<8x128xf32>, vector<8x128xf32>, vector<8x128xf32> -> vector<24x128xf32>
    %185 = arith.truncf %184 : vector<24x128xf32> to vector<24x128xbf16>
    %c0_52 = arith.constant 0 : index
    %c1408 = arith.constant 1408 : index
    %186 = vector.load %arg2[%c0_52, %c1408] : memref<128x1536xbf16, #tpu.memory_space<vmem>>, vector<128x128xbf16>
    %cst_53 = arith.constant dense<0.000000e+00> : vector<24x128xf32>
    %187 = tpu.matmul %185, %186, %cst_53 {dimension_numbers = #tpu.dot_dimension_numbers<[1], [0], [0], [1], [0, 0, 1, 1], [], []>} : vector<24x128xbf16>, vector<128x128xbf16>, vector<24x128xf32> -> vector<24x128xf32>
    %c1_54 = arith.constant 1 : index
    %c256_55 = arith.constant 256 : index
    %188 = vector.load %arg3[%c1_54, %c256_55] : memref<8x512xf32, #tpu.memory_space<vmem>>, vector<1x128xf32>
    %189 = vector.broadcast %188 : vector<1x128xf32> to vector<24x128xf32>
    %190 = arith.addf %187, %189 : vector<24x128xf32>
    %c1_56 = arith.constant 1 : index
    %c384_57 = arith.constant 384 : index
    %191 = vector.load %arg3[%c1_56, %c384_57] : memref<8x512xf32, #tpu.memory_space<vmem>>, vector<1x128xf32>
    %c3_58 = arith.constant 3 : index
    %c384_59 = arith.constant 384 : index
    %192 = vector.load %arg3[%c3_58, %c384_59] : memref<8x512xf32, #tpu.memory_space<vmem>>, vector<1x128xf32>
    %cst_60 = arith.constant dense<0.000000e+00> : vector<24xf32>
    %193 = vector.multi_reduction <add>, %190, %cst_60 [1] : vector<24x128xf32> to vector<24xf32>
    %194 = vector.shape_cast %193 : vector<24xf32> to vector<24x1xf32>
    %cst_61 = arith.constant 1.280000e+02 : f32
    %195 = vector.broadcast %cst_61 : f32 to vector<24x1xf32>
    %196 = arith.divf %194, %195 : vector<24x1xf32>
    %197 = vector.broadcast %196 : vector<24x1xf32> to vector<24x128xf32>
    %198 = arith.subf %190, %197 : vector<24x128xf32>
    %199 = vector.broadcast %196 : vector<24x1xf32> to vector<24x128xf32>
    %200 = arith.subf %190, %199 : vector<24x128xf32>
    %201 = arith.mulf %198, %200 : vector<24x128xf32>
    %cst_62 = arith.constant dense<0.000000e+00> : vector<24xf32>
    %202 = vector.multi_reduction <add>, %201, %cst_62 [1] : vector<24x128xf32> to vector<24xf32>
    %203 = vector.shape_cast %202 : vector<24xf32> to vector<24x1xf32>
    %cst_63 = arith.constant 1.280000e+02 : f32
    %204 = vector.broadcast %cst_63 : f32 to vector<24x1xf32>
    %205 = arith.divf %203, %204 : vector<24x1xf32>
    %206 = vector.broadcast %196 : vector<24x1xf32> to vector<24x128xf32>
    %207 = arith.subf %190, %206 : vector<24x128xf32>
    %cst_64 = arith.constant 9.99999974E-6 : f32
    %208 = vector.broadcast %cst_64 : f32 to vector<24x1xf32>
    %209 = arith.addf %205, %208 : vector<24x1xf32>
    %210 = math.rsqrt %209 : vector<24x1xf32>
    %211 = vector.broadcast %210 : vector<24x1xf32> to vector<24x128xf32>
    %212 = arith.mulf %207, %211 : vector<24x128xf32>
    %213 = vector.broadcast %191 : vector<1x128xf32> to vector<24x128xf32>
    %214 = arith.mulf %212, %213 : vector<24x128xf32>
    %215 = vector.broadcast %192 : vector<1x128xf32> to vector<24x128xf32>
    %216 = arith.addf %214, %215 : vector<24x128xf32>
    %c48 = arith.constant 48 : index
    %c0_65 = arith.constant 0 : index
    %217 = vector.load %arg4[%c48, %c0_65] : memref<176x128xf32, #tpu.memory_space<vmem>>, vector<128x128xf32>
    %cst_66 = arith.constant dense<0.000000e+00> : vector<24x128xf32>
    %218 = tpu.matmul %216, %217, %cst_66 {dimension_numbers = #tpu.dot_dimension_numbers<[1], [0], [0], [1], [0, 0, 1, 1], [], []>} : vector<24x128xf32>, vector<128x128xf32>, vector<24x128xf32> -> vector<24x128xf32>
    %219 = arith.mulf %216, %216 : vector<24x128xf32>
    %cst_67 = arith.constant dense<0.000000e+00> : vector<24xf32>
    %220 = vector.multi_reduction <add>, %219, %cst_67 [1] : vector<24x128xf32> to vector<24xf32>
    %221 = vector.shape_cast %220 : vector<24xf32> to vector<24x1xf32>
    %cst_68 = arith.constant dense<0.000000e+00> : vector<24xf32>
    %222 = vector.multi_reduction <add>, %216, %cst_68 [1] : vector<24x128xf32> to vector<24xf32>
    %223 = vector.shape_cast %222 : vector<24xf32> to vector<24x1xf32>
    %cst_69 = arith.constant 2.000000e-06 : f32
    %224 = vector.broadcast %cst_69 : f32 to vector<24x1xf32>
    %225 = arith.mulf %224, %223 : vector<24x1xf32>
    %226 = arith.subf %221, %225 : vector<24x1xf32>
    %c4 = arith.constant 4 : index
    %c0_70 = arith.constant 0 : index
    %227 = vector.load %arg3[%c4, %c0_70] : memref<8x512xf32, #tpu.memory_space<vmem>>, vector<1x128xf32>
    %228 = vector.broadcast %226 : vector<24x1xf32> to vector<24x128xf32>
    %229 = vector.broadcast %227 : vector<1x128xf32> to vector<24x128xf32>
    %230 = arith.addf %228, %229 : vector<24x128xf32>
    %cst_71 = arith.constant 2.000000e+00 : f32
    %231 = vector.broadcast %cst_71 : f32 to vector<24x128xf32>
    %232 = arith.mulf %231, %218 : vector<24x128xf32>
    %233 = arith.subf %230, %232 : vector<24x128xf32>
    %cst_72 = arith.constant 0.000000e+00 : f32
    %234 = vector.broadcast %cst_72 : f32 to vector<24x128xf32>
    %235 = arith.maximumf %233, %234 : vector<24x128xf32>
    %236 = math.sqrt %235 : vector<24x128xf32>
    %cst_73 = arith.constant 0.000000e+00 : f32
    %237 = vector.broadcast %cst_73 : f32 to vector<24x128xf32>
    %238 = arith.subf %237, %236 : vector<24x128xf32>
    %c0_74 = arith.constant 0 : index
    %c0_75 = arith.constant 0 : index
    %239 = vector.load %arg5[%c0_74, %c0_75] : memref<24x128xf32, #tpu.memory_space<vmem>>, vector<24x128xf32>
    tpu.vector_store %arg5[%c0_74, %c0_75], %238 {strides = array<i32>} : memref<24x128xf32, #tpu.memory_space<vmem>>, vector<24x128xf32>,
    return
  }
}

</mosaic_0001>

<llo_original>
// kernel: tpu_custom_call.1
$region0: #{tpu_custom_call.1}
  #allocation0 [shape = 'u32[]', space=smem, size = 0x4, offset = 0x4, fixed_abs, tag = 'smem constant byte address 0x4 - core index']
  #allocation1 [shape = 'u32[144,128]{1,0:T(1,128)}', space=vmem, size = 0x12000, scoped, tag = 'internal scratch']
  %s0 = inlined_call_operand.vmem [shape: f32[48,128], index: 0, kind: input, shape index: {}]
  %s1 = inlined_call_operand.vmem [shape: f32[48,1], index: 1, kind: input, shape index: {}]
  %s2 = inlined_call_operand.hbm [shape: bf16[128,1536], index: 2, kind: input, shape index: {}]
  %s3 = inlined_call_operand.hbm [shape: f32[8,512], index: 3, kind: input, shape index: {}]
  %s4 = inlined_call_operand.hbm [shape: f32[176,128], index: 4, kind: input, shape index: {}]
  %s5 = inlined_call_operand.hbm [shape: f32[24,128], index: 5, kind: output, shape index: {}]
  %s6 = sld [smem:[#allocation0]]
  $region42: #{tpu_custom_call.1} parent=0
    _
  %s8 = ssub.s32 1, %s6
  %s9 = scalar_select 0, %s8, %s6
  $region1: #{tpu_custom_call.1} parent=0
    #allocation2 [shape = 'u8[393216]{0}', space=vmem, size = 0x60000, scoped, tag = 'input window, operand 2, single buffered']
    #allocation3 [shape = 's32[1]{0}', space=sflag, size = 0x4, scoped, tag = 'scoped memory for tpu_custom_call.1']
    #allocation4 [shape = 's32[1]{0}', space=sflag, size = 0x4, scoped, tag = 'scoped memory for tpu_custom_call.1']
    #allocation5 [shape = 'u8[16384]{0}', space=vmem, size = 0x4000, scoped, tag = 'input window, operand 3, single buffered']
    #allocation6 [shape = 's32[1]{0}', space=sflag, size = 0x4, scoped, tag = 'scoped memory for tpu_custom_call.1']
    #allocation7 [shape = 'u8[90112]{0}', space=vmem, size = 0x16000, scoped, tag = 'input window, operand 4, single buffered']
    #allocation8 [shape = 'u8[12288]{0}', space=vmem, size = 0x3000, scoped, tag = 'output window, operand 0, single buffered']
    %10 = vsyncpa [#allocation3], 0
    %11 = vsyncpa [#allocation6], 0
    %12 = vsyncpa [#allocation4], 0
    // Predicated region
    $region2: #{tpu_custom_call.1} parent=1 // pred_check
      _
    $region3: #{tpu_custom_call.1} parent=1 // pred_check_branch
      %14 = sbr.rel (0) target = $region5
    $region4: #{tpu_custom_call.1} parent=1 // pred_region
      _
    $region5: #{tpu_custom_call.1} parent=1 // pred_fallthru
      _
    // Predicated region
    $region6: #{tpu_custom_call.1} parent=1 // pred_check
      _
    $region7: #{tpu_custom_call.1} parent=1 // pred_check_branch
      %16 = sbr.rel (0) target = $region9
    $region8: #{tpu_custom_call.1} parent=1 // pred_region
      _
    $region9: #{tpu_custom_call.1} parent=1 // pred_fallthru
      _
    // Predicated region
    $region10: #{tpu_custom_call.1} parent=1 // pred_check
      _
    $region11: #{tpu_custom_call.1} parent=1 // pred_check_branch
      %18 = sbr.rel (0) target = $region13
    $region12: #{tpu_custom_call.1} parent=1 // pred_region
      %s20 = ssub.s32 12288, 12288
      %21 = vsyncadd [#allocation3], %s20
      %s22 = sshll.u32 [#allocation2], 4
      %s23 = int_to_ptr.vmem [resolvable:$true] %s22
      %28 = dma.hbm_to_vmem [thread:$0]  %s2, 12288, %s23, [#allocation3], 768, 768, 48
    $region13: #{tpu_custom_call.1} parent=1 // pred_fallthru
      _
    // Predicated region
    $region14: #{tpu_custom_call.1} parent=1 // pred_check
      _
    $region15: #{tpu_custom_call.1} parent=1 // pred_check_branch
      %30 = sbr.rel (0) target = $region17
    $region16: #{tpu_custom_call.1} parent=1 // pred_region
      %s32 = ssub.s32 512, 512
      %33 = vsyncadd [#allocation6], %s32
      %s35 = sshll.u32 [#allocation5], 4
      %s36 = int_to_ptr.vmem [resolvable:$true] %s35
      %38 = dma.hbm_to_vmem [thread:$0]  %s3, 512, %s36, [#allocation6]
    $region17: #{tpu_custom_call.1} parent=1 // pred_fallthru
      _
    // Predicated region
    $region18: #{tpu_custom_call.1} parent=1 // pred_check
      _
    $region19: #{tpu_custom_call.1} parent=1 // pred_check_branch
      %40 = sbr.rel (0) target = $region21
    $region20: #{tpu_custom_call.1} parent=1 // pred_region
      %s42 = ssub.s32 2816, 2816
      %43 = vsyncadd [#allocation6], %s42
      %s44 = sshll.u32 [#allocation7], 4
      %s45 = int_to_ptr.vmem [resolvable:$true] %s44
      %50 = dma.hbm_to_vmem [thread:$0]  %s4, 2816, %s45, [#allocation6], 128, 128, 8
    $region21: #{tpu_custom_call.1} parent=1 // pred_fallthru
      _
    // Predicated region
    $region22: #{tpu_custom_call.1} parent=1 // pred_check
      _
    $region23: #{tpu_custom_call.1} parent=1 // pred_check_branch
      %52 = sbr.rel (0) target = $region25
    $region24: #{tpu_custom_call.1} parent=1 // pred_region
      %53 = dma.done [#allocation3], 12288
    $region25: #{tpu_custom_call.1} parent=1 // pred_fallthru
      _
    // Predicated region
    $region26: #{tpu_custom_call.1} parent=1 // pred_check
      _
    $region27: #{tpu_custom_call.1} parent=1 // pred_check_branch
      %55 = sbr.rel (0) target = $region29
    $region28: #{tpu_custom_call.1} parent=1 // pred_region
      %56 = dma.done [#allocation6], 512
    $region29: #{tpu_custom_call.1} parent=1 // pred_fallthru
      _
    // Predicated region
    $region30: #{tpu_custom_call.1} parent=1 // pred_check
      _
    $region31: #{tpu_custom_call.1} parent=1 // pred_check_branch
      %58 = sbr.rel (0) target = $region33
    $region32: #{tpu_custom_call.1} parent=1 // pred_region
      %59 = dma.done [#allocation6], 2816
    $region33: #{tpu_custom_call.1} parent=1 // pred_fallthru
      _
    %v61 = vld [vmem:[%s0] sm:$0xff]
    %v62 = vld [vmem:[%s0 + $0x8] sm:$0xff]
    %v63 = vld [vmem:[%s0 + $0x10] sm:$0xff]
    %v64 = vld [vmem:[%s0 + $0x18] sm:$0xff]
    %v65 = vld [vmem:[%s0 + $0x20] sm:$0xff]
    %v66 = vld [vmem:[%s0 + $0x28] sm:$0xff]
    %v67 = vpack.c.bf16 %v62, %v61
    %v68 = vpack.c.bf16 %v64, %v63
    %v69 = vpack.c.bf16 %v66, %v65
    %v70 = vld [vmem:[#allocation2] sm:$0xf]
    %v71 = vld [vmem:[#allocation2 + $0x30] sm:$0xf]
    %v72 = vld [vmem:[#allocation2 + $0x60] sm:$0xf]
    %v73 = vld [vmem:[#allocation2 + $0x90] sm:$0xf]
    %v74 = vld [vmem:[#allocation2 + $0xc0] sm:$0xf]
    %v75 = vld [vmem:[#allocation2 + $0xf0] sm:$0xf]
    %v76 = vld [vmem:[#allocation2 + $0x120] sm:$0xf]
    %v77 = vld [vmem:[#allocation2 + $0x150] sm:$0xf]
    %v78 = vld [vmem:[#allocation2 + $0x180] sm:$0xf]
    %v79 = vld [vmem:[#allocation2 + $0x1b0] sm:$0xf]
    %v80 = vld [vmem:[#allocation2 + $0x1e0] sm:$0xf]
    %v81 = vld [vmem:[#allocation2 + $0x210] sm:$0xf]
    %v82 = vld [vmem:[#allocation2 + $0x240] sm:$0xf]
    %v83 = vld [vmem:[#allocation2 + $0x270] sm:$0xf]
    %v84 = vld [vmem:[#allocation2 + $0x2a0] sm:$0xf]
    %v85 = vld [vmem:[#allocation2 + $0x2d0] sm:$0xf]
    %v86 = vld [vmem:[#allocation5] ss:$0 sm:$0xff]
    %v103 = vunpack.c.l.b16 %v70
    %v104 = vunpack.c.l.b16 %v71
    %v105 = vunpack.c.l.b16 %v72
    %v106 = vunpack.c.l.b16 %v73
    %v107 = vunpack.c.l.b16 %v74
    %v108 = vunpack.c.l.b16 %v75
    %v109 = vunpack.c.l.b16 %v76
    %v110 = vunpack.c.l.b16 %v77
    %v111 = vunpack.c.l.b16 %v78
    %v112 = vunpack.c.l.b16 %v79
    %v113 = vunpack.c.l.b16 %v80
    %v114 = vunpack.c.l.b16 %v81
    %v115 = vunpack.c.l.b16 %v82
    %v116 = vunpack.c.l.b16 %v83
    %v117 = vunpack.c.l.b16 %v84
    %v118 = vunpack.c.l.b16 %v85
    %v119 = vpack.c.b16 %v104, %v103
    %v120 = vpack.c.b16 %v106, %v105
    %v121 = vpack.c.b16 %v108, %v107
    %v122 = vpack.c.b16 %v110, %v109
    %v123 = vpack.c.b16 %v112, %v111
    %v124 = vpack.c.b16 %v114, %v113
    %v125 = vpack.c.b16 %v116, %v115
    %v126 = vpack.c.b16 %v118, %v117
    %135 = vmatprep.subr.bf16.mxu0 0
    %136 = vmatpush1.bf16.msra.mxu0 %v119
    %137 = vmatprep.subr.bf16.mxu0 0
    %138 = vmatpush1.bf16.msra.mxu0 %v120
    %139 = vmatprep.subr.bf16.mxu0 0
    %140 = vmatpush1.bf16.msra.mxu0 %v121
    %141 = vmatprep.subr.bf16.mxu0 0
    %142 = vmatpush1.bf16.msra.mxu0 %v122
    %143 = vmatprep.subr.bf16.mxu0 0
    %144 = vmatpush1.bf16.msra.mxu0 %v123
    %145 = vmatprep.subr.bf16.mxu0 0
    %146 = vmatpush1.bf16.msra.mxu0 %v124
    %147 = vmatprep.subr.bf16.mxu0 0
    %148 = vmatpush1.bf16.msra.mxu0 %v125
    %149 = vmatprep.subr.bf16.mxu0 0
    %150 = vmatpush1.bf16.msra.mxu0 %v126
    %151 = vmatprep.subr.bf16.mxu0 0
    %152 = vmatpush1.bf16.msra.mxu0 0
    %153 = vmatprep.subr.bf16.mxu0 0
    %154 = vmatpush1.bf16.msra.mxu0 0
    %155 = vmatprep.subr.bf16.mxu0 0
    %156 = vmatpush1.bf16.msra.mxu0 0
    %157 = vmatprep.subr.bf16.mxu0 0
    %158 = vmatpush1.bf16.msra.mxu0 0
    %159 = vmatprep.subr.bf16.mxu0 0
    %160 = vmatpush1.bf16.msra.mxu0 0
    %161 = vmatprep.subr.bf16.mxu0 0
    %162 = vmatpush1.bf16.msra.mxu0 0
    %163 = vmatprep.subr.bf16.mxu0 0
    %164 = vmatpush1.bf16.msra.mxu0 0
    %165 = vmatprep.subr.bf16.mxu0 0
    %166 = vmatpush1.bf16.msra.mxu0 0
    %167 = vmatprep.mubr.bf16.mxu0 0
    %168 = vmatmul.mubr.bf16.gmra.mrb[0].mxu0 %v67
    %v169 = vpop.f32.mrb[0].mxu0
    %v170 = vadd.f32 %v86, %v169
    %v171 = vpop.f32.mrb[0].mxu0
    %v172 = vpop.f32.mrb[0].mxu0
    %v173 = vadd.f32 %v86, %v172
    %v174 = vpop.f32.mrb[0].mxu0
    %175 = vmatprep.mubr.bf16.mxu0 0
    %176 = vmatmul.mubr.bf16.gmra.mrb[0].mxu0 %v68
    %v177 = vpop.f32.mrb[0].mxu0
    %v178 = vadd.f32 %v86, %v177
    %v179 = vpop.f32.mrb[0].mxu0
    %v180 = vpop.f32.mrb[0].mxu0
    %v181 = vadd.f32 %v86, %v180
    %v182 = vpop.f32.mrb[0].mxu0
    %183 = vmatprep.mubr.bf16.mxu0 0
    %184 = vmatmul.mubr.bf16.gmra.mrb[0].mxu0 %v69
    %v185 = vpop.f32.mrb[0].mxu0
    %v186 = vadd.f32 %v86, %v185
    %v187 = vpop.f32.mrb[0].mxu0
    %v188 = vpop.f32.mrb[0].mxu0
    %v189 = vadd.f32 %v86, %v188
    %v190 = vpop.f32.mrb[0].mxu0
    %191 = vdwg.mxu0
    %v192 = vld [vmem:[#allocation5 + $0x8] ss:$0 sm:$0xff]
    %v193 = vld [vmem:[#allocation5 + $0x10] ss:$0 sm:$0xff]
    %194 = vadd.xlane.f32.xlu0 %v170
    %v195 = vpop.xlane.xlu0 %194
    %196 = vadd.xlane.f32.xlu0 %v173
    %v197 = vpop.xlane.xlu0 %196
    %198 = vadd.xlane.f32.xlu0 %v178
    %v199 = vpop.xlane.xlu0 %198
    %200 = vadd.xlane.f32.xlu0 %v181
    %v201 = vpop.xlane.xlu0 %200
    %202 = vadd.xlane.f32.xlu0 %v186
    %v203 = vpop.xlane.xlu0 %202
    %204 = vadd.xlane.f32.xlu0 %v189
    %v205 = vpop.xlane.xlu0 %204
    %v206 = vrcp.pop 128.0
    %v207 = vmul.f32 %v195, %v206
    %v208 = vmul.f32 %v197, %v206
    %v209 = vmul.f32 %v199, %v206
    %v210 = vmul.f32 %v201, %v206
    %v211 = vmul.f32 %v203, %v206
    %v212 = vmul.f32 %v205, %v206
    %v213 = vsub.f32 %v170, %v207
    %v214 = vsub.f32 %v173, %v208
    %v215 = vsub.f32 %v178, %v209
    %v216 = vsub.f32 %v181, %v210
    %v217 = vsub.f32 %v186, %v211
    %v218 = vsub.f32 %v189, %v212
    %v219 = vmul.f32 %v213, %v213
    %v220 = vmul.f32 %v214, %v214
    %v221 = vmul.f32 %v215, %v215
    %v222 = vmul.f32 %v216, %v216
    %v223 = vmul.f32 %v217, %v217
    %v224 = vmul.f32 %v218, %v218
    %225 = vadd.xlane.f32.xlu0 %v219
    %v226 = vpop.xlane.xlu0 %225
    %227 = vadd.xlane.f32.xlu0 %v220
    %v228 = vpop.xlane.xlu0 %227
    %229 = vadd.xlane.f32.xlu0 %v221
    %v230 = vpop.xlane.xlu0 %229
    %231 = vadd.xlane.f32.xlu0 %v222
    %v232 = vpop.xlane.xlu0 %231
    %233 = vadd.xlane.f32.xlu0 %v223
    %v234 = vpop.xlane.xlu0 %233
    %235 = vadd.xlane.f32.xlu0 %v224
    %v236 = vpop.xlane.xlu0 %235
    %v237 = vmul.f32 %v226, %v206
    %v238 = vmul.f32 %v228, %v206
    %v239 = vmul.f32 %v230, %v206
    %v240 = vmul.f32 %v232, %v206
    %v241 = vmul.f32 %v234, %v206
    %v242 = vmul.f32 %v236, %v206
    %v243 = vadd.f32 %v237, 1e-05
    %v244 = vadd.f32 %v238, 1e-05
    %v245 = vadd.f32 %v239, 1e-05
    %v246 = vadd.f32 %v240, 1e-05
    %v247 = vadd.f32 %v241, 1e-05
    %v248 = vadd.f32 %v242, 1e-05
    %v249 = vrsqrt.pop %v243
    %v250 = vrsqrt.pop %v244
    %v251 = vrsqrt.pop %v245
    %v252 = vrsqrt.pop %v246
    %v253 = vrsqrt.pop %v247
    %v254 = vrsqrt.pop %v248
    %v255 = vmul.f32 %v213, %v249
    %v256 = vmul.f32 %v214, %v250
    %v257 = vmul.f32 %v215, %v251
    %v258 = vmul.f32 %v216, %v252
    %v259 = vmul.f32 %v217, %v253
    %v260 = vmul.f32 %v218, %v254
    %v261 = vmul.f32 %v255, %v192
    %v262 = vmul.f32 %v256, %v192
    %v263 = vmul.f32 %v257, %v192
    %v264 = vmul.f32 %v258, %v192
    %v265 = vmul.f32 %v259, %v192
    %v266 = vmul.f32 %v260, %v192
    %v267 = vadd.f32 %v261, %v193
    %v268 = vadd.f32 %v262, %v193
    %v269 = vadd.f32 %v263, %v193
    %v270 = vadd.f32 %v264, %v193
    %v271 = vadd.f32 %v265, %v193
    %v272 = vadd.f32 %v266, %v193
    %v273 = vld [vmem:[%s1] sm:$0xff]
    %v274 = vld [vmem:[%s1 + $0x8] sm:$0xff]
    %v275 = vld [vmem:[%s1 + $0x10] sm:$0xff]
    %v276 = vld [vmem:[%s1 + $0x18] sm:$0xff]
    %v277 = vld [vmem:[%s1 + $0x20] sm:$0xff]
    %v278 = vld [vmem:[%s1 + $0x28] sm:$0xff]
    %280 = vset.pattern.permute.xlu0 0
    %281 = vperm.xlu0 %280, %v273
    %v282 = vpop.permute.xlu0 %281
    %285 = vset.pattern.permute.xlu0 0
    %286 = vperm.xlu0 %285, %v274
    %v287 = vpop.permute.xlu0 %286
    %290 = vset.pattern.permute.xlu0 0
    %291 = vperm.xlu0 %290, %v275
    %v292 = vpop.permute.xlu0 %291
    %295 = vset.pattern.permute.xlu0 0
    %296 = vperm.xlu0 %295, %v276
    %v297 = vpop.permute.xlu0 %296
    %300 = vset.pattern.permute.xlu0 0
    %301 = vperm.xlu0 %300, %v277
    %v302 = vpop.permute.xlu0 %301
    %305 = vset.pattern.permute.xlu0 0
    %306 = vperm.xlu0 %305, %v278
    %v307 = vpop.permute.xlu0 %306
    %v309 = vmul.f32 %v267, %v282
    %v310 = vmul.f32 %v268, %v287
    %v311 = vmul.f32 %v269, %v292
    %v312 = vmul.f32 %v270, %v297
    %v313 = vmul.f32 %v271, %v302
    %v314 = vmul.f32 %v272, %v307
    %v315 = vpack.c.bf16 %v310, %v309
    %v316 = vpack.c.bf16 %v312, %v311
    %v317 = vpack.c.bf16 %v314, %v313
    %v318 = vld [vmem:[#allocation2 + $0x4] sm:$0xff]
    %v319 = vld [vmem:[#allocation2 + $0x34] sm:$0xff]
    %v320 = vld [vmem:[#allocation2 + $0x64] sm:$0xff]
    %v321 = vld [vmem:[#allocation2 + $0x94] sm:$0xff]
    %v322 = vld [vmem:[#allocation2 + $0xc4] sm:$0xff]
    %v323 = vld [vmem:[#allocation2 + $0xf4] sm:$0xff]
    %v324 = vld [vmem:[#allocation2 + $0x124] sm:$0xff]
    %v325 = vld [vmem:[#allocation2 + $0x154] sm:$0xff]
    %v326 = vld [vmem:[#allocation2 + $0x184] sm:$0xff]
    %v327 = vld [vmem:[#allocation2 + $0x1b4] sm:$0xff]
    %v328 = vld [vmem:[#allocation2 + $0x1e4] sm:$0xff]
    %v329 = vld [vmem:[#allocation2 + $0x214] sm:$0xff]
    %v330 = vld [vmem:[#allocation2 + $0x244] sm:$0xff]
    %v331 = vld [vmem:[#allocation2 + $0x274] sm:$0xff]
    %v332 = vld [vmem:[#allocation2 + $0x2a4] sm:$0xff]
    %v333 = vld [vmem:[#allocation2 + $0x2d4] sm:$0xff]
    %s334 = scalar_lea.vmem [#allocation5], 1
    %v335 = vld [vmem:[%s334] ss:$8 sm:$0x3]
    %v337 = vlaneseq
    %v338 = vshrl.u32 %v337, 7
    %v339 = vsub.s32 0, %v338
    %v340 = vrot.slane %v335, %v339
    %v341 = vlaneseq
    %v342 = vshrl.u32 %v341, 7
    %v343 = vsub.s32 1, %v342
    %v344 = vrot.slane %v335, %v343
    %v363 = vunpack.c.l.b16 %v318
    %v364 = vunpack.c.h.b16 %v318
    %v365 = vunpack.c.l.b16 %v319
    %v366 = vunpack.c.h.b16 %v319
    %v367 = vunpack.c.l.b16 %v320
    %v368 = vunpack.c.h.b16 %v320
    %v369 = vunpack.c.l.b16 %v321
    %v370 = vunpack.c.h.b16 %v321
    %v371 = vunpack.c.l.b16 %v322
    %v372 = vunpack.c.h.b16 %v322
    %v373 = vunpack.c.l.b16 %v323
    %v374 = vunpack.c.h.b16 %v323
    %v375 = vunpack.c.l.b16 %v324
    %v376 = vunpack.c.h.b16 %v324
    %v377 = vunpack.c.l.b16 %v325
    %v378 = vunpack.c.h.b16 %v325
    %v379 = vunpack.c.l.b16 %v326
    %v380 = vunpack.c.h.b16 %v326
    %v381 = vunpack.c.l.b16 %v327
    %v382 = vunpack.c.h.b16 %v327
    %v383 = vunpack.c.l.b16 %v328
    %v384 = vunpack.c.h.b16 %v328
    %v385 = vunpack.c.l.b16 %v329
    %v386 = vunpack.c.h.b16 %v329
    %v387 = vunpack.c.l.b16 %v330
    %v388 = vunpack.c.h.b16 %v330
    %v389 = vunpack.c.l.b16 %v331
    %v390 = vunpack.c.h.b16 %v331
    %v391 = vunpack.c.l.b16 %v332
    %v392 = vunpack.c.h.b16 %v332
    %v393 = vunpack.c.l.b16 %v333
    %v394 = vunpack.c.h.b16 %v333
    %v395 = vpack.c.b16 %v365, %v363
    %v396 = vpack.c.b16 %v366, %v364
    %v397 = vpack.c.b16 %v369, %v367
    %v398 = vpack.c.b16 %v370, %v368
    %v399 = vpack.c.b16 %v373, %v371
    %v400 = vpack.c.b16 %v374, %v372
    %v401 = vpack.c.b16 %v377, %v375
    %v402 = vpack.c.b16 %v378, %v376
    %v403 = vpack.c.b16 %v381, %v379
    %v404 = vpack.c.b16 %v382, %v380
    %v405 = vpack.c.b16 %v385, %v383
    %v406 = vpack.c.b16 %v386, %v384
    %v407 = vpack.c.b16 %v389, %v387
    %v408 = vpack.c.b16 %v390, %v388
    %v409 = vpack.c.b16 %v393, %v391
    %v410 = vpack.c.b16 %v394, %v392
    %427 = vmatprep.subr.bf16.mxu0 %v396
    %428 = vmatpush1.bf16.msra.mxu0 %v395
    %429 = vmatprep.subr.bf16.mxu0 %v398
    %430 = vmatpush1.bf16.msra.mxu0 %v397
    %431 = vmatprep.subr.bf16.mxu0 %v400
    %432 = vmatpush1.bf16.msra.mxu0 %v399
    %433 = vmatprep.subr.bf16.mxu0 %v402
    %434 = vmatpush1.bf16.msra.mxu0 %v401
    %435 = vmatprep.subr.bf16.mxu0 %v404
    %436 = vmatpush1.bf16.msra.mxu0 %v403
    %437 = vmatprep.subr.bf16.mxu0 %v406
    %438 = vmatpush1.bf16.msra.mxu0 %v405
    %439 = vmatprep.subr.bf16.mxu0 %v408
    %440 = vmatpush1.bf16.msra.mxu0 %v407
    %441 = vmatprep.subr.bf16.mxu0 %v410
    %442 = vmatpush1.bf16.msra.mxu0 %v409
    %443 = vmatprep.subr.bf16.mxu0 0
    %444 = vmatpush1.bf16.msra.mxu0 0
    %445 = vmatprep.subr.bf16.mxu0 0
    %446 = vmatpush1.bf16.msra.mxu0 0
    %447 = vmatprep.subr.bf16.mxu0 0
    %448 = vmatpush1.bf16.msra.mxu0 0
    %449 = vmatprep.subr.bf16.mxu0 0
    %450 = vmatpush1.bf16.msra.mxu0 0
    %451 = vmatprep.subr.bf16.mxu0 0
    %452 = vmatpush1.bf16.msra.mxu0 0
    %453 = vmatprep.subr.bf16.mxu0 0
    %454 = vmatpush1.bf16.msra.mxu0 0
    %455 = vmatprep.subr.bf16.mxu0 0
    %456 = vmatpush1.bf16.msra.mxu0 0
    %457 = vmatprep.subr.bf16.mxu0 0
    %458 = vmatpush1.bf16.msra.mxu0 0
    %459 = vmatprep.mubr.bf16.mxu0 0
    %460 = vmatmul.mubr.bf16.gmra.mrb[0].mxu0 %v315
    %v461 = vpop.f32.mrb[0].mxu0
    %v462 = vadd.f32 %v340, %v461
    %v463 = vpop.f32.mrb[0].mxu0
    %v464 = vadd.f32 %v344, %v463
    %v465 = vpop.f32.mrb[0].mxu0
    %v466 = vadd.f32 %v340, %v465
    %v467 = vpop.f32.mrb[0].mxu0
    %v468 = vadd.f32 %v344, %v467
    %469 = vmatprep.mubr.bf16.mxu0 0
    %470 = vmatmul.mubr.bf16.gmra.mrb[0].mxu0 %v316
    %v471 = vpop.f32.mrb[0].mxu0
    %v472 = vadd.f32 %v340, %v471
    %v473 = vpop.f32.mrb[0].mxu0
    %v474 = vadd.f32 %v344, %v473
    %v475 = vpop.f32.mrb[0].mxu0
    %v476 = vadd.f32 %v340, %v475
    %v477 = vpop.f32.mrb[0].mxu0
    %v478 = vadd.f32 %v344, %v477
    %479 = vmatprep.mubr.bf16.mxu0 0
    %480 = vmatmul.mubr.bf16.gmra.mrb[0].mxu0 %v317
    %v481 = vpop.f32.mrb[0].mxu0
    %v482 = vadd.f32 %v340, %v481
    %v483 = vpop.f32.mrb[0].mxu0
    %v484 = vadd.f32 %v344, %v483
    %v485 = vpop.f32.mrb[0].mxu0
    %v486 = vadd.f32 %v340, %v485
    %v487 = vpop.f32.mrb[0].mxu0
    %v488 = vadd.f32 %v344, %v487
    %489 = vdwg.mxu0
    %v490 = vld [vmem:[#allocation7] sm:$0xff]
    %v491 = vld [vmem:[#allocation7 + $0x8] sm:$0xf]
    %492 = vmatprep.subr.mxu0 0.0
    %493 = vmatpush1.xpose.msra.mxu0 %v490
    %494 = vmatprep.subr.mxu0 0.0
    %495 = vmatpush1.xpose.msra.mxu0 %v491
    %496 = vmatprep.subr.mxu0 0.0
    %497 = vmatpush1.xpose.msra.mxu0 0.0
    %498 = vmatprep.subr.mxu0 0.0
    %499 = vmatpush1.xpose.msra.mxu0 0.0
    %500 = vmatprep.subr.mxu0 0.0
    %501 = vmatpush1.xpose.msra.mxu0 0.0
    %502 = vmatprep.subr.mxu0 0.0
    %503 = vmatpush1.xpose.msra.mxu0 0.0
    %504 = vmatprep.subr.mxu0 0.0
    %505 = vmatpush1.xpose.msra.mxu0 0.0
    %506 = vmatprep.subr.mxu0 0.0
    %507 = vmatpush1.xpose.msra.mxu0 0.0
    %508 = vmatprep.subr.mxu0 0.0
    %509 = vmatpush1.xpose.msra.mxu0 0.0
    %510 = vmatprep.subr.mxu0 0.0
    %511 = vmatpush1.xpose.msra.mxu0 0.0
    %512 = vmatprep.subr.mxu0 0.0
    %513 = vmatpush1.xpose.msra.mxu0 0.0
    %514 = vmatprep.subr.mxu0 0.0
    %515 = vmatpush1.xpose.msra.mxu0 0.0
    %516 = vmatprep.subr.mxu0 0.0
    %517 = vmatpush1.xpose.msra.mxu0 0.0
    %518 = vmatprep.subr.mxu0 0.0
    %519 = vmatpush1.xpose.msra.mxu0 0.0
    %520 = vmatprep.subr.mxu0 0.0
    %521 = vmatpush1.xpose.msra.mxu0 0.0
    %522 = vmatprep.subr.mxu0 0.0
    %523 = vmatpush1.xpose.msra.mxu0 0.0
    %524 = vmatprep.subr.mxu0 0.0
    %525 = vmatpush1.xpose.msra.mxu0 0.0
    %526 = vmatprep.subr.mxu0 0.0
    %527 = vmatpush1.xpose.msra.mxu0 0.0
    %528 = vmatprep.subr.mxu0 0.0
    %529 = vmatpush1.xpose.msra.mxu0 0.0
    %530 = vmatprep.subr.mxu0 0.0
    %531 = vmatpush1.xpose.msra.mxu0 0.0
    %532 = vmatprep.subr.mxu0 0.0
    %533 = vmatpush1.xpose.msra.mxu0 0.0
    %534 = vmatprep.subr.mxu0 0.0
    %535 = vmatpush1.xpose.msra.mxu0 0.0
    %536 = vmatprep.subr.mxu0 0.0
    %537 = vmatpush1.xpose.msra.mxu0 0.0
    %538 = vmatprep.subr.mxu0 0.0
    %539 = vmatpush1.xpose.msra.mxu0 0.0
    %540 = vmatprep.subr.mxu0 0.0
    %541 = vmatpush1.xpose.msra.mxu0 0.0
    %542 = vmatprep.subr.mxu0 0.0
    %543 = vmatpush1.xpose.msra.mxu0 0.0
    %544 = vmatprep.subr.mxu0 0.0
    %545 = vmatpush1.xpose.msra.mxu0 0.0
    %546 = vmatprep.subr.mxu0 0.0
    %547 = vmatpush1.xpose.msra.mxu0 0.0
    %548 = vmatprep.subr.mxu0 0.0
    %549 = vmatpush1.xpose.msra.mxu0 0.0
    %550 = vmatprep.subr.mxu0 0.0
    %551 = vmatpush1.xpose.msra.mxu0 0.0
    %552 = vmatprep.subr.mxu0 0.0
    %553 = vmatpush1.xpose.msra.mxu0 0.0
    %554 = vmatprep.subr.mxu0 0.0
    %555 = vmatpush1.xpose.msra.mxu0 0.0
    %556 = vmatprep.mubr.f32.mxu0 0.0
    %557 = vmatmul.mubr.f32.gmra.mrb[0].mxu0 %v462
    %v558 = vpop.f32.mrb[0].mxu0
    %v559 = vadd.f32 0.0, %v558
    %v560 = vpop.f32.mrb[0].mxu0
    %561 = vmatprep.mubr.f32.mxu0 0.0
    %562 = vmatmul.mubr.f32.gmra.mrb[0].mxu0 %v466
    %v563 = vpop.f32.mrb[0].mxu0
    %v564 = vadd.f32 0.0, %v563
    %v565 = vpop.f32.mrb[0].mxu0
    %566 = vmatprep.mubr.f32.mxu0 0.0
    %567 = vmatmul.mubr.f32.gmra.mrb[0].mxu0 %v472
    %v568 = vpop.f32.mrb[0].mxu0
    %v569 = vadd.f32 0.0, %v568
    %v570 = vpop.f32.mrb[0].mxu0
    %571 = vmatprep.mubr.f32.mxu0 0.0
    %572 = vmatmul.mubr.f32.gmra.mrb[0].mxu0 %v476
    %v573 = vpop.f32.mrb[0].mxu0
    %v574 = vadd.f32 0.0, %v573
    %v575 = vpop.f32.mrb[0].mxu0
    %576 = vmatprep.mubr.f32.mxu0 0.0
    %577 = vmatmul.mubr.f32.gmra.mrb[0].mxu0 %v482
    %v578 = vpop.f32.mrb[0].mxu0
    %v579 = vadd.f32 0.0, %v578
    %v580 = vpop.f32.mrb[0].mxu0
    %581 = vmatprep.mubr.f32.mxu0 0.0
    %582 = vmatmul.mubr.f32.gmra.mrb[0].mxu0 %v486
    %v583 = vpop.f32.mrb[0].mxu0
    %v584 = vadd.f32 0.0, %v583
    %v585 = vpop.f32.mrb[0].mxu0
    %586 = vdwg.mxu0
    %vm587 = vcmp.eq.f32.partialorder %v273, 0.0
    %vm588 = vcmp.eq.f32.partialorder %v274, 0.0
    %vm589 = vcmp.eq.f32.partialorder %v275, 0.0
    %vm590 = vcmp.eq.f32.partialorder %v276, 0.0
    %vm591 = vcmp.eq.f32.partialorder %v277, 0.0
    %vm592 = vcmp.eq.f32.partialorder %v278, 0.0
    %v593 = vsel %vm587, 1, 0
    %v594 = vsel %vm588, 1, 0
    %v595 = vsel %vm589, 1, 0
    %v596 = vsel %vm590, 1, 0
    %v597 = vsel %vm591, 1, 0
    %v598 = vsel %vm592, 1, 0
    %599 = vset.pattern.permute.xlu0 0
    %600 = vperm.xlu0 %599, %v593
    %v601 = vpop.permute.xlu0 %600
    %602 = vset.pattern.permute.xlu0 0
    %603 = vperm.xlu0 %602, %v594
    %v604 = vpop.permute.xlu0 %603
    %605 = vset.pattern.permute.xlu0 0
    %606 = vperm.xlu0 %605, %v595
    %v607 = vpop.permute.xlu0 %606
    %608 = vset.pattern.permute.xlu0 0
    %609 = vperm.xlu0 %608, %v596
    %v610 = vpop.permute.xlu0 %609
    %611 = vset.pattern.permute.xlu0 0
    %612 = vperm.xlu0 %611, %v597
    %v613 = vpop.permute.xlu0 %612
    %614 = vset.pattern.permute.xlu0 0
    %615 = vperm.xlu0 %614, %v598
    %v616 = vpop.permute.xlu0 %615
    %vm617 = vcmp.eq.s32.totalorder %v601, 1
    %vm618 = vcmp.eq.s32.totalorder %v604, 1
    %vm619 = vcmp.eq.s32.totalorder %v607, 1
    %vm620 = vcmp.eq.s32.totalorder %v610, 1
    %vm621 = vcmp.eq.s32.totalorder %v613, 1
    %vm622 = vcmp.eq.s32.totalorder %v616, 1
    %v623 = vsel %vm617, -1e+09, %v559
    %v624 = vsel %vm618, -1e+09, %v564
    %v625 = vsel %vm619, -1e+09, %v569
    %v626 = vsel %vm620, -1e+09, %v574
    %v627 = vsel %vm621, -1e+09, %v579
    %v628 = vsel %vm622, -1e+09, %v584
    %vm629 = vcmask 97280
    %v630 = vsel %vm629, %v623, -inf
    %v631 = vrot.slane %v630, 4
    %v632 = vmax.f32 %v630, %v631
    %v633 = vrot.slane %v632, 2
    %v634 = vmax.f32 %v632, %v633
    %v635 = vrot.slane %v634, 1
    %v636 = vmax.f32 %v634, %v635
    %v637 = vsel %vm629, %v624, -inf
    %v638 = vrot.slane %v637, 4
    %v639 = vmax.f32 %v637, %v638
    %v640 = vrot.slane %v639, 2
    %v641 = vmax.f32 %v639, %v640
    %v642 = vrot.slane %v641, 1
    %v643 = vmax.f32 %v641, %v642
    %v644 = vsel %vm629, %v625, -inf
    %v645 = vrot.slane %v644, 4
    %v646 = vmax.f32 %v644, %v645
    %v647 = vrot.slane %v646, 2
    %v648 = vmax.f32 %v646, %v647
    %v649 = vrot.slane %v648, 1
    %v650 = vmax.f32 %v648, %v649
    %v651 = vsel %vm629, %v626, -inf
    %v652 = vrot.slane %v651, 4
    %v653 = vmax.f32 %v651, %v652
    %v654 = vrot.slane %v653, 2
    %v655 = vmax.f32 %v653, %v654
    %v656 = vrot.slane %v655, 1
    %v657 = vmax.f32 %v655, %v656
    %v658 = vsel %vm629, %v627, -inf
    %v659 = vrot.slane %v658, 4
    %v660 = vmax.f32 %v658, %v659
    %v661 = vrot.slane %v660, 2
    %v662 = vmax.f32 %v660, %v661
    %v663 = vrot.slane %v662, 1
    %v664 = vmax.f32 %v662, %v663
    %v665 = vsel %vm629, %v628, -inf
    %v666 = vrot.slane %v665, 4
    %v667 = vmax.f32 %v665, %v666
    %v668 = vrot.slane %v667, 2
    %v669 = vmax.f32 %v667, %v668
    %v670 = vrot.slane %v669, 1
    %v671 = vmax.f32 %v669, %v670
    %v672 = vsub.f32 %v623, %v636
    %v673 = vsub.f32 %v624, %v643
    %v674 = vsub.f32 %v625, %v650
    %v675 = vsub.f32 %v626, %v657
    %v676 = vsub.f32 %v627, %v664
    %v677 = vsub.f32 %v628, %v671
    %v678 = vmul.f32 %v672, 1.442695
    %v679 = vpow.pop %v678
    %v680 = vmul.f32 %v673, 1.442695
    %v681 = vpow.pop %v680
    %v682 = vmul.f32 %v674, 1.442695
    %v683 = vpow.pop %v682
    %v684 = vmul.f32 %v675, 1.442695
    %v685 = vpow.pop %v684
    %v686 = vmul.f32 %v676, 1.442695
    %v687 = vpow.pop %v686
    %v688 = vmul.f32 %v677, 1.442695
    %v689 = vpow.pop %v688
    %v690 = vsel %vm629, %v679, 0.0
    %v691 = vrot.slane %v690, 4
    %v692 = vadd.f32 %v690, %v691
    %v693 = vrot.slane %v692, 2
    %v694 = vadd.f32 %v692, %v693
    %v695 = vrot.slane %v694, 1
    %v696 = vadd.f32 %v694, %v695
    %v697 = vsel %vm629, %v681, 0.0
    %v698 = vrot.slane %v697, 4
    %v699 = vadd.f32 %v697, %v698
    %v700 = vrot.slane %v699, 2
    %v701 = vadd.f32 %v699, %v700
    %v702 = vrot.slane %v701, 1
    %v703 = vadd.f32 %v701, %v702
    %v704 = vsel %vm629, %v683, 0.0
    %v705 = vrot.slane %v704, 4
    %v706 = vadd.f32 %v704, %v705
    %v707 = vrot.slane %v706, 2
    %v708 = vadd.f32 %v706, %v707
    %v709 = vrot.slane %v708, 1
    %v710 = vadd.f32 %v708, %v709
    %v711 = vsel %vm629, %v685, 0.0
    %v712 = vrot.slane %v711, 4
    %v713 = vadd.f32 %v711, %v712
    %v714 = vrot.slane %v713, 2
    %v715 = vadd.f32 %v713, %v714
    %v716 = vrot.slane %v715, 1
    %v717 = vadd.f32 %v715, %v716
    %v718 = vsel %vm629, %v687, 0.0
    %v719 = vrot.slane %v718, 4
    %v720 = vadd.f32 %v718, %v719
    %v721 = vrot.slane %v720, 2
    %v722 = vadd.f32 %v720, %v721
    %v723 = vrot.slane %v722, 1
    %v724 = vadd.f32 %v722, %v723
    %v725 = vsel %vm629, %v689, 0.0
    %v726 = vrot.slane %v725, 4
    %v727 = vadd.f32 %v725, %v726
    %v728 = vrot.slane %v727, 2
    %v729 = vadd.f32 %v727, %v728
    %v730 = vrot.slane %v729, 1
    %v731 = vadd.f32 %v729, %v730
    %v732 = vrcp.pop %v696
    %v733 = vrcp.pop %v703
    %v734 = vrcp.pop %v710
    %v735 = vrcp.pop %v717
    %v736 = vrcp.pop %v724
    %v737 = vrcp.pop %v731
    %v738 = vmul.f32 %v679, %v732
    %v739 = vmul.f32 %v681, %v733
    %v740 = vmul.f32 %v683, %v734
    %v741 = vmul.f32 %v685, %v735
    %v742 = vmul.f32 %v687, %v736
    %v743 = vmul.f32 %v689, %v737
    %744 = vxpose.xlu0.b32.start [1/16] %v738, 128
    %745 = vxpose.xlu0.b32.cont [2/16] 0.0, 128
    %746 = vxpose.xlu0.b32.cont [3/16] 0.0, 128
    %747 = vxpose.xlu0.b32.cont [4/16] 0.0, 128
    %748 = vxpose.xlu0.b32.cont [5/16] 0.0, 128
    %749 = vxpose.xlu0.b32.cont [6/16] 0.0, 128
    %750 = vxpose.xlu0.b32.cont [7/16] 0.0, 128
    %751 = vxpose.xlu0.b32.cont [8/16] 0.0, 128
    %752 = vxpose.xlu0.b32.cont [9/16] 0.0, 128
    %753 = vxpose.xlu0.b32.cont [10/16] 0.0, 128
    %754 = vxpose.xlu0.b32.cont [11/16] 0.0, 128
    %755 = vxpose.xlu0.b32.cont [12/16] 0.0, 128
    %756 = vxpose.xlu0.b32.cont [13/16] 0.0, 128
    %757 = vxpose.xlu0.b32.cont [14/16] 0.0, 128
    %758 = vxpose.xlu0.b32.cont [15/16] 0.0, 128
    %759 = vxpose.xlu0.b32.end [16/16] 0.0, 128
    %v760 = vpop.trf.xlu0
    %v761 = vpop.trf.xlu0
    %v762 = vpop.trf.xlu0
    %v763 = vpop.trf.xlu0
    %v764 = vpop.trf.xlu0
    %v765 = vpop.trf.xlu0
    %v766 = vpop.trf.xlu0
    %v767 = vpop.trf.xlu0
    %v768 = vpop.trf.xlu0
    %v769 = vpop.trf.xlu0
    %v770 = vpop.trf.xlu0
    %v771 = vpop.trf.xlu0
    %v772 = vpop.trf.xlu0
    %v773 = vpop.trf.xlu0
    %v774 = vpop.trf.xlu0
    %v775 = vpop.trf.xlu0
    %vm776 = vcmask 64512
    %v778 = vsel %vm776, %v760, 0
    %v781 = vsel %vm776, %v761, 0
    %783 = vmatprep.subr.mxu0 0.0
    %784 = vmatpush1.msra.mxu0 %v464
    %785 = vmatprep.subr.mxu0 0.0
    %786 = vmatpush1.msra.mxu0 0.0
    %787 = vmatprep.subr.mxu0 0.0
    %788 = vmatpush1.msra.mxu0 0.0
    %789 = vmatprep.subr.mxu0 0.0
    %790 = vmatpush1.msra.mxu0 0.0
    %791 = vmatprep.subr.mxu0 0.0
    %792 = vmatpush1.msra.mxu0 0.0
    %793 = vmatprep.subr.mxu0 0.0
    %794 = vmatpush1.msra.mxu0 0.0
    %795 = vmatprep.subr.mxu0 0.0
    %796 = vmatpush1.msra.mxu0 0.0
    %797 = vmatprep.subr.mxu0 0.0
    %798 = vmatpush1.msra.mxu0 0.0
    %799 = vmatprep.subr.mxu0 0.0
    %800 = vmatpush1.msra.mxu0 0.0
    %801 = vmatprep.subr.mxu0 0.0
    %802 = vmatpush1.msra.mxu0 0.0
    %803 = vmatprep.subr.mxu0 0.0
    %804 = vmatpush1.msra.mxu0 0.0
    %805 = vmatprep.subr.mxu0 0.0
    %806 = vmatpush1.msra.mxu0 0.0
    %807 = vmatprep.subr.mxu0 0.0
    %808 = vmatpush1.msra.mxu0 0.0
    %809 = vmatprep.subr.mxu0 0.0
    %810 = vmatpush1.msra.mxu0 0.0
    %811 = vmatprep.subr.mxu0 0.0
    %812 = vmatpush1.msra.mxu0 0.0
    %813 = vmatprep.subr.mxu0 0.0
    %814 = vmatpush1.msra.mxu0 0.0
    %815 = vmatprep.subr.mxu0 0.0
    %816 = vmatpush1.msra.mxu0 0.0
    %817 = vmatprep.subr.mxu0 0.0
    %818 = vmatpush1.msra.mxu0 0.0
    %819 = vmatprep.subr.mxu0 0.0
    %820 = vmatpush1.msra.mxu0 0.0
    %821 = vmatprep.subr.mxu0 0.0
    %822 = vmatpush1.msra.mxu0 0.0
    %823 = vmatprep.subr.mxu0 0.0
    %824 = vmatpush1.msra.mxu0 0.0
    %825 = vmatprep.subr.mxu0 0.0
    %826 = vmatpush1.msra.mxu0 0.0
    %827 = vmatprep.subr.mxu0 0.0
    %828 = vmatpush1.msra.mxu0 0.0
    %829 = vmatprep.subr.mxu0 0.0
    %830 = vmatpush1.msra.mxu0 0.0
    %831 = vmatprep.subr.mxu0 0.0
    %832 = vmatpush1.msra.mxu0 0.0
    %833 = vmatprep.subr.mxu0 0.0
    %834 = vmatpush1.msra.mxu0 0.0
    %835 = vmatprep.subr.mxu0 0.0
    %836 = vmatpush1.msra.mxu0 0.0
    %837 = vmatprep.subr.mxu0 0.0
    %838 = vmatpush1.msra.mxu0 0.0
    %839 = vmatprep.subr.mxu0 0.0
    %840 = vmatpush1.msra.mxu0 0.0
    %841 = vmatprep.subr.mxu0 0.0
    %842 = vmatpush1.msra.mxu0 0.0
    %843 = vmatprep.subr.mxu0 0.0
    %844 = vmatpush1.msra.mxu0 0.0
    %845 = vmatprep.subr.mxu0 0.0
    %846 = vmatpush1.msra.mxu0 0.0
    %847 = vmatprep.mubr.f32.mxu0 0.0
    %848 = vmatmul.mubr.f32.gmra.mrb[0].mxu0 %v778
    %v849 = vpop.f32.mrb[0].mxu0
    %v850 = vadd.f32 0.0, %v849
    %v851 = vpop.f32.mrb[0].mxu0
    %852 = vmatprep.mubr.f32.mxu0 0.0
    %853 = vmatmul.mubr.f32.gmra.mrb[0].mxu0 %v781
    %v854 = vpop.f32.mrb[0].mxu0
    %v855 = vadd.f32 0.0, %v854
    %v856 = vpop.f32.mrb[0].mxu0
    %857 = vdwg.mxu0
    %858 = vxpose.xlu0.b32.start [1/16] %v739, 128
    %859 = vxpose.xlu0.b32.cont [2/16] 0.0, 128
    %860 = vxpose.xlu0.b32.cont [3/16] 0.0, 128
    %861 = vxpose.xlu0.b32.cont [4/16] 0.0, 128
    %862 = vxpose.xlu0.b32.cont [5/16] 0.0, 128
    %863 = vxpose.xlu0.b32.cont [6/16] 0.0, 128
    %864 = vxpose.xlu0.b32.cont [7/16] 0.0, 128
    %865 = vxpose.xlu0.b32.cont [8/16] 0.0, 128
    %866 = vxpose.xlu0.b32.cont [9/16] 0.0, 128
    %867 = vxpose.xlu0.b32.cont [10/16] 0.0, 128
    %868 = vxpose.xlu0.b32.cont [11/16] 0.0, 128
    %869 = vxpose.xlu0.b32.cont [12/16] 0.0, 128
    %870 = vxpose.xlu0.b32.cont [13/16] 0.0, 128
    %871 = vxpose.xlu0.b32.cont [14/16] 0.0, 128
    %872 = vxpose.xlu0.b32.cont [15/16] 0.0, 128
    %873 = vxpose.xlu0.b32.end [16/16] 0.0, 128
    %v874 = vpop.trf.xlu0
    %v875 = vpop.trf.xlu0
    %v876 = vpop.trf.xlu0
    %v877 = vpop.trf.xlu0
    %v878 = vpop.trf.xlu0
    %v879 = vpop.trf.xlu0
    %v880 = vpop.trf.xlu0
    %v881 = vpop.trf.xlu0
    %v882 = vpop.trf.xlu0
    %v883 = vpop.trf.xlu0
    %v884 = vpop.trf.xlu0
    %v885 = vpop.trf.xlu0
    %v886 = vpop.trf.xlu0
    %v887 = vpop.trf.xlu0
    %v888 = vpop.trf.xlu0
    %v889 = vpop.trf.xlu0
    %v891 = vsel %vm776, %v874, 0
    %v894 = vsel %vm776, %v875, 0
    %896 = vmatprep.subr.mxu0 0.0
    %897 = vmatpush1.msra.mxu0 %v468
    %898 = vmatprep.subr.mxu0 0.0
    %899 = vmatpush1.msra.mxu0 0.0
    %900 = vmatprep.subr.mxu0 0.0
    %901 = vmatpush1.msra.mxu0 0.0
    %902 = vmatprep.subr.mxu0 0.0
    %903 = vmatpush1.msra.mxu0 0.0
    %904 = vmatprep.subr.mxu0 0.0
    %905 = vmatpush1.msra.mxu0 0.0
    %906 = vmatprep.subr.mxu0 0.0
    %907 = vmatpush1.msra.mxu0 0.0
    %908 = vmatprep.subr.mxu0 0.0
    %909 = vmatpush1.msra.mxu0 0.0
    %910 = vmatprep.subr.mxu0 0.0
    %911 = vmatpush1.msra.mxu0 0.0
    %912 = vmatprep.subr.mxu0 0.0
    %913 = vmatpush1.msra.mxu0 0.0
    %914 = vmatprep.subr.mxu0 0.0
    %915 = vmatpush1.msra.mxu0 0.0
    %916 = vmatprep.subr.mxu0 0.0
    %917 = vmatpush1.msra.mxu0 0.0
    %918 = vmatprep.subr.mxu0 0.0
    %919 = vmatpush1.msra.mxu0 0.0
    %920 = vmatprep.subr.mxu0 0.0
    %921 = vmatpush1.msra.mxu0 0.0
    %922 = vmatprep.subr.mxu0 0.0
    %923 = vmatpush1.msra.mxu0 0.0
    %924 = vmatprep.subr.mxu0 0.0
    %925 = vmatpush1.msra.mxu0 0.0
    %926 = vmatprep.subr.mxu0 0.0
    %927 = vmatpush1.msra.mxu0 0.0
    %928 = vmatprep.subr.mxu0 0.0
    %929 = vmatpush1.msra.mxu0 0.0
    %930 = vmatprep.subr.mxu0 0.0
    %931 = vmatpush1.msra.mxu0 0.0
    %932 = vmatprep.subr.mxu0 0.0
    %933 = vmatpush1.msra.mxu0 0.0
    %934 = vmatprep.subr.mxu0 0.0
    %935 = vmatpush1.msra.mxu0 0.0
    %936 = vmatprep.subr.mxu0 0.0
    %937 = vmatpush1.msra.mxu0 0.0
    %938 = vmatprep.subr.mxu0 0.0
    %939 = vmatpush1.msra.mxu0 0.0
    %940 = vmatprep.subr.mxu0 0.0
    %941 = vmatpush1.msra.mxu0 0.0
    %942 = vmatprep.subr.mxu0 0.0
    %943 = vmatpush1.msra.mxu0 0.0
    %944 = vmatprep.subr.mxu0 0.0
    %945 = vmatpush1.msra.mxu0 0.0
    %946 = vmatprep.subr.mxu0 0.0
    %947 = vmatpush1.msra.mxu0 0.0
    %948 = vmatprep.subr.mxu0 0.0
    %949 = vmatpush1.msra.mxu0 0.0
    %950 = vmatprep.subr.mxu0 0.0
    %951 = vmatpush1.msra.mxu0 0.0
    %952 = vmatprep.subr.mxu0 0.0
    %953 = vmatpush1.msra.mxu0 0.0
    %954 = vmatprep.subr.mxu0 0.0
    %955 = vmatpush1.msra.mxu0 0.0
    %956 = vmatprep.subr.mxu0 0.0
    %957 = vmatpush1.msra.mxu0 0.0
    %958 = vmatprep.subr.mxu0 0.0
    %959 = vmatpush1.msra.mxu0 0.0
    %960 = vmatprep.mubr.f32.mxu0 0.0
    %961 = vmatmul.mubr.f32.gmra.mrb[0].mxu0 %v891
    %v962 = vpop.f32.mrb[0].mxu0
    %v963 = vadd.f32 0.0, %v962
    %v964 = vpop.f32.mrb[0].mxu0
    %965 = vmatprep.mubr.f32.mxu0 0.0
    %966 = vmatmul.mubr.f32.gmra.mrb[0].mxu0 %v894
    %v967 = vpop.f32.mrb[0].mxu0
    %v968 = vadd.f32 0.0, %v967
    %v969 = vpop.f32.mrb[0].mxu0
    %970 = vdwg.mxu0
    %971 = vxpose.xlu0.b32.start [1/16] %v740, 128
    %972 = vxpose.xlu0.b32.cont [2/16] 0.0, 128
    %973 = vxpose.xlu0.b32.cont [3/16] 0.0, 128
    %974 = vxpose.xlu0.b32.cont [4/16] 0.0, 128
    %975 = vxpose.xlu0.b32.cont [5/16] 0.0, 128
    %976 = vxpose.xlu0.b32.cont [6/16] 0.0, 128
    %977 = vxpose.xlu0.b32.cont [7/16] 0.0, 128
    %978 = vxpose.xlu0.b32.cont [8/16] 0.0, 128
    %979 = vxpose.xlu0.b32.cont [9/16] 0.0, 128
    %980 = vxpose.xlu0.b32.cont [10/16] 0.0, 128
    %981 = vxpose.xlu0.b32.cont [11/16] 0.0, 128
    %982 = vxpose.xlu0.b32.cont [12/16] 0.0, 128
    %983 = vxpose.xlu0.b32.cont [13/16] 0.0, 128
    %984 = vxpose.xlu0.b32.cont [14/16] 0.0, 128
    %985 = vxpose.xlu0.b32.cont [15/16] 0.0, 128
    %986 = vxpose.xlu0.b32.end [16/16] 0.0, 128
    %v987 = vpop.trf.xlu0
    %v988 = vpop.trf.xlu0
    %v989 = vpop.trf.xlu0
    %v990 = vpop.trf.xlu0
    %v991 = vpop.trf.xlu0
    %v992 = vpop.trf.xlu0
    %v993 = vpop.trf.xlu0
    %v994 = vpop.trf.xlu0
    %v995 = vpop.trf.xlu0
    %v996 = vpop.trf.xlu0
    %v997 = vpop.trf.xlu0
    %v998 = vpop.trf.xlu0
    %v999 = vpop.trf.xlu0
    %v1000 = vpop.trf.xlu0
    %v1001 = vpop.trf.xlu0
    %v1002 = vpop.trf.xlu0
    %v1004 = vsel %vm776, %v987, 0
    %v1007 = vsel %vm776, %v988, 0
    %1009 = vmatprep.subr.mxu0 0.0
    %1010 = vmatpush1.msra.mxu0 %v474
    %1011 = vmatprep.subr.mxu0 0.0
    %1012 = vmatpush1.msra.mxu0 0.0
    %1013 = vmatprep.subr.mxu0 0.0
    %1014 = vmatpush1.msra.mxu0 0.0
    %1015 = vmatprep.subr.mxu0 0.0
    %1016 = vmatpush1.msra.mxu0 0.0
    %1017 = vmatprep.subr.mxu0 0.0
    %1018 = vmatpush1.msra.mxu0 0.0
    %1019 = vmatprep.subr.mxu0 0.0
    %1020 = vmatpush1.msra.mxu0 0.0
    %1021 = vmatprep.subr.mxu0 0.0
    %1022 = vmatpush1.msra.mxu0 0.0
    %1023 = vmatprep.subr.mxu0 0.0
    %1024 = vmatpush1.msra.mxu0 0.0
    %1025 = vmatprep.subr.mxu0 0.0
    %1026 = vmatpush1.msra.mxu0 0.0
    %1027 = vmatprep.subr.mxu0 0.0
    %1028 = vmatpush1.msra.mxu0 0.0
    %1029 = vmatprep.subr.mxu0 0.0
    %1030 = vmatpush1.msra.mxu0 0.0
    %1031 = vmatprep.subr.mxu0 0.0
    %1032 = vmatpush1.msra.mxu0 0.0
    %1033 = vmatprep.subr.mxu0 0.0
    %1034 = vmatpush1.msra.mxu0 0.0
    %1035 = vmatprep.subr.mxu0 0.0
    %1036 = vmatpush1.msra.mxu0 0.0
    %1037 = vmatprep.subr.mxu0 0.0
    %1038 = vmatpush1.msra.mxu0 0.0
    %1039 = vmatprep.subr.mxu0 0.0
    %1040 = vmatpush1.msra.mxu0 0.0
    %1041 = vmatprep.subr.mxu0 0.0
    %1042 = vmatpush1.msra.mxu0 0.0
    %1043 = vmatprep.subr.mxu0 0.0
    %1044 = vmatpush1.msra.mxu0 0.0
    %1045 = vmatprep.subr.mxu0 0.0
    %1046 = vmatpush1.msra.mxu0 0.0
    %1047 = vmatprep.subr.mxu0 0.0
    %1048 = vmatpush1.msra.mxu0 0.0
    %1049 = vmatprep.subr.mxu0 0.0
    %1050 = vmatpush1.msra.mxu0 0.0
    %1051 = vmatprep.subr.mxu0 0.0
    %1052 = vmatpush1.msra.mxu0 0.0
    %1053 = vmatprep.subr.mxu0 0.0
    %1054 = vmatpush1.msra.mxu0 0.0
    %1055 = vmatprep.subr.mxu0 0.0
    %1056 = vmatpush1.msra.mxu0 0.0
    %1057 = vmatprep.subr.mxu0 0.0
    %1058 = vmatpush1.msra.mxu0 0.0
    %1059 = vmatprep.subr.mxu0 0.0
    %1060 = vmatpush1.msra.mxu0 0.0
    %1061 = vmatprep.subr.mxu0 0.0
    %1062 = vmatpush1.msra.mxu0 0.0
    %1063 = vmatprep.subr.mxu0 0.0
    %1064 = vmatpush1.msra.mxu0 0.0
    %1065 = vmatprep.subr.mxu0 0.0
    %1066 = vmatpush1.msra.mxu0 0.0
    %1067 = vmatprep.subr.mxu0 0.0
    %1068 = vmatpush1.msra.mxu0 0.0
    %1069 = vmatprep.subr.mxu0 0.0
    %1070 = vmatpush1.msra.mxu0 0.0
    %1071 = vmatprep.subr.mxu0 0.0
    %1072 = vmatpush1.msra.mxu0 0.0
    %1073 = vmatprep.mubr.f32.mxu0 0.0
    %1074 = vmatmul.mubr.f32.gmra.mrb[0].mxu0 %v1004
    %v1075 = vpop.f32.mrb[0].mxu0
    %v1076 = vadd.f32 0.0, %v1075
    %v1077 = vpop.f32.mrb[0].mxu0
    %1078 = vmatprep.mubr.f32.mxu0 0.0
    %1079 = vmatmul.mubr.f32.gmra.mrb[0].mxu0 %v1007
    %v1080 = vpop.f32.mrb[0].mxu0
    %v1081 = vadd.f32 0.0, %v1080
    %v1082 = vpop.f32.mrb[0].mxu0
    %1083 = vdwg.mxu0
    %1084 = vxpose.xlu0.b32.start [1/16] %v741, 128
    %1085 = vxpose.xlu0.b32.cont [2/16] 0.0, 128
    %1086 = vxpose.xlu0.b32.cont [3/16] 0.0, 128
    %1087 = vxpose.xlu0.b32.cont [4/16] 0.0, 128
    %1088 = vxpose.xlu0.b32.cont [5/16] 0.0, 128
    %1089 = vxpose.xlu0.b32.cont [6/16] 0.0, 128
    %1090 = vxpose.xlu0.b32.cont [7/16] 0.0, 128
    %1091 = vxpose.xlu0.b32.cont [8/16] 0.0, 128
    %1092 = vxpose.xlu0.b32.cont [9/16] 0.0, 128
    %1093 = vxpose.xlu0.b32.cont [10/16] 0.0, 128
    %1094 = vxpose.xlu0.b32.cont [11/16] 0.0, 128
    %1095 = vxpose.xlu0.b32.cont [12/16] 0.0, 128
    %1096 = vxpose.xlu0.b32.cont [13/16] 0.0, 128
    %1097 = vxpose.xlu0.b32.cont [14/16] 0.0, 128
    %1098 = vxpose.xlu0.b32.cont [15/16] 0.0, 128
    %1099 = vxpose.xlu0.b32.end [16/16] 0.0, 128
    %v1100 = vpop.trf.xlu0
    %v1101 = vpop.trf.xlu0
    %v1102 = vpop.trf.xlu0
    %v1103 = vpop.trf.xlu0
    %v1104 = vpop.trf.xlu0
    %v1105 = vpop.trf.xlu0
    %v1106 = vpop.trf.xlu0
    %v1107 = vpop.trf.xlu0
    %v1108 = vpop.trf.xlu0
    %v1109 = vpop.trf.xlu0
    %v1110 = vpop.trf.xlu0
    %v1111 = vpop.trf.xlu0
    %v1112 = vpop.trf.xlu0
    %v1113 = vpop.trf.xlu0
    %v1114 = vpop.trf.xlu0
    %v1115 = vpop.trf.xlu0
    %v1117 = vsel %vm776, %v1100, 0
    %v1120 = vsel %vm776, %v1101, 0
    %1122 = vmatprep.subr.mxu0 0.0
    %1123 = vmatpush1.msra.mxu0 %v478
    %1124 = vmatprep.subr.mxu0 0.0
    %1125 = vmatpush1.msra.mxu0 0.0
    %1126 = vmatprep.subr.mxu0 0.0
    %1127 = vmatpush1.msra.mxu0 0.0
    %1128 = vmatprep.subr.mxu0 0.0
    %1129 = vmatpush1.msra.mxu0 0.0
    %1130 = vmatprep.subr.mxu0 0.0
    %1131 = vmatpush1.msra.mxu0 0.0
    %1132 = vmatprep.subr.mxu0 0.0
    %1133 = vmatpush1.msra.mxu0 0.0
    %1134 = vmatprep.subr.mxu0 0.0
    %1135 = vmatpush1.msra.mxu0 0.0
    %1136 = vmatprep.subr.mxu0 0.0
    %1137 = vmatpush1.msra.mxu0 0.0
    %1138 = vmatprep.subr.mxu0 0.0
    %1139 = vmatpush1.msra.mxu0 0.0
    %1140 = vmatprep.subr.mxu0 0.0
    %1141 = vmatpush1.msra.mxu0 0.0
    %1142 = vmatprep.subr.mxu0 0.0
    %1143 = vmatpush1.msra.mxu0 0.0
    %1144 = vmatprep.subr.mxu0 0.0
    %1145 = vmatpush1.msra.mxu0 0.0
    %1146 = vmatprep.subr.mxu0 0.0
    %1147 = vmatpush1.msra.mxu0 0.0
    %1148 = vmatprep.subr.mxu0 0.0
    %1149 = vmatpush1.msra.mxu0 0.0
    %1150 = vmatprep.subr.mxu0 0.0
    %1151 = vmatpush1.msra.mxu0 0.0
    %1152 = vmatprep.subr.mxu0 0.0
    %1153 = vmatpush1.msra.mxu0 0.0
    %1154 = vmatprep.subr.mxu0 0.0
    %1155 = vmatpush1.msra.mxu0 0.0
    %1156 = vmatprep.subr.mxu0 0.0
    %1157 = vmatpush1.msra.mxu0 0.0
    %1158 = vmatprep.subr.mxu0 0.0
    %1159 = vmatpush1.msra.mxu0 0.0
    %1160 = vmatprep.subr.mxu0 0.0
    %1161 = vmatpush1.msra.mxu0 0.0
    %1162 = vmatprep.subr.mxu0 0.0
    %1163 = vmatpush1.msra.mxu0 0.0
    %1164 = vmatprep.subr.mxu0 0.0
    %1165 = vmatpush1.msra.mxu0 0.0
    %1166 = vmatprep.subr.mxu0 0.0
    %1167 = vmatpush1.msra.mxu0 0.0
    %1168 = vmatprep.subr.mxu0 0.0
    %1169 = vmatpush1.msra.mxu0 0.0
    %1170 = vmatprep.subr.mxu0 0.0
    %1171 = vmatpush1.msra.mxu0 0.0
    %1172 = vmatprep.subr.mxu0 0.0
    %1173 = vmatpush1.msra.mxu0 0.0
    %1174 = vmatprep.subr.mxu0 0.0
    %1175 = vmatpush1.msra.mxu0 0.0
    %1176 = vmatprep.subr.mxu0 0.0
    %1177 = vmatpush1.msra.mxu0 0.0
    %1178 = vmatprep.subr.mxu0 0.0
    %1179 = vmatpush1.msra.mxu0 0.0
    %1180 = vmatprep.subr.mxu0 0.0
    %1181 = vmatpush1.msra.mxu0 0.0
    %1182 = vmatprep.subr.mxu0 0.0
    %1183 = vmatpush1.msra.mxu0 0.0
    %1184 = vmatprep.subr.mxu0 0.0
    %1185 = vmatpush1.msra.mxu0 0.0
    %1186 = vmatprep.mubr.f32.mxu0 0.0
    %1187 = vmatmul.mubr.f32.gmra.mrb[0].mxu0 %v1117
    %v1188 = vpop.f32.mrb[0].mxu0
    %v1189 = vadd.f32 0.0, %v1188
    %v1190 = vpop.f32.mrb[0].mxu0
    %1191 = vmatprep.mubr.f32.mxu0 0.0
    %1192 = vmatmul.mubr.f32.gmra.mrb[0].mxu0 %v1120
    %v1193 = vpop.f32.mrb[0].mxu0
    %v1194 = vadd.f32 0.0, %v1193
    %v1195 = vpop.f32.mrb[0].mxu0
    %1196 = vdwg.mxu0
    %1197 = vxpose.xlu0.b32.start [1/16] %v742, 128
    %1198 = vxpose.xlu0.b32.cont [2/16] 0.0, 128
    %1199 = vxpose.xlu0.b32.cont [3/16] 0.0, 128
    %1200 = vxpose.xlu0.b32.cont [4/16] 0.0, 128
    %1201 = vxpose.xlu0.b32.cont [5/16] 0.0, 128
    %1202 = vxpose.xlu0.b32.cont [6/16] 0.0, 128
    %1203 = vxpose.xlu0.b32.cont [7/16] 0.0, 128
    %1204 = vxpose.xlu0.b32.cont [8/16] 0.0, 128
    %1205 = vxpose.xlu0.b32.cont [9/16] 0.0, 128
    %1206 = vxpose.xlu0.b32.cont [10/16] 0.0, 128
    %1207 = vxpose.xlu0.b32.cont [11/16] 0.0, 128
    %1208 = vxpose.xlu0.b32.cont [12/16] 0.0, 128
    %1209 = vxpose.xlu0.b32.cont [13/16] 0.0, 128
    %1210 = vxpose.xlu0.b32.cont [14/16] 0.0, 128
    %1211 = vxpose.xlu0.b32.cont [15/16] 0.0, 128
    %1212 = vxpose.xlu0.b32.end [16/16] 0.0, 128
    %v1213 = vpop.trf.xlu0
    %v1214 = vpop.trf.xlu0
    %v1215 = vpop.trf.xlu0
    %v1216 = vpop.trf.xlu0
    %v1217 = vpop.trf.xlu0
    %v1218 = vpop.trf.xlu0
    %v1219 = vpop.trf.xlu0
    %v1220 = vpop.trf.xlu0
    %v1221 = vpop.trf.xlu0
    %v1222 = vpop.trf.xlu0
    %v1223 = vpop.trf.xlu0
    %v1224 = vpop.trf.xlu0
    %v1225 = vpop.trf.xlu0
    %v1226 = vpop.trf.xlu0
    %v1227 = vpop.trf.xlu0
    %v1228 = vpop.trf.xlu0
    %v1230 = vsel %vm776, %v1213, 0
    %v1233 = vsel %vm776, %v1214, 0
    %1235 = vmatprep.subr.mxu0 0.0
    %1236 = vmatpush1.msra.mxu0 %v484
    %1237 = vmatprep.subr.mxu0 0.0
    %1238 = vmatpush1.msra.mxu0 0.0
    %1239 = vmatprep.subr.mxu0 0.0
    %1240 = vmatpush1.msra.mxu0 0.0
    %1241 = vmatprep.subr.mxu0 0.0
    %1242 = vmatpush1.msra.mxu0 0.0
    %1243 = vmatprep.subr.mxu0 0.0
    %1244 = vmatpush1.msra.mxu0 0.0
    %1245 = vmatprep.subr.mxu0 0.0
    %1246 = vmatpush1.msra.mxu0 0.0
    %1247 = vmatprep.subr.mxu0 0.0
    %1248 = vmatpush1.msra.mxu0 0.0
    %1249 = vmatprep.subr.mxu0 0.0
    %1250 = vmatpush1.msra.mxu0 0.0
    %1251 = vmatprep.subr.mxu0 0.0
    %1252 = vmatpush1.msra.mxu0 0.0
    %1253 = vmatprep.subr.mxu0 0.0
    %1254 = vmatpush1.msra.mxu0 0.0
    %1255 = vmatprep.subr.mxu0 0.0
    %1256 = vmatpush1.msra.mxu0 0.0
    %1257 = vmatprep.subr.mxu0 0.0
    %1258 = vmatpush1.msra.mxu0 0.0
    %1259 = vmatprep.subr.mxu0 0.0
    %1260 = vmatpush1.msra.mxu0 0.0
    %1261 = vmatprep.subr.mxu0 0.0
    %1262 = vmatpush1.msra.mxu0 0.0
    %1263 = vmatprep.subr.mxu0 0.0
    %1264 = vmatpush1.msra.mxu0 0.0
    %1265 = vmatprep.subr.mxu0 0.0
    %1266 = vmatpush1.msra.mxu0 0.0
    %1267 = vmatprep.subr.mxu0 0.0
    %1268 = vmatpush1.msra.mxu0 0.0
    %1269 = vmatprep.subr.mxu0 0.0
    %1270 = vmatpush1.msra.mxu0 0.0
    %1271 = vmatprep.subr.mxu0 0.0
    %1272 = vmatpush1.msra.mxu0 0.0
    %1273 = vmatprep.subr.mxu0 0.0
    %1274 = vmatpush1.msra.mxu0 0.0
    %1275 = vmatprep.subr.mxu0 0.0
    %1276 = vmatpush1.msra.mxu0 0.0
    %1277 = vmatprep.subr.mxu0 0.0
    %1278 = vmatpush1.msra.mxu0 0.0
    %1279 = vmatprep.subr.mxu0 0.0
    %1280 = vmatpush1.msra.mxu0 0.0
    %1281 = vmatprep.subr.mxu0 0.0
    %1282 = vmatpush1.msra.mxu0 0.0
    %1283 = vmatprep.subr.mxu0 0.0
    %1284 = vmatpush1.msra.mxu0 0.0
    %1285 = vmatprep.subr.mxu0 0.0
    %1286 = vmatpush1.msra.mxu0 0.0
    %1287 = vmatprep.subr.mxu0 0.0
    %1288 = vmatpush1.msra.mxu0 0.0
    %1289 = vmatprep.subr.mxu0 0.0
    %1290 = vmatpush1.msra.mxu0 0.0
    %1291 = vmatprep.subr.mxu0 0.0
    %1292 = vmatpush1.msra.mxu0 0.0
    %1293 = vmatprep.subr.mxu0 0.0
    %1294 = vmatpush1.msra.mxu0 0.0
    %1295 = vmatprep.subr.mxu0 0.0
    %1296 = vmatpush1.msra.mxu0 0.0
    %1297 = vmatprep.subr.mxu0 0.0
    %1298 = vmatpush1.msra.mxu0 0.0
    %1299 = vmatprep.mubr.f32.mxu0 0.0
    %1300 = vmatmul.mubr.f32.gmra.mrb[0].mxu0 %v1230
    %v1301 = vpop.f32.mrb[0].mxu0
    %v1302 = vadd.f32 0.0, %v1301
    %v1303 = vpop.f32.mrb[0].mxu0
    %1304 = vmatprep.mubr.f32.mxu0 0.0
    %1305 = vmatmul.mubr.f32.gmra.mrb[0].mxu0 %v1233
    %v1306 = vpop.f32.mrb[0].mxu0
    %v1307 = vadd.f32 0.0, %v1306
    %v1308 = vpop.f32.mrb[0].mxu0
    %1309 = vdwg.mxu0
    %1310 = vxpose.xlu0.b32.start [1/16] %v743, 128
    %1311 = vxpose.xlu0.b32.cont [2/16] 0.0, 128
    %1312 = vxpose.xlu0.b32.cont [3/16] 0.0, 128
    %1313 = vxpose.xlu0.b32.cont [4/16] 0.0, 128
    %1314 = vxpose.xlu0.b32.cont [5/16] 0.0, 128
    %1315 = vxpose.xlu0.b32.cont [6/16] 0.0, 128
    %1316 = vxpose.xlu0.b32.cont [7/16] 0.0, 128
    %1317 = vxpose.xlu0.b32.cont [8/16] 0.0, 128
    %1318 = vxpose.xlu0.b32.cont [9/16] 0.0, 128
    %1319 = vxpose.xlu0.b32.cont [10/16] 0.0, 128
    %1320 = vxpose.xlu0.b32.cont [11/16] 0.0, 128
    %1321 = vxpose.xlu0.b32.cont [12/16] 0.0, 128
    %1322 = vxpose.xlu0.b32.cont [13/16] 0.0, 128
    %1323 = vxpose.xlu0.b32.cont [14/16] 0.0, 128
    %1324 = vxpose.xlu0.b32.cont [15/16] 0.0, 128
    %1325 = vxpose.xlu0.b32.end [16/16] 0.0, 128
    %v1326 = vpop.trf.xlu0
    %v1327 = vpop.trf.xlu0
    %v1328 = vpop.trf.xlu0
    %v1329 = vpop.trf.xlu0
    %v1330 = vpop.trf.xlu0
    %v1331 = vpop.trf.xlu0
    %v1332 = vpop.trf.xlu0
    %v1333 = vpop.trf.xlu0
    %v1334 = vpop.trf.xlu0
    %v1335 = vpop.trf.xlu0
    %v1336 = vpop.trf.xlu0
    %v1337 = vpop.trf.xlu0
    %v1338 = vpop.trf.xlu0
    %v1339 = vpop.trf.xlu0
    %v1340 = vpop.trf.xlu0
    %v1341 = vpop.trf.xlu0
    %v1343 = vsel %vm776, %v1326, 0
    %v1346 = vsel %vm776, %v1327, 0
    %1348 = vmatprep.subr.mxu0 0.0
    %1349 = vmatpush1.msra.mxu0 %v488
    %1350 = vmatprep.subr.mxu0 0.0
    %1351 = vmatpush1.msra.mxu0 0.0
    %1352 = vmatprep.subr.mxu0 0.0
    %1353 = vmatpush1.msra.mxu0 0.0
    %1354 = vmatprep.subr.mxu0 0.0
    %1355 = vmatpush1.msra.mxu0 0.0
    %1356 = vmatprep.subr.mxu0 0.0
    %1357 = vmatpush1.msra.mxu0 0.0
    %1358 = vmatprep.subr.mxu0 0.0
    %1359 = vmatpush1.msra.mxu0 0.0
    %1360 = vmatprep.subr.mxu0 0.0
    %1361 = vmatpush1.msra.mxu0 0.0
    %1362 = vmatprep.subr.mxu0 0.0
    %1363 = vmatpush1.msra.mxu0 0.0
    %1364 = vmatprep.subr.mxu0 0.0
    %1365 = vmatpush1.msra.mxu0 0.0
    %1366 = vmatprep.subr.mxu0 0.0
    %1367 = vmatpush1.msra.mxu0 0.0
    %1368 = vmatprep.subr.mxu0 0.0
    %1369 = vmatpush1.msra.mxu0 0.0
    %1370 = vmatprep.subr.mxu0 0.0
    %1371 = vmatpush1.msra.mxu0 0.0
    %1372 = vmatprep.subr.mxu0 0.0
    %1373 = vmatpush1.msra.mxu0 0.0
    %1374 = vmatprep.subr.mxu0 0.0
    %1375 = vmatpush1.msra.mxu0 0.0
    %1376 = vmatprep.subr.mxu0 0.0
    %1377 = vmatpush1.msra.mxu0 0.0
    %1378 = vmatprep.subr.mxu0 0.0
    %1379 = vmatpush1.msra.mxu0 0.0
    %1380 = vmatprep.subr.mxu0 0.0
    %1381 = vmatpush1.msra.mxu0 0.0
    %1382 = vmatprep.subr.mxu0 0.0
    %1383 = vmatpush1.msra.mxu0 0.0
    %1384 = vmatprep.subr.mxu0 0.0
    %1385 = vmatpush1.msra.mxu0 0.0
    %1386 = vmatprep.subr.mxu0 0.0
    %1387 = vmatpush1.msra.mxu0 0.0
    %1388 = vmatprep.subr.mxu0 0.0
    %1389 = vmatpush1.msra.mxu0 0.0
    %1390 = vmatprep.subr.mxu0 0.0
    %1391 = vmatpush1.msra.mxu0 0.0
    %1392 = vmatprep.subr.mxu0 0.0
    %1393 = vmatpush1.msra.mxu0 0.0
    %1394 = vmatprep.subr.mxu0 0.0
    %1395 = vmatpush1.msra.mxu0 0.0
    %1396 = vmatprep.subr.mxu0 0.0
    %1397 = vmatpush1.msra.mxu0 0.0
    %1398 = vmatprep.subr.mxu0 0.0
    %1399 = vmatpush1.msra.mxu0 0.0
    %1400 = vmatprep.subr.mxu0 0.0
    %1401 = vmatpush1.msra.mxu0 0.0
    %1402 = vmatprep.subr.mxu0 0.0
    %1403 = vmatpush1.msra.mxu0 0.0
    %1404 = vmatprep.subr.mxu0 0.0
    %1405 = vmatpush1.msra.mxu0 0.0
    %1406 = vmatprep.subr.mxu0 0.0
    %1407 = vmatpush1.msra.mxu0 0.0
    %1408 = vmatprep.subr.mxu0 0.0
    %1409 = vmatpush1.msra.mxu0 0.0
    %1410 = vmatprep.subr.mxu0 0.0
    %1411 = vmatpush1.msra.mxu0 0.0
    %1412 = vmatprep.mubr.f32.mxu0 0.0
    %1413 = vmatmul.mubr.f32.gmra.mrb[0].mxu0 %v1343
    %v1414 = vpop.f32.mrb[0].mxu0
    %v1415 = vadd.f32 0.0, %v1414
    %v1416 = vpop.f32.mrb[0].mxu0
    %1417 = vmatprep.mubr.f32.mxu0 0.0
    %1418 = vmatmul.mubr.f32.gmra.mrb[0].mxu0 %v1346
    %v1419 = vpop.f32.mrb[0].mxu0
    %v1420 = vadd.f32 0.0, %v1419
    %v1421 = vpop.f32.mrb[0].mxu0
    %1422 = vdwg.mxu0
    %v1423 = vld [vmem:[#allocation7 + $0xc] sm:$0xff]
    %v1424 = vld [vmem:[#allocation7 + $0x14] sm:$0xf]
    %v1425 = vmul.f32 %v850, %v1423
    %v1426 = vmul.f32 %v855, %v1424
    %v1427 = vmul.f32 %v963, %v1423
    %v1428 = vmul.f32 %v968, %v1424
    %v1429 = vmul.f32 %v1076, %v1423
    %v1430 = vmul.f32 %v1081, %v1424
    %v1431 = vmul.f32 %v1189, %v1423
    %v1432 = vmul.f32 %v1194, %v1424
    %v1433 = vmul.f32 %v1302, %v1423
    %v1434 = vmul.f32 %v1307, %v1424
    %v1435 = vmul.f32 %v1415, %v1423
    %v1436 = vmul.f32 %v1420, %v1424
    %v1443 = vcombine.high %v1425, %v1425
    %v1444 = vcombine.high %v1427, %v1427
    %v1445 = vcombine.high %v1429, %v1429
    %v1446 = vcombine.high %v1431, %v1431
    %v1447 = vcombine.high %v1433, %v1433
    %v1448 = vcombine.high %v1435, %v1435
    %vm1455 = vcmask 1043456
    %v1456 = vsel %vm1455, %v1425, 0.0
    %v1457 = vrot.slane %v1456, 4
    %v1458 = vadd.f32 %v1456, %v1457
    %v1459 = vrot.slane %v1458, 2
    %v1460 = vadd.f32 %v1458, %v1459
    %v1461 = vrot.slane %v1460, 1
    %v1462 = vadd.f32 %v1460, %v1461
    %v1463 = vsel %vm1455, %v1443, 0.0
    %v1464 = vrot.slane %v1463, 4
    %v1465 = vadd.f32 %v1463, %v1464
    %v1466 = vrot.slane %v1465, 2
    %v1467 = vadd.f32 %v1465, %v1466
    %v1468 = vrot.slane %v1467, 1
    %v1469 = vadd.f32 %v1467, %v1468
    %v1470 = vsel %vm1455, %v1426, 0.0
    %v1471 = vrot.slane %v1470, 4
    %v1472 = vadd.f32 %v1470, %v1471
    %v1473 = vrot.slane %v1472, 2
    %v1474 = vadd.f32 %v1472, %v1473
    %v1475 = vrot.slane %v1474, 1
    %v1476 = vadd.f32 %v1474, %v1475
    %v1477 = vsel %vm1455, %v1427, 0.0
    %v1478 = vrot.slane %v1477, 4
    %v1479 = vadd.f32 %v1477, %v1478
    %v1480 = vrot.slane %v1479, 2
    %v1481 = vadd.f32 %v1479, %v1480
    %v1482 = vrot.slane %v1481, 1
    %v1483 = vadd.f32 %v1481, %v1482
    %v1484 = vsel %vm1455, %v1444, 0.0
    %v1485 = vrot.slane %v1484, 4
    %v1486 = vadd.f32 %v1484, %v1485
    %v1487 = vrot.slane %v1486, 2
    %v1488 = vadd.f32 %v1486, %v1487
    %v1489 = vrot.slane %v1488, 1
    %v1490 = vadd.f32 %v1488, %v1489
    %v1491 = vsel %vm1455, %v1428, 0.0
    %v1492 = vrot.slane %v1491, 4
    %v1493 = vadd.f32 %v1491, %v1492
    %v1494 = vrot.slane %v1493, 2
    %v1495 = vadd.f32 %v1493, %v1494
    %v1496 = vrot.slane %v1495, 1
    %v1497 = vadd.f32 %v1495, %v1496
    %v1498 = vsel %vm1455, %v1429, 0.0
    %v1499 = vrot.slane %v1498, 4
    %v1500 = vadd.f32 %v1498, %v1499
    %v1501 = vrot.slane %v1500, 2
    %v1502 = vadd.f32 %v1500, %v1501
    %v1503 = vrot.slane %v1502, 1
    %v1504 = vadd.f32 %v1502, %v1503
    %v1505 = vsel %vm1455, %v1445, 0.0
    %v1506 = vrot.slane %v1505, 4
    %v1507 = vadd.f32 %v1505, %v1506
    %v1508 = vrot.slane %v1507, 2
    %v1509 = vadd.f32 %v1507, %v1508
    %v1510 = vrot.slane %v1509, 1
    %v1511 = vadd.f32 %v1509, %v1510
    %v1512 = vsel %vm1455, %v1430, 0.0
    %v1513 = vrot.slane %v1512, 4
    %v1514 = vadd.f32 %v1512, %v1513
    %v1515 = vrot.slane %v1514, 2
    %v1516 = vadd.f32 %v1514, %v1515
    %v1517 = vrot.slane %v1516, 1
    %v1518 = vadd.f32 %v1516, %v1517
    %v1519 = vsel %vm1455, %v1431, 0.0
    %v1520 = vrot.slane %v1519, 4
    %v1521 = vadd.f32 %v1519, %v1520
    %v1522 = vrot.slane %v1521, 2
    %v1523 = vadd.f32 %v1521, %v1522
    %v1524 = vrot.slane %v1523, 1
    %v1525 = vadd.f32 %v1523, %v1524
    %v1526 = vsel %vm1455, %v1446, 0.0
    %v1527 = vrot.slane %v1526, 4
    %v1528 = vadd.f32 %v1526, %v1527
    %v1529 = vrot.slane %v1528, 2
    %v1530 = vadd.f32 %v1528, %v1529
    %v1531 = vrot.slane %v1530, 1
    %v1532 = vadd.f32 %v1530, %v1531
    %v1533 = vsel %vm1455, %v1432, 0.0
    %v1534 = vrot.slane %v1533, 4
    %v1535 = vadd.f32 %v1533, %v1534
    %v1536 = vrot.slane %v1535, 2
    %v1537 = vadd.f32 %v1535, %v1536
    %v1538 = vrot.slane %v1537, 1
    %v1539 = vadd.f32 %v1537, %v1538
    %v1540 = vsel %vm1455, %v1433, 0.0
    %v1541 = vrot.slane %v1540, 4
    %v1542 = vadd.f32 %v1540, %v1541
    %v1543 = vrot.slane %v1542, 2
    %v1544 = vadd.f32 %v1542, %v1543
    %v1545 = vrot.slane %v1544, 1
    %v1546 = vadd.f32 %v1544, %v1545
    %v1547 = vsel %vm1455, %v1447, 0.0
    %v1548 = vrot.slane %v1547, 4
    %v1549 = vadd.f32 %v1547, %v1548
    %v1550 = vrot.slane %v1549, 2
    %v1551 = vadd.f32 %v1549, %v1550
    %v1552 = vrot.slane %v1551, 1
    %v1553 = vadd.f32 %v1551, %v1552
    %v1554 = vsel %vm1455, %v1434, 0.0
    %v1555 = vrot.slane %v1554, 4
    %v1556 = vadd.f32 %v1554, %v1555
    %v1557 = vrot.slane %v1556, 2
    %v1558 = vadd.f32 %v1556, %v1557
    %v1559 = vrot.slane %v1558, 1
    %v1560 = vadd.f32 %v1558, %v1559
    %v1561 = vsel %vm1455, %v1435, 0.0
    %v1562 = vrot.slane %v1561, 4
    %v1563 = vadd.f32 %v1561, %v1562
    %v1564 = vrot.slane %v1563, 2
    %v1565 = vadd.f32 %v1563, %v1564
    %v1566 = vrot.slane %v1565, 1
    %v1567 = vadd.f32 %v1565, %v1566
    %v1568 = vsel %vm1455, %v1448, 0.0
    %v1569 = vrot.slane %v1568, 4
    %v1570 = vadd.f32 %v1568, %v1569
    %v1571 = vrot.slane %v1570, 2
    %v1572 = vadd.f32 %v1570, %v1571
    %v1573 = vrot.slane %v1572, 1
    %v1574 = vadd.f32 %v1572, %v1573
    %v1575 = vsel %vm1455, %v1436, 0.0
    %v1576 = vrot.slane %v1575, 4
    %v1577 = vadd.f32 %v1575, %v1576
    %v1578 = vrot.slane %v1577, 2
    %v1579 = vadd.f32 %v1577, %v1578
    %v1580 = vrot.slane %v1579, 1
    %v1581 = vadd.f32 %v1579, %v1580
    %v1582 = vld [vmem:[#allocation7 + $0x18] sm:$0xff]
    %v1583 = vld [vmem:[#allocation7 + $0x20] sm:$0xff]
    %v1584 = vld [vmem:[#allocation7 + $0x28] sm:$0xff]
    %vm1603 = vcmask 1041409
    %v1604 = vsel %vm1603, %v1469, %v1462
    %vm1605 = vcmask 1042434
    %v1606 = vsel %vm1605, %v1476, %v1604
    %vm1607 = vcmask 1043459
    %v1608 = vsel %vm1607, %v1483, %v1606
    %vm1609 = vcmask 1044484
    %v1610 = vsel %vm1609, %v1490, %v1608
    %vm1611 = vcmask 1045509
    %v1612 = vsel %vm1611, %v1497, %v1610
    %vm1613 = vcmask 1046534
    %v1614 = vsel %vm1613, %v1504, %v1612
    %vm1615 = vcmask 1047559
    %v1616 = vsel %vm1615, %v1511, %v1614
    %v1617 = vsel %vm1603, %v1525, %v1518
    %v1618 = vsel %vm1605, %v1532, %v1617
    %v1619 = vsel %vm1607, %v1539, %v1618
    %v1620 = vsel %vm1609, %v1546, %v1619
    %v1621 = vsel %vm1611, %v1553, %v1620
    %v1622 = vsel %vm1613, %v1560, %v1621
    %v1623 = vsel %vm1615, %v1567, %v1622
    %v1624 = vsel %vm1603, %v1581, %v1574
    %vm1627 = vcmask 146432
    %v1629 = vsel %vm1627, %v1582, 0
    %v1632 = vsel %vm1627, %v1583, 0
    %v1635 = vsel %vm1627, %v1584, 0
    %vm1637 = vcmask 1041408
    %v1638 = vsel %vm1637, %v1624, 0
    %1640 = vmatprep.subr.mxu0 0.0
    %1641 = vmatpush1.msra.mxu0 %v1616
    %1642 = vmatprep.subr.mxu0 0.0
    %1643 = vmatpush1.msra.mxu0 %v1623
    %1644 = vmatprep.subr.mxu0 0.0
    %1645 = vmatpush1.msra.mxu0 %v1638
    %1646 = vmatprep.subr.mxu0 0.0
    %1647 = vmatpush1.msra.mxu0 0.0
    %1648 = vmatprep.subr.mxu0 0.0
    %1649 = vmatpush1.msra.mxu0 0.0
    %1650 = vmatprep.subr.mxu0 0.0
    %1651 = vmatpush1.msra.mxu0 0.0
    %1652 = vmatprep.subr.mxu0 0.0
    %1653 = vmatpush1.msra.mxu0 0.0
    %1654 = vmatprep.subr.mxu0 0.0
    %1655 = vmatpush1.msra.mxu0 0.0
    %1656 = vmatprep.subr.mxu0 0.0
    %1657 = vmatpush1.msra.mxu0 0.0
    %1658 = vmatprep.subr.mxu0 0.0
    %1659 = vmatpush1.msra.mxu0 0.0
    %1660 = vmatprep.subr.mxu0 0.0
    %1661 = vmatpush1.msra.mxu0 0.0
    %1662 = vmatprep.subr.mxu0 0.0
    %1663 = vmatpush1.msra.mxu0 0.0
    %1664 = vmatprep.subr.mxu0 0.0
    %1665 = vmatpush1.msra.mxu0 0.0
    %1666 = vmatprep.subr.mxu0 0.0
    %1667 = vmatpush1.msra.mxu0 0.0
    %1668 = vmatprep.subr.mxu0 0.0
    %1669 = vmatpush1.msra.mxu0 0.0
    %1670 = vmatprep.subr.mxu0 0.0
    %1671 = vmatpush1.msra.mxu0 0.0
    %1672 = vmatprep.subr.mxu0 0.0
    %1673 = vmatpush1.msra.mxu0 0.0
    %1674 = vmatprep.subr.mxu0 0.0
    %1675 = vmatpush1.msra.mxu0 0.0
    %1676 = vmatprep.subr.mxu0 0.0
    %1677 = vmatpush1.msra.mxu0 0.0
    %1678 = vmatprep.subr.mxu0 0.0
    %1679 = vmatpush1.msra.mxu0 0.0
    %1680 = vmatprep.subr.mxu0 0.0
    %1681 = vmatpush1.msra.mxu0 0.0
    %1682 = vmatprep.subr.mxu0 0.0
    %1683 = vmatpush1.msra.mxu0 0.0
    %1684 = vmatprep.subr.mxu0 0.0
    %1685 = vmatpush1.msra.mxu0 0.0
    %1686 = vmatprep.subr.mxu0 0.0
    %1687 = vmatpush1.msra.mxu0 0.0
    %1688 = vmatprep.subr.mxu0 0.0
    %1689 = vmatpush1.msra.mxu0 0.0
    %1690 = vmatprep.subr.mxu0 0.0
    %1691 = vmatpush1.msra.mxu0 0.0
    %1692 = vmatprep.subr.mxu0 0.0
    %1693 = vmatpush1.msra.mxu0 0.0
    %1694 = vmatprep.subr.mxu0 0.0
    %1695 = vmatpush1.msra.mxu0 0.0
    %1696 = vmatprep.subr.mxu0 0.0
    %1697 = vmatpush1.msra.mxu0 0.0
    %1698 = vmatprep.subr.mxu0 0.0
    %1699 = vmatpush1.msra.mxu0 0.0
    %1700 = vmatprep.subr.mxu0 0.0
    %1701 = vmatpush1.msra.mxu0 0.0
    %1702 = vmatprep.subr.mxu0 0.0
    %1703 = vmatpush1.msra.mxu0 0.0
    %1704 = vmatprep.mubr.f32.mxu0 0.0
    %1705 = vmatmul.mubr.f32.gmra.mrb[0].mxu0 %v1629
    %v1706 = vpop.f32.mrb[0].mxu0
    %v1707 = vadd.f32 0.0, %v1706
    %v1708 = vpop.f32.mrb[0].mxu0
    %1709 = vmatprep.mubr.f32.mxu0 0.0
    %1710 = vmatmul.mubr.f32.gmra.mrb[0].mxu0 %v1632
    %v1711 = vpop.f32.mrb[0].mxu0
    %v1712 = vadd.f32 0.0, %v1711
    %v1713 = vpop.f32.mrb[0].mxu0
    %1714 = vmatprep.mubr.f32.mxu0 0.0
    %1715 = vmatmul.mubr.f32.gmra.mrb[0].mxu0 %v1635
    %v1716 = vpop.f32.mrb[0].mxu0
    %v1717 = vadd.f32 0.0, %v1716
    %v1718 = vpop.f32.mrb[0].mxu0
    %1719 = vdwg.mxu0
    %v1720 = vpack.c.bf16 %v1712, %v1707
    %v1721 = vpack.c.bf16 %v1717, %v1717
    %v1722 = vld [vmem:[#allocation2 + $0xc] sm:$0xf]
    %v1723 = vld [vmem:[#allocation2 + $0x3c] sm:$0xf]
    %v1724 = vld [vmem:[#allocation2 + $0x6c] sm:$0xf]
    %v1725 = vld [vmem:[#allocation2 + $0x9c] sm:$0xf]
    %v1726 = vld [vmem:[#allocation2 + $0xcc] sm:$0xf]
    %v1727 = vld [vmem:[#allocation2 + $0xfc] sm:$0xf]
    %v1728 = vld [vmem:[#allocation2 + $0x12c] sm:$0xf]
    %v1729 = vld [vmem:[#allocation2 + $0x15c] sm:$0xf]
    %v1730 = vld [vmem:[#allocation2 + $0x18c] sm:$0xf]
    %v1731 = vld [vmem:[#allocation2 + $0x1bc] sm:$0xf]
    %v1732 = vld [vmem:[#allocation2 + $0x1ec] sm:$0xf]
    %v1733 = vld [vmem:[#allocation2 + $0x21c] sm:$0xf]
    %v1734 = vld [vmem:[#allocation2 + $0x24c] sm:$0xf]
    %v1735 = vld [vmem:[#allocation2 + $0x27c] sm:$0xf]
    %v1736 = vld [vmem:[#allocation2 + $0x2ac] sm:$0xf]
    %v1737 = vld [vmem:[#allocation2 + $0x2dc] sm:$0xf]
    %v1738 = vld [vmem:[#allocation5 + $0x18] ss:$0 sm:$0xff]
    %v1755 = vunpack.c.l.b16 %v1722
    %v1756 = vunpack.c.l.b16 %v1723
    %v1757 = vunpack.c.l.b16 %v1724
    %v1758 = vunpack.c.l.b16 %v1725
    %v1759 = vunpack.c.l.b16 %v1726
    %v1760 = vunpack.c.l.b16 %v1727
    %v1761 = vunpack.c.l.b16 %v1728
    %v1762 = vunpack.c.l.b16 %v1729
    %v1763 = vunpack.c.l.b16 %v1730
    %v1764 = vunpack.c.l.b16 %v1731
    %v1765 = vunpack.c.l.b16 %v1732
    %v1766 = vunpack.c.l.b16 %v1733
    %v1767 = vunpack.c.l.b16 %v1734
    %v1768 = vunpack.c.l.b16 %v1735
    %v1769 = vunpack.c.l.b16 %v1736
    %v1770 = vunpack.c.l.b16 %v1737
    %v1771 = vpack.c.b16 %v1756, %v1755
    %v1772 = vpack.c.b16 %v1758, %v1757
    %v1773 = vpack.c.b16 %v1760, %v1759
    %v1774 = vpack.c.b16 %v1762, %v1761
    %v1775 = vpack.c.b16 %v1764, %v1763
    %v1776 = vpack.c.b16 %v1766, %v1765
    %v1777 = vpack.c.b16 %v1768, %v1767
    %v1778 = vpack.c.b16 %v1770, %v1769
    %1787 = vmatprep.subr.bf16.mxu0 0
    %1788 = vmatpush1.bf16.msra.mxu0 %v1771
    %1789 = vmatprep.subr.bf16.mxu0 0
    %1790 = vmatpush1.bf16.msra.mxu0 %v1772
    %1791 = vmatprep.subr.bf16.mxu0 0
    %1792 = vmatpush1.bf16.msra.mxu0 %v1773
    %1793 = vmatprep.subr.bf16.mxu0 0
    %1794 = vmatpush1.bf16.msra.mxu0 %v1774
    %1795 = vmatprep.subr.bf16.mxu0 0
    %1796 = vmatpush1.bf16.msra.mxu0 %v1775
    %1797 = vmatprep.subr.bf16.mxu0 0
    %1798 = vmatpush1.bf16.msra.mxu0 %v1776
    %1799 = vmatprep.subr.bf16.mxu0 0
    %1800 = vmatpush1.bf16.msra.mxu0 %v1777
    %1801 = vmatprep.subr.bf16.mxu0 0
    %1802 = vmatpush1.bf16.msra.mxu0 %v1778
    %1803 = vmatprep.subr.bf16.mxu0 0
    %1804 = vmatpush1.bf16.msra.mxu0 0
    %1805 = vmatprep.subr.bf16.mxu0 0
    %1806 = vmatpush1.bf16.msra.mxu0 0
    %1807 = vmatprep.subr.bf16.mxu0 0
    %1808 = vmatpush1.bf16.msra.mxu0 0
    %1809 = vmatprep.subr.bf16.mxu0 0
    %1810 = vmatpush1.bf16.msra.mxu0 0
    %1811 = vmatprep.subr.bf16.mxu0 0
    %1812 = vmatpush1.bf16.msra.mxu0 0
    %1813 = vmatprep.subr.bf16.mxu0 0
    %1814 = vmatpush1.bf16.msra.mxu0 0
    %1815 = vmatprep.subr.bf16.mxu0 0
    %1816 = vmatpush1.bf16.msra.mxu0 0
    %1817 = vmatprep.subr.bf16.mxu0 0
    %1818 = vmatpush1.bf16.msra.mxu0 0
    %1819 = vmatprep.mubr.bf16.mxu0 0
    %1820 = vmatmul.mubr.bf16.gmra.mrb[0].mxu0 %v1720
    %v1821 = vpop.f32.mrb[0].mxu0
    %v1822 = vadd.f32 %v1738, %v1821
    %v1823 = vpop.f32.mrb[0].mxu0
    %v1824 = vpop.f32.mrb[0].mxu0
    %v1825 = vadd.f32 %v1738, %v1824
    %v1826 = vpop.f32.mrb[0].mxu0
    %1827 = vmatprep.mubr.bf16.mxu0 0
    %1828 = vmatmul.mubr.bf16.gmra.mrb[0].mxu0 %v1721
    %v1829 = vpop.f32.mrb[0].mxu0
    %v1830 = vadd.f32 %v1738, %v1829
    %v1831 = vpop.f32.mrb[0].mxu0
    %v1832 = vpop.f32.mrb[0].mxu0
    %v1833 = vpop.f32.mrb[0].mxu0
    %1834 = vdwg.mxu0
    %v1835 = vpack.c.bf16 %v1825, %v1822
    %v1836 = vpack.c.bf16 %v1830, %v1830
    %v1837 = vld [vmem:[#allocation2 + $0x10] sm:$0xff]
    %v1838 = vld [vmem:[#allocation2 + $0x18] sm:$0xff]
    %v1839 = vld [vmem:[#allocation2 + $0x40] sm:$0xff]
    %v1840 = vld [vmem:[#allocation2 + $0x48] sm:$0xff]
    %v1841 = vld [vmem:[#allocation2 + $0x70] sm:$0xff]
    %v1842 = vld [vmem:[#allocation2 + $0x78] sm:$0xff]
    %v1843 = vld [vmem:[#allocation2 + $0xa0] sm:$0xff]
    %v1844 = vld [vmem:[#allocation2 + $0xa8] sm:$0xff]
    %v1845 = vld [vmem:[#allocation2 + $0xd0] sm:$0xff]
    %v1846 = vld [vmem:[#allocation2 + $0xd8] sm:$0xff]
    %v1847 = vld [vmem:[#allocation2 + $0x100] sm:$0xff]
    %v1848 = vld [vmem:[#allocation2 + $0x108] sm:$0xff]
    %v1849 = vld [vmem:[#allocation2 + $0x130] sm:$0xff]
    %v1850 = vld [vmem:[#allocation2 + $0x138] sm:$0xff]
    %v1851 = vld [vmem:[#allocation2 + $0x160] sm:$0xff]
    %v1852 = vld [vmem:[#allocation2 + $0x168] sm:$0xff]
    %v1853 = vld [vmem:[#allocation2 + $0x190] sm:$0xff]
    %v1854 = vld [vmem:[#allocation2 + $0x198] sm:$0xff]
    %v1855 = vld [vmem:[#allocation2 + $0x1c0] sm:$0xff]
    %v1856 = vld [vmem:[#allocation2 + $0x1c8] sm:$0xff]
    %v1857 = vld [vmem:[#allocation2 + $0x1f0] sm:$0xff]
    %v1858 = vld [vmem:[#allocation2 + $0x1f8] sm:$0xff]
    %v1859 = vld [vmem:[#allocation2 + $0x220] sm:$0xff]
    %v1860 = vld [vmem:[#allocation2 + $0x228] sm:$0xff]
    %v1861 = vld [vmem:[#allocation2 + $0x250] sm:$0xff]
    %v1862 = vld [vmem:[#allocation2 + $0x258] sm:$0xff]
    %v1863 = vld [vmem:[#allocation2 + $0x280] sm:$0xff]
    %v1864 = vld [vmem:[#allocation2 + $0x288] sm:$0xff]
    %v1865 = vld [vmem:[#allocation2 + $0x2b0] sm:$0xff]
    %v1866 = vld [vmem:[#allocation2 + $0x2b8] sm:$0xff]
    %v1867 = vld [vmem:[#allocation2 + $0x2e0] sm:$0xff]
    %v1868 = vld [vmem:[#allocation2 + $0x2e8] sm:$0xff]
    %s1869 = scalar_lea.vmem [#allocation5], 2
    %v1870 = vld [vmem:[%s1869] ss:$8 sm:$0xf]
    %v1872 = vlaneseq
    %v1873 = vshrl.u32 %v1872, 7
    %v1874 = vsub.s32 0, %v1873
    %v1875 = vrot.slane %v1870, %v1874
    %v1876 = vlaneseq
    %v1877 = vshrl.u32 %v1876, 7
    %v1878 = vsub.s32 1, %v1877
    %v1879 = vrot.slane %v1870, %v1878
    %v1880 = vlaneseq
    %v1881 = vshrl.u32 %v1880, 7
    %v1882 = vsub.s32 2, %v1881
    %v1883 = vrot.slane %v1870, %v1882
    %v1884 = vlaneseq
    %v1885 = vshrl.u32 %v1884, 7
    %v1886 = vsub.s32 3, %v1885
    %v1887 = vrot.slane %v1870, %v1886
    %v1924 = vunpack.c.l.b16 %v1837
    %v1925 = vunpack.c.h.b16 %v1837
    %v1926 = vunpack.c.l.b16 %v1838
    %v1927 = vunpack.c.h.b16 %v1838
    %v1928 = vunpack.c.l.b16 %v1839
    %v1929 = vunpack.c.h.b16 %v1839
    %v1930 = vunpack.c.l.b16 %v1840
    %v1931 = vunpack.c.h.b16 %v1840
    %v1932 = vunpack.c.l.b16 %v1841
    %v1933 = vunpack.c.h.b16 %v1841
    %v1934 = vunpack.c.l.b16 %v1842
    %v1935 = vunpack.c.h.b16 %v1842
    %v1936 = vunpack.c.l.b16 %v1843
    %v1937 = vunpack.c.h.b16 %v1843
    %v1938 = vunpack.c.l.b16 %v1844
    %v1939 = vunpack.c.h.b16 %v1844
    %v1940 = vunpack.c.l.b16 %v1845
    %v1941 = vunpack.c.h.b16 %v1845
    %v1942 = vunpack.c.l.b16 %v1846
    %v1943 = vunpack.c.h.b16 %v1846
    %v1944 = vunpack.c.l.b16 %v1847
    %v1945 = vunpack.c.h.b16 %v1847
    %v1946 = vunpack.c.l.b16 %v1848
    %v1947 = vunpack.c.h.b16 %v1848
    %v1948 = vunpack.c.l.b16 %v1849
    %v1949 = vunpack.c.h.b16 %v1849
    %v1950 = vunpack.c.l.b16 %v1850
    %v1951 = vunpack.c.h.b16 %v1850
    %v1952 = vunpack.c.l.b16 %v1851
    %v1953 = vunpack.c.h.b16 %v1851
    %v1954 = vunpack.c.l.b16 %v1852
    %v1955 = vunpack.c.h.b16 %v1852
    %v1956 = vunpack.c.l.b16 %v1853
    %v1957 = vunpack.c.h.b16 %v1853
    %v1958 = vunpack.c.l.b16 %v1854
    %v1959 = vunpack.c.h.b16 %v1854
    %v1960 = vunpack.c.l.b16 %v1855
    %v1961 = vunpack.c.h.b16 %v1855
    %v1962 = vunpack.c.l.b16 %v1856
    %v1963 = vunpack.c.h.b16 %v1856
    %v1964 = vunpack.c.l.b16 %v1857
    %v1965 = vunpack.c.h.b16 %v1857
    %v1966 = vunpack.c.l.b16 %v1858
    %v1967 = vunpack.c.h.b16 %v1858
    %v1968 = vunpack.c.l.b16 %v1859
    %v1969 = vunpack.c.h.b16 %v1859
    %v1970 = vunpack.c.l.b16 %v1860
    %v1971 = vunpack.c.h.b16 %v1860
    %v1972 = vunpack.c.l.b16 %v1861
    %v1973 = vunpack.c.h.b16 %v1861
    %v1974 = vunpack.c.l.b16 %v1862
    %v1975 = vunpack.c.h.b16 %v1862
    %v1976 = vunpack.c.l.b16 %v1863
    %v1977 = vunpack.c.h.b16 %v1863
    %v1978 = vunpack.c.l.b16 %v1864
    %v1979 = vunpack.c.h.b16 %v1864
    %v1980 = vunpack.c.l.b16 %v1865
    %v1981 = vunpack.c.h.b16 %v1865
    %v1982 = vunpack.c.l.b16 %v1866
    %v1983 = vunpack.c.h.b16 %v1866
    %v1984 = vunpack.c.l.b16 %v1867
    %v1985 = vunpack.c.h.b16 %v1867
    %v1986 = vunpack.c.l.b16 %v1868
    %v1987 = vunpack.c.h.b16 %v1868
    %v1988 = vpack.c.b16 %v1928, %v1924
    %v1989 = vpack.c.b16 %v1929, %v1925
    %v1990 = vpack.c.b16 %v1930, %v1926
    %v1991 = vpack.c.b16 %v1931, %v1927
    %v1992 = vpack.c.b16 %v1936, %v1932
    %v1993 = vpack.c.b16 %v1937, %v1933
    %v1994 = vpack.c.b16 %v1938, %v1934
    %v1995 = vpack.c.b16 %v1939, %v1935
    %v1996 = vpack.c.b16 %v1944, %v1940
    %v1997 = vpack.c.b16 %v1945, %v1941
    %v1998 = vpack.c.b16 %v1946, %v1942
    %v1999 = vpack.c.b16 %v1947, %v1943
    %v2000 = vpack.c.b16 %v1952, %v1948
    %v2001 = vpack.c.b16 %v1953, %v1949
    %v2002 = vpack.c.b16 %v1954, %v1950
    %v2003 = vpack.c.b16 %v1955, %v1951
    %v2004 = vpack.c.b16 %v1960, %v1956
    %v2005 = vpack.c.b16 %v1961, %v1957
    %v2006 = vpack.c.b16 %v1962, %v1958
    %v2007 = vpack.c.b16 %v1963, %v1959
    %v2008 = vpack.c.b16 %v1968, %v1964
    %v2009 = vpack.c.b16 %v1969, %v1965
    %v2010 = vpack.c.b16 %v1970, %v1966
    %v2011 = vpack.c.b16 %v1971, %v1967
    %v2012 = vpack.c.b16 %v1976, %v1972
    %v2013 = vpack.c.b16 %v1977, %v1973
    %v2014 = vpack.c.b16 %v1978, %v1974
    %v2015 = vpack.c.b16 %v1979, %v1975
    %v2016 = vpack.c.b16 %v1984, %v1980
    %v2017 = vpack.c.b16 %v1985, %v1981
    %v2018 = vpack.c.b16 %v1986, %v1982
    %v2019 = vpack.c.b16 %v1987, %v1983
    %2052 = vmatprep.subr.bf16.mxu0 %v1989
    %2053 = vmatpush1.bf16.msra.mxu0 %v1988
    %2054 = vmatprep.subr.bf16.mxu0 %v1993
    %2055 = vmatpush1.bf16.msra.mxu0 %v1992
    %2056 = vmatprep.subr.bf16.mxu0 %v1997
    %2057 = vmatpush1.bf16.msra.mxu0 %v1996
    %2058 = vmatprep.subr.bf16.mxu0 %v2001
    %2059 = vmatpush1.bf16.msra.mxu0 %v2000
    %2060 = vmatprep.subr.bf16.mxu0 %v2005
    %2061 = vmatpush1.bf16.msra.mxu0 %v2004
    %2062 = vmatprep.subr.bf16.mxu0 %v2009
    %2063 = vmatpush1.bf16.msra.mxu0 %v2008
    %2064 = vmatprep.subr.bf16.mxu0 %v2013
    %2065 = vmatpush1.bf16.msra.mxu0 %v2012
    %2066 = vmatprep.subr.bf16.mxu0 %v2017
    %2067 = vmatpush1.bf16.msra.mxu0 %v2016
    %2068 = vmatprep.subr.bf16.mxu0 0
    %2069 = vmatpush1.bf16.msra.mxu0 0
    %2070 = vmatprep.subr.bf16.mxu0 0
    %2071 = vmatpush1.bf16.msra.mxu0 0
    %2072 = vmatprep.subr.bf16.mxu0 0
    %2073 = vmatpush1.bf16.msra.mxu0 0
    %2074 = vmatprep.subr.bf16.mxu0 0
    %2075 = vmatpush1.bf16.msra.mxu0 0
    %2076 = vmatprep.subr.bf16.mxu0 0
    %2077 = vmatpush1.bf16.msra.mxu0 0
    %2078 = vmatprep.subr.bf16.mxu0 0
    %2079 = vmatpush1.bf16.msra.mxu0 0
    %2080 = vmatprep.subr.bf16.mxu0 0
    %2081 = vmatpush1.bf16.msra.mxu0 0
    %2082 = vmatprep.subr.bf16.mxu0 0
    %2083 = vmatpush1.bf16.msra.mxu0 0
    %2084 = vmatprep.mubr.bf16.mxu0 0
    %2085 = vmatmul.mubr.bf16.gmra.mrb[0].mxu0 %v1835
    %v2086 = vpop.f32.mrb[0].mxu0
    %v2087 = vadd.f32 %v1875, %v2086
    %v2088 = vpop.f32.mrb[0].mxu0
    %v2089 = vadd.f32 %v1879, %v2088
    %v2090 = vpop.f32.mrb[0].mxu0
    %v2091 = vpop.f32.mrb[0].mxu0
    %v2092 = vadd.f32 %v1879, %v2091
    %2093 = vmatprep.mubr.bf16.mxu0 0
    %2094 = vmatmul.mubr.bf16.gmra.mrb[0].mxu0 %v1836
    %v2095 = vpop.f32.mrb[0].mxu0
    %v2096 = vpop.f32.mrb[0].mxu0
    %v2097 = vadd.f32 %v1879, %v2096
    %v2098 = vpop.f32.mrb[0].mxu0
    %v2099 = vpop.f32.mrb[0].mxu0
    %2100 = vdwg.mxu0
    %2101 = vmatprep.subr.bf16.mxu0 %v1991
    %2102 = vmatpush1.bf16.msra.mxu0 %v1990
    %2103 = vmatprep.subr.bf16.mxu0 %v1995
    %2104 = vmatpush1.bf16.msra.mxu0 %v1994
    %2105 = vmatprep.subr.bf16.mxu0 %v1999
    %2106 = vmatpush1.bf16.msra.mxu0 %v1998
    %2107 = vmatprep.subr.bf16.mxu0 %v2003
    %2108 = vmatpush1.bf16.msra.mxu0 %v2002
    %2109 = vmatprep.subr.bf16.mxu0 %v2007
    %2110 = vmatpush1.bf16.msra.mxu0 %v2006
    %2111 = vmatprep.subr.bf16.mxu0 %v2011
    %2112 = vmatpush1.bf16.msra.mxu0 %v2010
    %2113 = vmatprep.subr.bf16.mxu0 %v2015
    %2114 = vmatpush1.bf16.msra.mxu0 %v2014
    %2115 = vmatprep.subr.bf16.mxu0 %v2019
    %2116 = vmatpush1.bf16.msra.mxu0 %v2018
    %2117 = vmatprep.subr.bf16.mxu0 0
    %2118 = vmatpush1.bf16.msra.mxu0 0
    %2119 = vmatprep.subr.bf16.mxu0 0
    %2120 = vmatpush1.bf16.msra.mxu0 0
    %2121 = vmatprep.subr.bf16.mxu0 0
    %2122 = vmatpush1.bf16.msra.mxu0 0
    %2123 = vmatprep.subr.bf16.mxu0 0
    %2124 = vmatpush1.bf16.msra.mxu0 0
    %2125 = vmatprep.subr.bf16.mxu0 0
    %2126 = vmatpush1.bf16.msra.mxu0 0
    %2127 = vmatprep.subr.bf16.mxu0 0
    %2128 = vmatpush1.bf16.msra.mxu0 0
    %2129 = vmatprep.subr.bf16.mxu0 0
    %2130 = vmatpush1.bf16.msra.mxu0 0
    %2131 = vmatprep.subr.bf16.mxu0 0
    %2132 = vmatpush1.bf16.msra.mxu0 0
    %2133 = vmatprep.mubr.bf16.mxu0 0
    %2134 = vmatmul.mubr.bf16.gmra.mrb[0].mxu0 %v1835
    %v2135 = vpop.f32.mrb[0].mxu0
    %v2136 = vadd.f32 %v1883, %v2135
    %v2137 = vpop.f32.mrb[0].mxu0
    %v2138 = vadd.f32 %v1887, %v2137
    %v2139 = vpop.f32.mrb[0].mxu0
    %v2140 = vadd.f32 %v1883, %v2139
    %v2141 = vpop.f32.mrb[0].mxu0
    %v2142 = vadd.f32 %v1887, %v2141
    %2143 = vmatprep.mubr.bf16.mxu0 0
    %2144 = vmatmul.mubr.bf16.gmra.mrb[0].mxu0 %v1836
    %v2145 = vpop.f32.mrb[0].mxu0
    %v2146 = vadd.f32 %v1883, %v2145
    %v2147 = vpop.f32.mrb[0].mxu0
    %v2148 = vadd.f32 %v1887, %v2147
    %v2149 = vpop.f32.mrb[0].mxu0
    %v2150 = vpop.f32.mrb[0].mxu0
    %2151 = vdwg.mxu0
    %v2152 = vmax.f32 %v2087, 0.0
    %v2153 = vld [vmem:[#allocation2 + $0x20] sm:$0xff]
    %v2154 = vld [vmem:[#allocation2 + $0x28] sm:$0xf]
    %v2155 = vld [vmem:[#allocation2 + $0x50] sm:$0xff]
    %v2156 = vld [vmem:[#allocation2 + $0x58] sm:$0xf]
    %v2157 = vld [vmem:[#allocation2 + $0x80] sm:$0xff]
    %v2158 = vld [vmem:[#allocation2 + $0x88] sm:$0xf]
    %v2159 = vld [vmem:[#allocation2 + $0xb0] sm:$0xff]
    %v2160 = vld [vmem:[#allocation2 + $0xb8] sm:$0xf]
    %v2161 = vld [vmem:[#allocation2 + $0xe0] sm:$0xff]
    %v2162 = vld [vmem:[#allocation2 + $0xe8] sm:$0xf]
    %v2163 = vld [vmem:[#allocation2 + $0x110] sm:$0xff]
    %v2164 = vld [vmem:[#allocation2 + $0x118] sm:$0xf]
    %v2165 = vld [vmem:[#allocation2 + $0x140] sm:$0xff]
    %v2166 = vld [vmem:[#allocation2 + $0x148] sm:$0xf]
    %v2167 = vld [vmem:[#allocation2 + $0x170] sm:$0xff]
    %v2168 = vld [vmem:[#allocation2 + $0x178] sm:$0xf]
    %v2169 = vld [vmem:[#allocation2 + $0x1a0] sm:$0xff]
    %v2170 = vld [vmem:[#allocation2 + $0x1a8] sm:$0xf]
    %v2171 = vld [vmem:[#allocation2 + $0x1d0] sm:$0xff]
    %v2172 = vld [vmem:[#allocation2 + $0x1d8] sm:$0xf]
    %v2173 = vld [vmem:[#allocation2 + $0x200] sm:$0xff]
    %v2174 = vld [vmem:[#allocation2 + $0x208] sm:$0xf]
    %v2175 = vld [vmem:[#allocation2 + $0x230] sm:$0xff]
    %v2176 = vld [vmem:[#allocation2 + $0x238] sm:$0xf]
    %v2177 = vld [vmem:[#allocation2 + $0x260] sm:$0xff]
    %v2178 = vld [vmem:[#allocation2 + $0x268] sm:$0xf]
    %v2179 = vld [vmem:[#allocation2 + $0x290] sm:$0xff]
    %v2180 = vld [vmem:[#allocation2 + $0x298] sm:$0xf]
    %v2181 = vld [vmem:[#allocation2 + $0x2c0] sm:$0xff]
    %v2182 = vld [vmem:[#allocation2 + $0x2c8] sm:$0xf]
    %v2183 = vld [vmem:[#allocation2 + $0x2f0] sm:$0xff]
    %v2184 = vld [vmem:[#allocation2 + $0x2f8] sm:$0xf]
    %s2185 = scalar_lea.vmem [#allocation5], 3
    %v2186 = vld [vmem:[%s2185] ss:$8 sm:$0x7]
    %v2187 = vpack.c.bf16 %v2152, %v2152
    %v2189 = vlaneseq
    %v2190 = vshrl.u32 %v2189, 7
    %v2191 = vsub.s32 0, %v2190
    %v2192 = vrot.slane %v2186, %v2191
    %v2193 = vlaneseq
    %v2194 = vshrl.u32 %v2193, 7
    %v2195 = vsub.s32 1, %v2194
    %v2196 = vrot.slane %v2186, %v2195
    %v2197 = vlaneseq
    %v2198 = vshrl.u32 %v2197, 7
    %v2199 = vsub.s32 2, %v2198
    %v2200 = vrot.slane %v2186, %v2199
    %v2236 = vunpack.c.l.b16 %v2153
    %v2237 = vunpack.c.h.b16 %v2153
    %v2238 = vunpack.c.l.b16 %v2154
    %v2239 = vunpack.c.l.b16 %v2155
    %v2240 = vunpack.c.h.b16 %v2155
    %v2241 = vunpack.c.l.b16 %v2156
    %v2242 = vunpack.c.l.b16 %v2157
    %v2243 = vunpack.c.h.b16 %v2157
    %v2244 = vunpack.c.l.b16 %v2158
    %v2245 = vunpack.c.l.b16 %v2159
    %v2246 = vunpack.c.h.b16 %v2159
    %v2247 = vunpack.c.l.b16 %v2160
    %v2248 = vunpack.c.l.b16 %v2161
    %v2249 = vunpack.c.h.b16 %v2161
    %v2250 = vunpack.c.l.b16 %v2162
    %v2251 = vunpack.c.l.b16 %v2163
    %v2252 = vunpack.c.h.b16 %v2163
    %v2253 = vunpack.c.l.b16 %v2164
    %v2254 = vunpack.c.l.b16 %v2165
    %v2255 = vunpack.c.h.b16 %v2165
    %v2256 = vunpack.c.l.b16 %v2166
    %v2257 = vunpack.c.l.b16 %v2167
    %v2258 = vunpack.c.h.b16 %v2167
    %v2259 = vunpack.c.l.b16 %v2168
    %v2260 = vunpack.c.l.b16 %v2169
    %v2261 = vunpack.c.h.b16 %v2169
    %v2262 = vunpack.c.l.b16 %v2170
    %v2263 = vunpack.c.l.b16 %v2171
    %v2264 = vunpack.c.h.b16 %v2171
    %v2265 = vunpack.c.l.b16 %v2172
    %v2266 = vunpack.c.l.b16 %v2173
    %v2267 = vunpack.c.h.b16 %v2173
    %v2268 = vunpack.c.l.b16 %v2174
    %v2269 = vunpack.c.l.b16 %v2175
    %v2270 = vunpack.c.h.b16 %v2175
    %v2271 = vunpack.c.l.b16 %v2176
    %v2272 = vunpack.c.l.b16 %v2177
    %v2273 = vunpack.c.h.b16 %v2177
    %v2274 = vunpack.c.l.b16 %v2178
    %v2275 = vunpack.c.l.b16 %v2179
    %v2276 = vunpack.c.h.b16 %v2179
    %v2277 = vunpack.c.l.b16 %v2180
    %v2278 = vunpack.c.l.b16 %v2181
    %v2279 = vunpack.c.h.b16 %v2181
    %v2280 = vunpack.c.l.b16 %v2182
    %v2281 = vunpack.c.l.b16 %v2183
    %v2282 = vunpack.c.h.b16 %v2183
    %v2283 = vunpack.c.l.b16 %v2184
    %v2284 = vpack.c.b16 %v2239, %v2236
    %v2285 = vpack.c.b16 %v2240, %v2237
    %v2286 = vpack.c.b16 %v2241, %v2238
    %v2287 = vpack.c.b16 %v2245, %v2242
    %v2288 = vpack.c.b16 %v2246, %v2243
    %v2289 = vpack.c.b16 %v2247, %v2244
    %v2290 = vpack.c.b16 %v2251, %v2248
    %v2291 = vpack.c.b16 %v2252, %v2249
    %v2292 = vpack.c.b16 %v2253, %v2250
    %v2293 = vpack.c.b16 %v2257, %v2254
    %v2294 = vpack.c.b16 %v2258, %v2255
    %v2295 = vpack.c.b16 %v2259, %v2256
    %v2296 = vpack.c.b16 %v2263, %v2260
    %v2297 = vpack.c.b16 %v2264, %v2261
    %v2298 = vpack.c.b16 %v2265, %v2262
    %v2299 = vpack.c.b16 %v2269, %v2266
    %v2300 = vpack.c.b16 %v2270, %v2267
    %v2301 = vpack.c.b16 %v2271, %v2268
    %v2302 = vpack.c.b16 %v2275, %v2272
    %v2303 = vpack.c.b16 %v2276, %v2273
    %v2304 = vpack.c.b16 %v2277, %v2274
    %v2305 = vpack.c.b16 %v2281, %v2278
    %v2306 = vpack.c.b16 %v2282, %v2279
    %v2307 = vpack.c.b16 %v2283, %v2280
    %2332 = vmatprep.subr.bf16.mxu0 %v2285
    %2333 = vmatpush1.bf16.msra.mxu0 %v2284
    %2334 = vmatprep.subr.bf16.mxu0 %v2288
    %2335 = vmatpush1.bf16.msra.mxu0 %v2287
    %2336 = vmatprep.subr.bf16.mxu0 %v2291
    %2337 = vmatpush1.bf16.msra.mxu0 %v2290
    %2338 = vmatprep.subr.bf16.mxu0 %v2294
    %2339 = vmatpush1.bf16.msra.mxu0 %v2293
    %2340 = vmatprep.subr.bf16.mxu0 %v2297
    %2341 = vmatpush1.bf16.msra.mxu0 %v2296
    %2342 = vmatprep.subr.bf16.mxu0 %v2300
    %2343 = vmatpush1.bf16.msra.mxu0 %v2299
    %2344 = vmatprep.subr.bf16.mxu0 %v2303
    %2345 = vmatpush1.bf16.msra.mxu0 %v2302
    %2346 = vmatprep.subr.bf16.mxu0 %v2306
    %2347 = vmatpush1.bf16.msra.mxu0 %v2305
    %2348 = vmatprep.subr.bf16.mxu0 0
    %2349 = vmatpush1.bf16.msra.mxu0 0
    %2350 = vmatprep.subr.bf16.mxu0 0
    %2351 = vmatpush1.bf16.msra.mxu0 0
    %2352 = vmatprep.subr.bf16.mxu0 0
    %2353 = vmatpush1.bf16.msra.mxu0 0
    %2354 = vmatprep.subr.bf16.mxu0 0
    %2355 = vmatpush1.bf16.msra.mxu0 0
    %2356 = vmatprep.subr.bf16.mxu0 0
    %2357 = vmatpush1.bf16.msra.mxu0 0
    %2358 = vmatprep.subr.bf16.mxu0 0
    %2359 = vmatpush1.bf16.msra.mxu0 0
    %2360 = vmatprep.subr.bf16.mxu0 0
    %2361 = vmatpush1.bf16.msra.mxu0 0
    %2362 = vmatprep.subr.bf16.mxu0 0
    %2363 = vmatpush1.bf16.msra.mxu0 0
    %2364 = vmatprep.mubr.bf16.mxu0 0
    %2365 = vmatmul.mubr.bf16.gmra.mrb[0].mxu0 %v2187
    %v2366 = vpop.f32.mrb[0].mxu0
    %v2367 = vadd.f32 %v2192, %v2366
    %v2368 = vpop.f32.mrb[0].mxu0
    %v2369 = vadd.f32 %v2196, %v2368
    %v2370 = vpop.f32.mrb[0].mxu0
    %v2371 = vpop.f32.mrb[0].mxu0
    %2372 = vdwg.mxu0
    %2373 = vmatprep.subr.bf16.mxu0 0
    %2374 = vmatpush1.bf16.msra.mxu0 %v2286
    %2375 = vmatprep.subr.bf16.mxu0 0
    %2376 = vmatpush1.bf16.msra.mxu0 %v2289
    %2377 = vmatprep.subr.bf16.mxu0 0
    %2378 = vmatpush1.bf16.msra.mxu0 %v2292
    %2379 = vmatprep.subr.bf16.mxu0 0
    %2380 = vmatpush1.bf16.msra.mxu0 %v2295
    %2381 = vmatprep.subr.bf16.mxu0 0
    %2382 = vmatpush1.bf16.msra.mxu0 %v2298
    %2383 = vmatprep.subr.bf16.mxu0 0
    %2384 = vmatpush1.bf16.msra.mxu0 %v2301
    %2385 = vmatprep.subr.bf16.mxu0 0
    %2386 = vmatpush1.bf16.msra.mxu0 %v2304
    %2387 = vmatprep.subr.bf16.mxu0 0
    %2388 = vmatpush1.bf16.msra.mxu0 %v2307
    %2389 = vmatprep.subr.bf16.mxu0 0
    %2390 = vmatpush1.bf16.msra.mxu0 0
    %2391 = vmatprep.subr.bf16.mxu0 0
    %2392 = vmatpush1.bf16.msra.mxu0 0
    %2393 = vmatprep.subr.bf16.mxu0 0
    %2394 = vmatpush1.bf16.msra.mxu0 0
    %2395 = vmatprep.subr.bf16.mxu0 0
    %2396 = vmatpush1.bf16.msra.mxu0 0
    %2397 = vmatprep.subr.bf16.mxu0 0
    %2398 = vmatpush1.bf16.msra.mxu0 0
    %2399 = vmatprep.subr.bf16.mxu0 0
    %2400 = vmatpush1.bf16.msra.mxu0 0
    %2401 = vmatprep.subr.bf16.mxu0 0
    %2402 = vmatpush1.bf16.msra.mxu0 0
    %2403 = vmatprep.subr.bf16.mxu0 0
    %2404 = vmatpush1.bf16.msra.mxu0 0
    %2405 = vmatprep.mubr.bf16.mxu0 0
    %2406 = vmatmul.mubr.bf16.gmra.mrb[0].mxu0 %v2187
    %v2407 = vpop.f32.mrb[0].mxu0
    %v2408 = vadd.f32 %v2200, %v2407
    %v2409 = vpop.f32.mrb[0].mxu0
    %v2410 = vpop.f32.mrb[0].mxu0
    %v2411 = vpop.f32.mrb[0].mxu0
    %2412 = vdwg.mxu0
    %v2413 = vadd.f32 %v2089, %v2367
    %v2414 = vxor.u32 %v2413, 2147483648
    %v2415 = vmul.f32 %v2414, 1.442695
    %v2416 = vpow.pop %v2415
    %v2417 = vadd.f32 %v2416, 1.0
    %v2418 = vrcp.pop %v2417
    %v2419 = vmul.f32 1.0, %v2418
    %v2420 = vadd.f32 %v2136, %v2369
    %v2421 = vxor.u32 %v2420, 2147483648
    %v2422 = vmul.f32 %v2421, 1.442695
    %v2423 = vpow.pop %v2422
    %v2424 = vadd.f32 %v2423, 1.0
    %v2425 = vrcp.pop %v2424
    %v2426 = vmul.f32 1.0, %v2425
    %v2427 = vmul.f32 %v2419, %v2408
    %v2428 = vadd.f32 %v2138, %v2427
    %v2429 = vtanh.pop %v2428
    %v2430 = vsub.f32 1.0, %v2426
    %v2431 = vmul.f32 %v2430, %v2429
    %v2432 = vmul.f32 %v2426, %v2152
    %v2433 = vadd.f32 %v2431, %v2432
    %v2434 = vpack.c.bf16 %v2433, %v2433
    %2435 = vmatprep.subr.bf16.mxu0 %v2285
    %2436 = vmatpush1.bf16.msra.mxu0 %v2284
    %2437 = vmatprep.subr.bf16.mxu0 %v2288
    %2438 = vmatpush1.bf16.msra.mxu0 %v2287
    %2439 = vmatprep.subr.bf16.mxu0 %v2291
    %2440 = vmatpush1.bf16.msra.mxu0 %v2290
    %2441 = vmatprep.subr.bf16.mxu0 %v2294
    %2442 = vmatpush1.bf16.msra.mxu0 %v2293
    %2443 = vmatprep.subr.bf16.mxu0 %v2297
    %2444 = vmatpush1.bf16.msra.mxu0 %v2296
    %2445 = vmatprep.subr.bf16.mxu0 %v2300
    %2446 = vmatpush1.bf16.msra.mxu0 %v2299
    %2447 = vmatprep.subr.bf16.mxu0 %v2303
    %2448 = vmatpush1.bf16.msra.mxu0 %v2302
    %2449 = vmatprep.subr.bf16.mxu0 %v2306
    %2450 = vmatpush1.bf16.msra.mxu0 %v2305
    %2451 = vmatprep.subr.bf16.mxu0 0
    %2452 = vmatpush1.bf16.msra.mxu0 0
    %2453 = vmatprep.subr.bf16.mxu0 0
    %2454 = vmatpush1.bf16.msra.mxu0 0
    %2455 = vmatprep.subr.bf16.mxu0 0
    %2456 = vmatpush1.bf16.msra.mxu0 0
    %2457 = vmatprep.subr.bf16.mxu0 0
    %2458 = vmatpush1.bf16.msra.mxu0 0
    %2459 = vmatprep.subr.bf16.mxu0 0
    %2460 = vmatpush1.bf16.msra.mxu0 0
    %2461 = vmatprep.subr.bf16.mxu0 0
    %2462 = vmatpush1.bf16.msra.mxu0 0
    %2463 = vmatprep.subr.bf16.mxu0 0
    %2464 = vmatpush1.bf16.msra.mxu0 0
    %2465 = vmatprep.subr.bf16.mxu0 0
    %2466 = vmatpush1.bf16.msra.mxu0 0
    %2467 = vmatprep.mubr.bf16.mxu0 0
    %2468 = vmatmul.mubr.bf16.gmra.mrb[0].mxu0 %v2434
    %v2469 = vpop.f32.mrb[0].mxu0
    %v2470 = vadd.f32 %v2192, %v2469
    %v2471 = vpop.f32.mrb[0].mxu0
    %v2472 = vadd.f32 %v2196, %v2471
    %v2473 = vpop.f32.mrb[0].mxu0
    %v2474 = vpop.f32.mrb[0].mxu0
    %2475 = vdwg.mxu0
    %2476 = vmatprep.subr.bf16.mxu0 0
    %2477 = vmatpush1.bf16.msra.mxu0 %v2286
    %2478 = vmatprep.subr.bf16.mxu0 0
    %2479 = vmatpush1.bf16.msra.mxu0 %v2289
    %2480 = vmatprep.subr.bf16.mxu0 0
    %2481 = vmatpush1.bf16.msra.mxu0 %v2292
    %2482 = vmatprep.subr.bf16.mxu0 0
    %2483 = vmatpush1.bf16.msra.mxu0 %v2295
    %2484 = vmatprep.subr.bf16.mxu0 0
    %2485 = vmatpush1.bf16.msra.mxu0 %v2298
    %2486 = vmatprep.subr.bf16.mxu0 0
    %2487 = vmatpush1.bf16.msra.mxu0 %v2301
    %2488 = vmatprep.subr.bf16.mxu0 0
    %2489 = vmatpush1.bf16.msra.mxu0 %v2304
    %2490 = vmatprep.subr.bf16.mxu0 0
    %2491 = vmatpush1.bf16.msra.mxu0 %v2307
    %2492 = vmatprep.subr.bf16.mxu0 0
    %2493 = vmatpush1.bf16.msra.mxu0 0
    %2494 = vmatprep.subr.bf16.mxu0 0
    %2495 = vmatpush1.bf16.msra.mxu0 0
    %2496 = vmatprep.subr.bf16.mxu0 0
    %2497 = vmatpush1.bf16.msra.mxu0 0
    %2498 = vmatprep.subr.bf16.mxu0 0
    %2499 = vmatpush1.bf16.msra.mxu0 0
    %2500 = vmatprep.subr.bf16.mxu0 0
    %2501 = vmatpush1.bf16.msra.mxu0 0
    %2502 = vmatprep.subr.bf16.mxu0 0
    %2503 = vmatpush1.bf16.msra.mxu0 0
    %2504 = vmatprep.subr.bf16.mxu0 0
    %2505 = vmatpush1.bf16.msra.mxu0 0
    %2506 = vmatprep.subr.bf16.mxu0 0
    %2507 = vmatpush1.bf16.msra.mxu0 0
    %2508 = vmatprep.mubr.bf16.mxu0 0
    %2509 = vmatmul.mubr.bf16.gmra.mrb[0].mxu0 %v2434
    %v2510 = vpop.f32.mrb[0].mxu0
    %v2511 = vadd.f32 %v2200, %v2510
    %v2512 = vpop.f32.mrb[0].mxu0
    %v2513 = vpop.f32.mrb[0].mxu0
    %v2514 = vpop.f32.mrb[0].mxu0
    %2515 = vdwg.mxu0
    %v2516 = vadd.f32 %v2092, %v2470
    %v2517 = vxor.u32 %v2516, 2147483648
    %v2518 = vmul.f32 %v2517, 1.442695
    %v2519 = vpow.pop %v2518
    %v2520 = vadd.f32 %v2519, 1.0
    %v2521 = vrcp.pop %v2520
    %v2522 = vmul.f32 1.0, %v2521
    %v2523 = vadd.f32 %v2140, %v2472
    %v2524 = vxor.u32 %v2523, 2147483648
    %v2525 = vmul.f32 %v2524, 1.442695
    %v2526 = vpow.pop %v2525
    %v2527 = vadd.f32 %v2526, 1.0
    %v2528 = vrcp.pop %v2527
    %v2529 = vmul.f32 1.0, %v2528
    %v2530 = vmul.f32 %v2522, %v2511
    %v2531 = vadd.f32 %v2142, %v2530
    %v2532 = vtanh.pop %v2531
    %v2533 = vsub.f32 1.0, %v2529
    %v2534 = vmul.f32 %v2533, %v2532
    %v2535 = vmul.f32 %v2529, %v2433
    %v2536 = vadd.f32 %v2534, %v2535
    %v2537 = vpack.c.bf16 %v2536, %v2536
    %2538 = vmatprep.subr.bf16.mxu0 %v2285
    %2539 = vmatpush1.bf16.msra.mxu0 %v2284
    %2540 = vmatprep.subr.bf16.mxu0 %v2288
    %2541 = vmatpush1.bf16.msra.mxu0 %v2287
    %2542 = vmatprep.subr.bf16.mxu0 %v2291
    %2543 = vmatpush1.bf16.msra.mxu0 %v2290
    %2544 = vmatprep.subr.bf16.mxu0 %v2294
    %2545 = vmatpush1.bf16.msra.mxu0 %v2293
    %2546 = vmatprep.subr.bf16.mxu0 %v2297
    %2547 = vmatpush1.bf16.msra.mxu0 %v2296
    %2548 = vmatprep.subr.bf16.mxu0 %v2300
    %2549 = vmatpush1.bf16.msra.mxu0 %v2299
    %2550 = vmatprep.subr.bf16.mxu0 %v2303
    %2551 = vmatpush1.bf16.msra.mxu0 %v2302
    %2552 = vmatprep.subr.bf16.mxu0 %v2306
    %2553 = vmatpush1.bf16.msra.mxu0 %v2305
    %2554 = vmatprep.subr.bf16.mxu0 0
    %2555 = vmatpush1.bf16.msra.mxu0 0
    %2556 = vmatprep.subr.bf16.mxu0 0
    %2557 = vmatpush1.bf16.msra.mxu0 0
    %2558 = vmatprep.subr.bf16.mxu0 0
    %2559 = vmatpush1.bf16.msra.mxu0 0
    %2560 = vmatprep.subr.bf16.mxu0 0
    %2561 = vmatpush1.bf16.msra.mxu0 0
    %2562 = vmatprep.subr.bf16.mxu0 0
    %2563 = vmatpush1.bf16.msra.mxu0 0
    %2564 = vmatprep.subr.bf16.mxu0 0
    %2565 = vmatpush1.bf16.msra.mxu0 0
    %2566 = vmatprep.subr.bf16.mxu0 0
    %2567 = vmatpush1.bf16.msra.mxu0 0
    %2568 = vmatprep.subr.bf16.mxu0 0
    %2569 = vmatpush1.bf16.msra.mxu0 0
    %2570 = vmatprep.mubr.bf16.mxu0 0
    %2571 = vmatmul.mubr.bf16.gmra.mrb[0].mxu0 %v2537
    %v2572 = vpop.f32.mrb[0].mxu0
    %v2573 = vadd.f32 %v2192, %v2572
    %v2574 = vpop.f32.mrb[0].mxu0
    %v2575 = vadd.f32 %v2196, %v2574
    %v2576 = vpop.f32.mrb[0].mxu0
    %v2577 = vpop.f32.mrb[0].mxu0
    %2578 = vdwg.mxu0
    %2579 = vmatprep.subr.bf16.mxu0 0
    %2580 = vmatpush1.bf16.msra.mxu0 %v2286
    %2581 = vmatprep.subr.bf16.mxu0 0
    %2582 = vmatpush1.bf16.msra.mxu0 %v2289
    %2583 = vmatprep.subr.bf16.mxu0 0
    %2584 = vmatpush1.bf16.msra.mxu0 %v2292
    %2585 = vmatprep.subr.bf16.mxu0 0
    %2586 = vmatpush1.bf16.msra.mxu0 %v2295
    %2587 = vmatprep.subr.bf16.mxu0 0
    %2588 = vmatpush1.bf16.msra.mxu0 %v2298
    %2589 = vmatprep.subr.bf16.mxu0 0
    %2590 = vmatpush1.bf16.msra.mxu0 %v2301
    %2591 = vmatprep.subr.bf16.mxu0 0
    %2592 = vmatpush1.bf16.msra.mxu0 %v2304
    %2593 = vmatprep.subr.bf16.mxu0 0
    %2594 = vmatpush1.bf16.msra.mxu0 %v2307
    %2595 = vmatprep.subr.bf16.mxu0 0
    %2596 = vmatpush1.bf16.msra.mxu0 0
    %2597 = vmatprep.subr.bf16.mxu0 0
    %2598 = vmatpush1.bf16.msra.mxu0 0
    %2599 = vmatprep.subr.bf16.mxu0 0
    %2600 = vmatpush1.bf16.msra.mxu0 0
    %2601 = vmatprep.subr.bf16.mxu0 0
    %2602 = vmatpush1.bf16.msra.mxu0 0
    %2603 = vmatprep.subr.bf16.mxu0 0
    %2604 = vmatpush1.bf16.msra.mxu0 0
    %2605 = vmatprep.subr.bf16.mxu0 0
    %2606 = vmatpush1.bf16.msra.mxu0 0
    %2607 = vmatprep.subr.bf16.mxu0 0
    %2608 = vmatpush1.bf16.msra.mxu0 0
    %2609 = vmatprep.subr.bf16.mxu0 0
    %2610 = vmatpush1.bf16.msra.mxu0 0
    %2611 = vmatprep.mubr.bf16.mxu0 0
    %2612 = vmatmul.mubr.bf16.gmra.mrb[0].mxu0 %v2537
    %v2613 = vpop.f32.mrb[0].mxu0
    %v2614 = vadd.f32 %v2200, %v2613
    %v2615 = vpop.f32.mrb[0].mxu0
    %v2616 = vpop.f32.mrb[0].mxu0
    %v2617 = vpop.f32.mrb[0].mxu0
    %2618 = vdwg.mxu0
    %v2619 = vadd.f32 %v2097, %v2573
    %v2620 = vxor.u32 %v2619, 2147483648
    %v2621 = vmul.f32 %v2620, 1.442695
    %v2622 = vpow.pop %v2621
    %v2623 = vadd.f32 %v2622, 1.0
    %v2624 = vrcp.pop %v2623
    %v2625 = vmul.f32 1.0, %v2624
    %v2626 = vadd.f32 %v2146, %v2575
    %v2627 = vxor.u32 %v2626, 2147483648
    %v2628 = vmul.f32 %v2627, 1.442695
    %v2629 = vpow.pop %v2628
    %v2630 = vadd.f32 %v2629, 1.0
    %v2631 = vrcp.pop %v2630
    %v2632 = vmul.f32 1.0, %v2631
    %v2633 = vmul.f32 %v2625, %v2614
    %v2634 = vadd.f32 %v2148, %v2633
    %v2635 = vtanh.pop %v2634
    %v2636 = vsub.f32 1.0, %v2632
    %v2637 = vmul.f32 %v2636, %v2635
    %v2638 = vmul.f32 %v2632, %v2536
    %v2639 = vadd.f32 %v2637, %v2638
    %v2640 = vpack.c.bf16 %v2536, %v2433
    %v2641 = vpack.c.bf16 %v2639, %v2639
    %v2642 = vld [vmem:[#allocation2 + $0x2c] sm:$0xf]
    %v2643 = vld [vmem:[#allocation2 + $0x5c] sm:$0xf]
    %v2644 = vld [vmem:[#allocation2 + $0x8c] sm:$0xf]
    %v2645 = vld [vmem:[#allocation2 + $0xbc] sm:$0xf]
    %v2646 = vld [vmem:[#allocation2 + $0xec] sm:$0xf]
    %v2647 = vld [vmem:[#allocation2 + $0x11c] sm:$0xf]
    %v2648 = vld [vmem:[#allocation2 + $0x14c] sm:$0xf]
    %v2649 = vld [vmem:[#allocation2 + $0x17c] sm:$0xf]
    %v2650 = vld [vmem:[#allocation2 + $0x1ac] sm:$0xf]
    %v2651 = vld [vmem:[#allocation2 + $0x1dc] sm:$0xf]
    %v2652 = vld [vmem:[#allocation2 + $0x20c] sm:$0xf]
    %v2653 = vld [vmem:[#allocation2 + $0x23c] sm:$0xf]
    %v2654 = vld [vmem:[#allocation2 + $0x26c] sm:$0xf]
    %v2655 = vld [vmem:[#allocation2 + $0x29c] sm:$0xf]
    %v2656 = vld [vmem:[#allocation2 + $0x2cc] sm:$0xf]
    %v2657 = vld [vmem:[#allocation2 + $0x2fc] sm:$0xf]
    %v2658 = vld [vmem:[#allocation5 + $0x11] ss:$0 sm:$0xff]
    %v2675 = vunpack.c.l.b16 %v2642
    %v2676 = vunpack.c.l.b16 %v2643
    %v2677 = vunpack.c.l.b16 %v2644
    %v2678 = vunpack.c.l.b16 %v2645
    %v2679 = vunpack.c.l.b16 %v2646
    %v2680 = vunpack.c.l.b16 %v2647
    %v2681 = vunpack.c.l.b16 %v2648
    %v2682 = vunpack.c.l.b16 %v2649
    %v2683 = vunpack.c.l.b16 %v2650
    %v2684 = vunpack.c.l.b16 %v2651
    %v2685 = vunpack.c.l.b16 %v2652
    %v2686 = vunpack.c.l.b16 %v2653
    %v2687 = vunpack.c.l.b16 %v2654
    %v2688 = vunpack.c.l.b16 %v2655
    %v2689 = vunpack.c.l.b16 %v2656
    %v2690 = vunpack.c.l.b16 %v2657
    %v2691 = vpack.c.b16 %v2676, %v2675
    %v2692 = vpack.c.b16 %v2678, %v2677
    %v2693 = vpack.c.b16 %v2680, %v2679
    %v2694 = vpack.c.b16 %v2682, %v2681
    %v2695 = vpack.c.b16 %v2684, %v2683
    %v2696 = vpack.c.b16 %v2686, %v2685
    %v2697 = vpack.c.b16 %v2688, %v2687
    %v2698 = vpack.c.b16 %v2690, %v2689
    %2707 = vmatprep.subr.bf16.mxu0 0
    %2708 = vmatpush1.bf16.msra.mxu0 %v2691
    %2709 = vmatprep.subr.bf16.mxu0 0
    %2710 = vmatpush1.bf16.msra.mxu0 %v2692
    %2711 = vmatprep.subr.bf16.mxu0 0
    %2712 = vmatpush1.bf16.msra.mxu0 %v2693
    %2713 = vmatprep.subr.bf16.mxu0 0
    %2714 = vmatpush1.bf16.msra.mxu0 %v2694
    %2715 = vmatprep.subr.bf16.mxu0 0
    %2716 = vmatpush1.bf16.msra.mxu0 %v2695
    %2717 = vmatprep.subr.bf16.mxu0 0
    %2718 = vmatpush1.bf16.msra.mxu0 %v2696
    %2719 = vmatprep.subr.bf16.mxu0 0
    %2720 = vmatpush1.bf16.msra.mxu0 %v2697
    %2721 = vmatprep.subr.bf16.mxu0 0
    %2722 = vmatpush1.bf16.msra.mxu0 %v2698
    %2723 = vmatprep.subr.bf16.mxu0 0
    %2724 = vmatpush1.bf16.msra.mxu0 0
    %2725 = vmatprep.subr.bf16.mxu0 0
    %2726 = vmatpush1.bf16.msra.mxu0 0
    %2727 = vmatprep.subr.bf16.mxu0 0
    %2728 = vmatpush1.bf16.msra.mxu0 0
    %2729 = vmatprep.subr.bf16.mxu0 0
    %2730 = vmatpush1.bf16.msra.mxu0 0
    %2731 = vmatprep.subr.bf16.mxu0 0
    %2732 = vmatpush1.bf16.msra.mxu0 0
    %2733 = vmatprep.subr.bf16.mxu0 0
    %2734 = vmatpush1.bf16.msra.mxu0 0
    %2735 = vmatprep.subr.bf16.mxu0 0
    %2736 = vmatpush1.bf16.msra.mxu0 0
    %2737 = vmatprep.subr.bf16.mxu0 0
    %2738 = vmatpush1.bf16.msra.mxu0 0
    %2739 = vmatprep.mubr.bf16.mxu0 0
    %2740 = vmatmul.mubr.bf16.gmra.mrb[0].mxu0 %v2640
    %v2741 = vpop.f32.mrb[0].mxu0
    %v2742 = vadd.f32 %v2658, %v2741
    %v2743 = vpop.f32.mrb[0].mxu0
    %v2744 = vpop.f32.mrb[0].mxu0
    %v2745 = vadd.f32 %v2658, %v2744
    %v2746 = vpop.f32.mrb[0].mxu0
    %2747 = vmatprep.mubr.bf16.mxu0 0
    %2748 = vmatmul.mubr.bf16.gmra.mrb[0].mxu0 %v2641
    %v2749 = vpop.f32.mrb[0].mxu0
    %v2750 = vadd.f32 %v2658, %v2749
    %v2751 = vpop.f32.mrb[0].mxu0
    %v2752 = vpop.f32.mrb[0].mxu0
    %v2753 = vpop.f32.mrb[0].mxu0
    %2754 = vdwg.mxu0
    %v2755 = vld [vmem:[#allocation5 + $0x19] ss:$0 sm:$0xff]
    %v2756 = vld [vmem:[#allocation5 + $0x1b] ss:$0 sm:$0xff]
    %2757 = vadd.xlane.f32.xlu0 %v2742
    %v2758 = vpop.xlane.xlu0 %2757
    %2759 = vadd.xlane.f32.xlu0 %v2745
    %v2760 = vpop.xlane.xlu0 %2759
    %2761 = vadd.xlane.f32.xlu0 %v2750
    %v2762 = vpop.xlane.xlu0 %2761
    %v2763 = vmul.f32 %v2758, %v206
    %v2764 = vmul.f32 %v2760, %v206
    %v2765 = vmul.f32 %v2762, %v206
    %v2766 = vsub.f32 %v2742, %v2763
    %v2767 = vsub.f32 %v2745, %v2764
    %v2768 = vsub.f32 %v2750, %v2765
    %v2769 = vmul.f32 %v2766, %v2766
    %v2770 = vmul.f32 %v2767, %v2767
    %v2771 = vmul.f32 %v2768, %v2768
    %2772 = vadd.xlane.f32.xlu0 %v2769
    %v2773 = vpop.xlane.xlu0 %2772
    %2774 = vadd.xlane.f32.xlu0 %v2770
    %v2775 = vpop.xlane.xlu0 %2774
    %2776 = vadd.xlane.f32.xlu0 %v2771
    %v2777 = vpop.xlane.xlu0 %2776
    %v2778 = vmul.f32 %v2773, %v206
    %v2779 = vmul.f32 %v2775, %v206
    %v2780 = vmul.f32 %v2777, %v206
    %v2781 = vadd.f32 %v2778, 1e-05
    %v2782 = vadd.f32 %v2779, 1e-05
    %v2783 = vadd.f32 %v2780, 1e-05
    %v2784 = vrsqrt.pop %v2781
    %v2785 = vrsqrt.pop %v2782
    %v2786 = vrsqrt.pop %v2783
    %v2787 = vmul.f32 %v2766, %v2784
    %v2788 = vmul.f32 %v2767, %v2785
    %v2789 = vmul.f32 %v2768, %v2786
    %v2790 = vmul.f32 %v2787, %v2755
    %v2791 = vmul.f32 %v2788, %v2755
    %v2792 = vmul.f32 %v2789, %v2755
    %v2793 = vadd.f32 %v2790, %v2756
    %v2794 = vadd.f32 %v2791, %v2756
    %v2795 = vadd.f32 %v2792, %v2756
    %v2796 = vld [vmem:[#allocation7 + $0x30] sm:$0xff]
    %v2797 = vld [vmem:[#allocation7 + $0x38] sm:$0xff]
    %v2798 = vld [vmem:[#allocation7 + $0x40] sm:$0xff]
    %v2799 = vld [vmem:[#allocation7 + $0x48] sm:$0xff]
    %v2800 = vld [vmem:[#allocation7 + $0x50] sm:$0xff]
    %v2801 = vld [vmem:[#allocation7 + $0x58] sm:$0xff]
    %v2802 = vld [vmem:[#allocation7 + $0x60] sm:$0xff]
    %v2803 = vld [vmem:[#allocation7 + $0x68] sm:$0xff]
    %v2804 = vld [vmem:[#allocation7 + $0x70] sm:$0xff]
    %v2805 = vld [vmem:[#allocation7 + $0x78] sm:$0xff]
    %v2806 = vld [vmem:[#allocation7 + $0x80] sm:$0xff]
    %v2807 = vld [vmem:[#allocation7 + $0x88] sm:$0xff]
    %v2808 = vld [vmem:[#allocation7 + $0x90] sm:$0xff]
    %v2809 = vld [vmem:[#allocation7 + $0x98] sm:$0xff]
    %v2810 = vld [vmem:[#allocation7 + $0xa0] sm:$0xff]
    %v2811 = vld [vmem:[#allocation7 + $0xa8] sm:$0xff]
    %2812 = vmatprep.subr.mxu0 0.0
    %2813 = vmatpush1.msra.mxu0 %v2796
    %2814 = vmatprep.subr.mxu0 0.0
    %2815 = vmatpush1.msra.mxu0 %v2797
    %2816 = vmatprep.subr.mxu0 0.0
    %2817 = vmatpush1.msra.mxu0 %v2798
    %2818 = vmatprep.subr.mxu0 0.0
    %2819 = vmatpush1.msra.mxu0 %v2799
    %2820 = vmatprep.subr.mxu0 0.0
    %2821 = vmatpush1.msra.mxu0 %v2800
    %2822 = vmatprep.subr.mxu0 0.0
    %2823 = vmatpush1.msra.mxu0 %v2801
    %2824 = vmatprep.subr.mxu0 0.0
    %2825 = vmatpush1.msra.mxu0 %v2802
    %2826 = vmatprep.subr.mxu0 0.0
    %2827 = vmatpush1.msra.mxu0 %v2803
    %2828 = vmatprep.subr.mxu0 0.0
    %2829 = vmatpush1.msra.mxu0 %v2804
    %2830 = vmatprep.subr.mxu0 0.0
    %2831 = vmatpush1.msra.mxu0 %v2805
    %2832 = vmatprep.subr.mxu0 0.0
    %2833 = vmatpush1.msra.mxu0 %v2806
    %2834 = vmatprep.subr.mxu0 0.0
    %2835 = vmatpush1.msra.mxu0 %v2807
    %2836 = vmatprep.subr.mxu0 0.0
    %2837 = vmatpush1.msra.mxu0 %v2808
    %2838 = vmatprep.subr.mxu0 0.0
    %2839 = vmatpush1.msra.mxu0 %v2809
    %2840 = vmatprep.subr.mxu0 0.0
    %2841 = vmatpush1.msra.mxu0 %v2810
    %2842 = vmatprep.subr.mxu0 0.0
    %2843 = vmatpush1.msra.mxu0 %v2811
    %2844 = vmatprep.subr.mxu0 0.0
    %2845 = vmatpush1.msra.mxu0 0.0
    %2846 = vmatprep.subr.mxu0 0.0
    %2847 = vmatpush1.msra.mxu0 0.0
    %2848 = vmatprep.subr.mxu0 0.0
    %2849 = vmatpush1.msra.mxu0 0.0
    %2850 = vmatprep.subr.mxu0 0.0
    %2851 = vmatpush1.msra.mxu0 0.0
    %2852 = vmatprep.subr.mxu0 0.0
    %2853 = vmatpush1.msra.mxu0 0.0
    %2854 = vmatprep.subr.mxu0 0.0
    %2855 = vmatpush1.msra.mxu0 0.0
    %2856 = vmatprep.subr.mxu0 0.0
    %2857 = vmatpush1.msra.mxu0 0.0
    %2858 = vmatprep.subr.mxu0 0.0
    %2859 = vmatpush1.msra.mxu0 0.0
    %2860 = vmatprep.subr.mxu0 0.0
    %2861 = vmatpush1.msra.mxu0 0.0
    %2862 = vmatprep.subr.mxu0 0.0
    %2863 = vmatpush1.msra.mxu0 0.0
    %2864 = vmatprep.subr.mxu0 0.0
    %2865 = vmatpush1.msra.mxu0 0.0
    %2866 = vmatprep.subr.mxu0 0.0
    %2867 = vmatpush1.msra.mxu0 0.0
    %2868 = vmatprep.subr.mxu0 0.0
    %2869 = vmatpush1.msra.mxu0 0.0
    %2870 = vmatprep.subr.mxu0 0.0
    %2871 = vmatpush1.msra.mxu0 0.0
    %2872 = vmatprep.subr.mxu0 0.0
    %2873 = vmatpush1.msra.mxu0 0.0
    %2874 = vmatprep.subr.mxu0 0.0
    %2875 = vmatpush1.msra.mxu0 0.0
    %2876 = vmatprep.mubr.f32.mxu0 0.0
    %2877 = vmatmul.mubr.f32.gmra.mrb[0].mxu0 %v2793
    %v2878 = vpop.f32.mrb[0].mxu0
    %v2879 = vadd.f32 0.0, %v2878
    %v2880 = vpop.f32.mrb[0].mxu0
    %2881 = vmatprep.mubr.f32.mxu0 0.0
    %2882 = vmatmul.mubr.f32.gmra.mrb[0].mxu0 %v2794
    %v2883 = vpop.f32.mrb[0].mxu0
    %v2884 = vadd.f32 0.0, %v2883
    %v2885 = vpop.f32.mrb[0].mxu0
    %2886 = vmatprep.mubr.f32.mxu0 0.0
    %2887 = vmatmul.mubr.f32.gmra.mrb[0].mxu0 %v2795
    %v2888 = vpop.f32.mrb[0].mxu0
    %v2889 = vadd.f32 0.0, %v2888
    %v2890 = vpop.f32.mrb[0].mxu0
    %2891 = vdwg.mxu0
    %v2892 = vmul.f32 %v2793, %v2793
    %v2893 = vmul.f32 %v2794, %v2794
    %v2894 = vmul.f32 %v2795, %v2795
    %2895 = vadd.xlane.f32.xlu0 %v2892
    %v2896 = vpop.xlane.xlu0 %2895
    %2897 = vadd.xlane.f32.xlu0 %v2893
    %v2898 = vpop.xlane.xlu0 %2897
    %2899 = vadd.xlane.f32.xlu0 %v2894
    %v2900 = vpop.xlane.xlu0 %2899
    %2901 = vadd.xlane.f32.xlu0 %v2793
    %v2902 = vpop.xlane.xlu0 %2901
    %2903 = vadd.xlane.f32.xlu0 %v2794
    %v2904 = vpop.xlane.xlu0 %2903
    %2905 = vadd.xlane.f32.xlu0 %v2795
    %v2906 = vpop.xlane.xlu0 %2905
    %v2907 = vmul.f32 %v2902, 2e-06
    %v2908 = vmul.f32 %v2904, 2e-06
    %v2909 = vmul.f32 %v2906, 2e-06
    %v2910 = vsub.f32 %v2896, %v2907
    %v2911 = vsub.f32 %v2898, %v2908
    %v2912 = vsub.f32 %v2900, %v2909
    %v2913 = vld [vmem:[#allocation5 + $0x4] ss:$0 sm:$0xff]
    %v2914 = vadd.f32 %v2910, %v2913
    %v2915 = vadd.f32 %v2911, %v2913
    %v2916 = vadd.f32 %v2912, %v2913
    %v2917 = vmul.f32 %v2879, 2.0
    %v2918 = vmul.f32 %v2884, 2.0
    %v2919 = vmul.f32 %v2889, 2.0
    %v2920 = vsub.f32 %v2914, %v2917
    %v2921 = vsub.f32 %v2915, %v2918
    %v2922 = vsub.f32 %v2916, %v2919
    %v2923 = vmax.f32 %v2920, 0.0
    %v2924 = vmax.f32 %v2921, 0.0
    %v2925 = vmax.f32 %v2922, 0.0
    %v2926 = vrsqrt.pop %v2923
    %v2927 = vmul.f32 %v2923, %v2926
    %vm2928 = vcmp.eq.f32.partialorder %v2923, inf
    %v2929 = vsel %vm2928, %v2923, %v2927
    %vm2930 = vcmp.eq.f32.partialorder %v2923, 0.0
    %v2931 = vand.u32 %v2923, 2147483648
    %v2932 = vsel %vm2930, %v2931, %v2929
    %v2933 = vrsqrt.pop %v2924
    %v2934 = vmul.f32 %v2924, %v2933
    %vm2935 = vcmp.eq.f32.partialorder %v2924, inf
    %v2936 = vsel %vm2935, %v2924, %v2934
    %vm2937 = vcmp.eq.f32.partialorder %v2924, 0.0
    %v2938 = vand.u32 %v2924, 2147483648
    %v2939 = vsel %vm2937, %v2938, %v2936
    %v2940 = vrsqrt.pop %v2925
    %v2941 = vmul.f32 %v2925, %v2940
    %vm2942 = vcmp.eq.f32.partialorder %v2925, inf
    %v2943 = vsel %vm2942, %v2925, %v2941
    %vm2944 = vcmp.eq.f32.partialorder %v2925, 0.0
    %v2945 = vand.u32 %v2925, 2147483648
    %v2946 = vsel %vm2944, %v2945, %v2943
    %v2947 = vsub.f32 0.0, %v2932
    %v2948 = vsub.f32 0.0, %v2939
    %v2949 = vsub.f32 0.0, %v2946
    %2950 = vst [vmem:[#allocation8] sm:$0xff] %v2947
    %2951 = vst [vmem:[#allocation8 + $0x8] sm:$0xff] %v2948
    %2952 = vst [vmem:[#allocation8 + $0x10] sm:$0xff] %v2949
    // Predicated region
    $region34: #{tpu_custom_call.1} parent=1 // pred_check
      _
    $region35: #{tpu_custom_call.1} parent=1 // pred_check_branch
      %2954 = sbr.rel (0) target = $region37
    $region36: #{tpu_custom_call.1} parent=1 // pred_region
      %s2956 = ssub.s32 384, 384
      %2957 = vsyncadd [#allocation4], %s2956
      %s2958 = sshll.u32 [#allocation8], 4
      %s2959 = int_to_ptr.vmem [resolvable:$true] %s2958
      %2964 = dma.vmem_to_hbm [thread:$0]  %s2959, 384, %s5, [#allocation4], 128, 128, 8
    $region37: #{tpu_custom_call.1} parent=1 // pred_fallthru
      _
    // Predicated region
    $region38: #{tpu_custom_call.1} parent=1 // pred_check
      _
    $region39: #{tpu_custom_call.1} parent=1 // pred_check_branch
      %2966 = sbr.rel (0) target = $region41
    $region40: #{tpu_custom_call.1} parent=1 // pred_region
      %2967 = dma.done [#allocation4], 384
    $region41: #{tpu_custom_call.1} parent=1 // pred_fallthru
      _
    %2968 = vsyncpa [#allocation3], 1
    %2969 = vsyncpa [#allocation6], 1
    %2970 = vsyncpa [#allocation4], 1

</llo_original>
